<compile_context>
chip_gen: v6e
topology: v6e:2x2x1
jax: 0.10.0
libtpu: 0.0.40
codegen_flags: <defaults>
</compile_context>

<pallas_src>
import jax
import jax.numpy as jnp
from jax import lax
from jax.experimental import pallas as pl
from jax.experimental.pallas import tpu as pltpu

EPS = 1e-5
_LP = 8  # left padding (columns) for the spatial halo scratch -> interior store is
         # sublane-aligned (offset 8), so it lowers to plain (unrotated) stores.


# --------------------------------------------------------------------------- #
# Fused Pallas kernel: conv1 -> conv_S -> conv_T -> conv4 + residual, all in VMEM
# --------------------------------------------------------------------------- #
def _bottleneck_kernel(x_ref, w1_ref, w2_ref, w3_ref, w4_ref,
                       s1_ref, b1_ref, s2_ref, b2_ref,
                       s3_ref, b3_ref, s4_ref, b4_ref,
                       o_ref, xs_ref, ts_ref):
    # x_ref : (1, T, H, W, Cin)       o_ref : (1, T, H, W, Cout)
    # xs_ref: (T, H+2, _LP+W+1, P)    ts_ref: (T+2, H*W, P)
    _, T, H, W, Cin = x_ref.shape
    P = w1_ref.shape[1]
    Cout = o_ref.shape[4]
    HW = H * W
    M = T * HW

    def mm(a, b):  # bf16 MXU operands, f32 accumulation
        return jnp.dot(a.astype(jnp.bfloat16), b,
                       preferred_element_type=jnp.float32)

    # ---- stage 1: conv1 (1x1x1) + bn1 + relu --------------------------------
    x2d = x_ref[0].reshape(M, Cin)                                   # (M, Cin)
    a1 = jnp.maximum(mm(x2d, w1_ref[...]) * s1_ref[...] + b1_ref[...], 0.0)

    # build spatially padded copy in VMEM (in-kernel halo; no HBM pad op)
    xs_ref[...] = jnp.zeros_like(xs_ref)
    xs_ref[:, 1:H + 1, _LP:_LP + W, :] = a1.reshape(T, H, W, P)

    # ---- stage 2: conv_S (1,3,3) + bn2 + relu : 9 slab matmuls --------------
    acc = jnp.zeros((M, P), jnp.float32)
    for dh in range(3):
        for dw in range(3):
            c0 = _LP - 1 + dw
            patch = xs_ref[:, dh:dh + H, c0:c0 + W, :].reshape(M, P)
            acc = acc + mm(patch, w2_ref[dh, dw])
    a2 = jnp.maximum(acc * s2_ref[...] + b2_ref[...], 0.0)

    # build temporally padded copy in VMEM
    ts_ref[0] = jnp.zeros((HW, P), jnp.float32)
    ts_ref[T + 1] = jnp.zeros((HW, P), jnp.float32)
    ts_ref[1:T + 1, :, :] = a2.reshape(T, HW, P)

    # ---- stage 3: conv_T (3,1,1) + bn3 + relu : 3 slab matmuls --------------
    acc = jnp.zeros((M, P), jnp.float32)
    for dt in range(3):
        acc = acc + mm(ts_ref[dt:dt + T].reshape(M, P), w3_ref[dt])
    a3 = jnp.maximum(acc * s3_ref[...] + b3_ref[...], 0.0)

    # ---- stage 4: conv4 (1x1x1) + bn4 + residual + relu ---------------------
    res = x_ref[0].reshape(M, Cout)           # identity residual (Cin == Cout)
    y = mm(a3, w4_ref[...]) * s4_ref[...] + b4_ref[...] + res
    o_ref[...] = jnp.maximum(y, 0.0).reshape(1, T, H, W, Cout)


def _fused_bottleneck(xl, w1, w2, w3, w4, s1, b1, s2, b2, s3, b3, s4, b4):
    # xl: (N, T, H, W, Cin) channels-last, f32. Weights already in kernel layout, bf16.
    N, T, H, W, Cin = xl.shape
    P = w1.shape[1]
    Cout = w4.shape[1]

    def full(shape):
        return pl.BlockSpec(shape, lambda n, s=shape: (0,) * len(s))

    def vec(c):
        return pl.BlockSpec((1, c), lambda n: (0, 0))

    return pl.pallas_call(
        _bottleneck_kernel,
        out_shape=jax.ShapeDtypeStruct((N, T, H, W, Cout), jnp.float32),
        grid_spec=pltpu.PrefetchScalarGridSpec(
            num_scalar_prefetch=0,
            grid=(N,),
            in_specs=[
                pl.BlockSpec((1, T, H, W, Cin), lambda n: (n, 0, 0, 0, 0)),
                full((Cin, P)),            # w1
                full((3, 3, P, P)),        # w2
                full((3, P, P)),           # w3
                full((P, Cout)),           # w4
                vec(P), vec(P),            # bn1 scale / bias
                vec(P), vec(P),            # bn2
                vec(P), vec(P),            # bn3
                vec(Cout), vec(Cout),      # bn4
            ],
            out_specs=pl.BlockSpec((1, T, H, W, Cout), lambda n: (n, 0, 0, 0, 0)),
            scratch_shapes=[
                pltpu.VMEM((T, H + 2, _LP + W + 1, P), jnp.float32),  # spatial halo
                pltpu.VMEM((T + 2, H * W, P), jnp.float32),           # temporal halo
            ],
        ),
        compiler_params=pltpu.CompilerParams(
            dimension_semantics=("parallel",),   # shard batch across TensorCores
        ),
    )(xl, w1, w2, w3, w4,
      s1.reshape(1, -1), b1.reshape(1, -1),
      s2.reshape(1, -1), b2.reshape(1, -1),
      s3.reshape(1, -1), b3.reshape(1, -1),
      s4.reshape(1, -1), b4.reshape(1, -1))


# --------------------------------------------------------------------------- #
# Parameter setup & forward
# --------------------------------------------------------------------------- #
def _fold_bn(gamma, beta, mean, var):
    scale = gamma / jnp.sqrt(var + EPS)
    bias = beta - mean * scale
    return scale, bias


def init_params(key, inplanes, planes):
    ks = jax.random.split(key, 8)
    # PyTorch conv weight layout: (out, in, kT, kH, kW)
    W1 = 0.1 * jax.random.normal(ks[0], (planes, inplanes, 1, 1, 1), jnp.float32)
    W2 = 0.1 * jax.random.normal(ks[1], (planes, planes, 1, 3, 3), jnp.float32)
    W3 = 0.1 * jax.random.normal(ks[2], (planes, planes, 3, 1, 1), jnp.float32)
    W4 = 0.1 * jax.random.normal(ks[3], (4 * planes, planes, 1, 1, 1), jnp.float32)

    def bn(k, c):
        k1, k2, k3, k4 = jax.random.split(k, 4)
        gamma = 1.0 + 0.1 * jax.random.normal(k1, (c,), jnp.float32)
        beta = 0.1 * jax.random.normal(k2, (c,), jnp.float32)
        mean = 0.1 * jax.random.normal(k3, (c,), jnp.float32)
        var = 1.0 + 0.1 * jax.random.uniform(k4, (c,), jnp.float32)
        return gamma, beta, mean, var

    return dict(W1=W1, W2=W2, W3=W3, W4=W4,
                bn1=bn(ks[4], planes), bn2=bn(ks[5], planes),
                bn3=bn(ks[6], planes), bn4=bn(ks[7], 4 * planes))


@jax.jit
def bottleneck_forward(x, params):
    # x: (N, C_in, T, H, W)  -- PyTorch NCDHW
    N, Cin, T, H, W = x.shape
    planes = params["W1"].shape[0]
    assert Cin == 4 * planes, "identity residual requires inplanes == 4*planes"
    assert W % 8 == 0, "W must be a multiple of 8 (sublane-aligned stores)"

    # kernel-friendly weight layouts; bf16 for MXU operands (f32 accumulation)
    w1 = jnp.transpose(params["W1"][:, :, 0, 0, 0], (1, 0)).astype(jnp.bfloat16)
    w2 = jnp.transpose(params["W2"][:, :, 0, :, :], (2, 3, 1, 0)).astype(jnp.bfloat16)
    w3 = jnp.transpose(params["W3"][:, :, :, 0, 0], (2, 1, 0)).astype(jnp.bfloat16)
    w4 = jnp.transpose(params["W4"][:, :, 0, 0, 0], (1, 0)).astype(jnp.bfloat16)
    s1, b1 = _fold_bn(*params["bn1"])
    s2, b2 = _fold_bn(*params["bn2"])
    s3, b3 = _fold_bn(*params["bn3"])
    s4, b4 = _fold_bn(*params["bn4"])

    xl = jnp.transpose(x, (0, 2, 3, 4, 1))       # (N,T,H,W,C) channels-last
    out = _fused_bottleneck(xl, w1, w2, w3, w4, s1, b1, s2, b2, s3, b3, s4, b4)
    return jnp.transpose(out, (0, 4, 1, 2, 3))   # back to NCDHW


# --------------------------------------------------------------------------- #
# Pure-JAX reference (lax.conv, f32 HIGHEST) for verification
# --------------------------------------------------------------------------- #
def reference_forward(x, params):
    dn = ("NCDHW", "OIDHW", "NCDHW")

    def conv3d(z, w, pad):
        return lax.conv_general_dilated(z, w, (1, 1, 1), pad,
                                        dimension_numbers=dn,
                                        precision=lax.Precision.HIGHEST)

    def bn(z, stats):
        g, b, m, v = stats
        sh = (1, -1, 1, 1, 1)
        return (z - m.reshape(sh)) * (g.reshape(sh) / jnp.sqrt(v.reshape(sh) + EPS)) \
               + b.reshape(sh)

    relu = lambda z: jnp.maximum(z, 0.0)
    out = relu(bn(conv3d(x, params["W1"], [(0, 0)] * 3), params["bn1"]))
    out = relu(bn(conv3d(out, params["W2"], [(0, 0), (1, 1), (1, 1)]), params["bn2"]))
    out = relu(bn(conv3d(out, params["W3"], [(1, 1), (0, 0), (0, 0)]), params["bn3"]))
    out = bn(conv3d(out, params["W4"], [(0, 0)] * 3), params["bn4"]) + x
    return relu(out)


# --------------------------------------------------------------------------- #
if __name__ == "__main__":
    # planes=32 -> inplanes = 4*planes = 128, so the residual/output channel dim is
    # lane-dense (128) while staying small. N=2 gives 2 parallel grid steps.
    N, planes, T, H, W = 2, 32, 4, 8, 8
    inplanes = 4 * planes

    key = jax.random.PRNGKey(0)
    kx, kp = jax.random.split(key)
    x = jax.random.normal(kx, (N, inplanes, T, H, W), jnp.float32)
    params = init_params(kp, inplanes, planes)

    out = jax.block_until_ready(bottleneck_forward(x, params))
    assert out.shape == (N, 4 * planes, T, H, W), out.shape

    ref = reference_forward(x, params)
    diff = jnp.abs(out - ref)
    max_err = float(jnp.max(diff))
    mean_err = float(jnp.mean(diff))
    # Tolerances sized for the deliberate dtype policy: bf16 MXU operands with f32
    # accumulation vs. an f32 HIGHEST-precision reference.
    assert max_err < 2e-1, f"max abs error too large: {max_err}"
    assert mean_err < 2e-2, f"mean abs error too large: {mean_err}"

    print("KERNEL_OK")
</pallas_src>

<mosaic_0001>
module attributes {stable_mosaic.version = 11 : i64} {
  func.func @_bottleneck_kernel(%arg0: i32, %arg1: memref<1x4x8x8x128xf32, #tpu.memory_space<vmem>>, %arg2: memref<128x32xbf16, #tpu.memory_space<vmem>>, %arg3: memref<3x3x32x32xbf16, #tpu.memory_space<vmem>>, %arg4: memref<3x32x32xbf16, #tpu.memory_space<vmem>>, %arg5: memref<32x128xbf16, #tpu.memory_space<vmem>>, %arg6: memref<1x32xf32, #tpu.memory_space<vmem>>, %arg7: memref<1x32xf32, #tpu.memory_space<vmem>>, %arg8: memref<1x32xf32, #tpu.memory_space<vmem>>, %arg9: memref<1x32xf32, #tpu.memory_space<vmem>>, %arg10: memref<1x32xf32, #tpu.memory_space<vmem>>, %arg11: memref<1x32xf32, #tpu.memory_space<vmem>>, %arg12: memref<1x128xf32, #tpu.memory_space<vmem>>, %arg13: memref<1x128xf32, #tpu.memory_space<vmem>>, %arg14: memref<1x4x8x8x128xf32, #tpu.memory_space<vmem>>, %arg15: memref<4x10x17x32xf32, #tpu.memory_space<vmem>>, %arg16: memref<6x64x32xf32, #tpu.memory_space<vmem>>) attributes {dimension_semantics = [#tpu.dimension_semantics<parallel>], iteration_bounds = array<i64: 2>, scalar_prefetch = 0 : i64, scratch_operands = 2 : i64, tpu.core_type = #tpu.core_type<tc>, window_params = [{transform_indices = @transform_0, window_bounds = array<i64: 1, 4, 8, 8, 128>}, {pipeline_mode = #tpu.pipeline_mode<synchronous>, transform_indices = @transform_1, window_bounds = array<i64: 128, 32>}, {pipeline_mode = #tpu.pipeline_mode<synchronous>, transform_indices = @transform_2, window_bounds = array<i64: 3, 3, 32, 32>}, {pipeline_mode = #tpu.pipeline_mode<synchronous>, transform_indices = @transform_3, window_bounds = array<i64: 3, 32, 32>}, {pipeline_mode = #tpu.pipeline_mode<synchronous>, transform_indices = @transform_4, window_bounds = array<i64: 32, 128>}, {pipeline_mode = #tpu.pipeline_mode<synchronous>, transform_indices = @transform_5, window_bounds = array<i64: 1, 32>}, {pipeline_mode = #tpu.pipeline_mode<synchronous>, transform_indices = @transform_6, window_bounds = array<i64: 1, 32>}, {pipeline_mode = #tpu.pipeline_mode<synchronous>, transform_indices = @transform_7, window_bounds = array<i64: 1, 32>}, {pipeline_mode = #tpu.pipeline_mode<synchronous>, transform_indices = @transform_8, window_bounds = array<i64: 1, 32>}, {pipeline_mode = #tpu.pipeline_mode<synchronous>, transform_indices = @transform_9, window_bounds = array<i64: 1, 32>}, {pipeline_mode = #tpu.pipeline_mode<synchronous>, transform_indices = @transform_10, window_bounds = array<i64: 1, 32>}, {pipeline_mode = #tpu.pipeline_mode<synchronous>, transform_indices = @transform_11, window_bounds = array<i64: 1, 128>}, {pipeline_mode = #tpu.pipeline_mode<synchronous>, transform_indices = @transform_12, window_bounds = array<i64: 1, 128>}, {transform_indices = @transform_13, window_bounds = array<i64: 1, 4, 8, 8, 128>}]} {
    %c0 = arith.constant 0 : index
    %c0_0 = arith.constant 0 : index
    %c0_1 = arith.constant 0 : index
    %c0_2 = arith.constant 0 : index
    %c0_3 = arith.constant 0 : index
    %0 = vector.load %arg1[%c0, %c0_0, %c0_1, %c0_2, %c0_3] : memref<1x4x8x8x128xf32, #tpu.memory_space<vmem>>, vector<1x4x8x8x128xf32>
    %1 = vector.shape_cast %0 : vector<1x4x8x8x128xf32> to vector<4x8x8x128xf32>
    %2 = vector.shape_cast %1 : vector<4x8x8x128xf32> to vector<256x128xf32>
    %c0_4 = arith.constant 0 : index
    %c0_5 = arith.constant 0 : index
    %3 = vector.load %arg2[%c0_4, %c0_5] : memref<128x32xbf16, #tpu.memory_space<vmem>>, vector<128x32xbf16>
    %4 = arith.truncf %2 : vector<256x128xf32> to vector<256x128xbf16>
    %cst = arith.constant dense<0.000000e+00> : vector<256x32xf32>
    %5 = tpu.matmul %4, %3, %cst {dimension_numbers = #tpu.dot_dimension_numbers<[1], [0], [0], [1], [0, 0, 1, 1], [], []>} : vector<256x128xbf16>, vector<128x32xbf16>, vector<256x32xf32> -> vector<256x32xf32>
    %c0_6 = arith.constant 0 : index
    %c0_7 = arith.constant 0 : index
    %6 = vector.load %arg6[%c0_6, %c0_7] : memref<1x32xf32, #tpu.memory_space<vmem>>, vector<1x32xf32>
    %7 = vector.broadcast %6 : vector<1x32xf32> to vector<256x32xf32>
    %8 = arith.mulf %5, %7 : vector<256x32xf32>
    %c0_8 = arith.constant 0 : index
    %c0_9 = arith.constant 0 : index
    %9 = vector.load %arg7[%c0_8, %c0_9] : memref<1x32xf32, #tpu.memory_space<vmem>>, vector<1x32xf32>
    %10 = vector.broadcast %9 : vector<1x32xf32> to vector<256x32xf32>
    %11 = arith.addf %8, %10 : vector<256x32xf32>
    %cst_10 = arith.constant 0.000000e+00 : f32
    %12 = vector.broadcast %cst_10 : f32 to vector<256x32xf32>
    %13 = arith.maximumf %11, %12 : vector<256x32xf32>
    %cst_11 = arith.constant 0.000000e+00 : f32
    %14 = vector.broadcast %cst_11 : f32 to vector<4x10x17x32xf32>
    %c0_12 = arith.constant 0 : index
    %c0_13 = arith.constant 0 : index
    %c0_14 = arith.constant 0 : index
    %c0_15 = arith.constant 0 : index
    %15 = vector.load %arg15[%c0_12, %c0_13, %c0_14, %c0_15] : memref<4x10x17x32xf32, #tpu.memory_space<vmem>>, vector<4x10x17x32xf32>
    tpu.vector_store %arg15[%c0_12, %c0_13, %c0_14, %c0_15], %14 {strides = array<i32>} : memref<4x10x17x32xf32, #tpu.memory_space<vmem>>, vector<4x10x17x32xf32>,
    %16 = vector.shape_cast %13 : vector<256x32xf32> to vector<4x8x8x32xf32>
    %c0_16 = arith.constant 0 : index
    %c1 = arith.constant 1 : index
    %c8 = arith.constant 8 : index
    %c0_17 = arith.constant 0 : index
    %17 = vector.load %arg15[%c0_16, %c1, %c8, %c0_17] : memref<4x10x17x32xf32, #tpu.memory_space<vmem>>, vector<4x8x8x32xf32>
    tpu.vector_store %arg15[%c0_16, %c1, %c8, %c0_17], %16 {strides = array<i32>} : memref<4x10x17x32xf32, #tpu.memory_space<vmem>>, vector<4x8x8x32xf32>,
    %cst_18 = arith.constant 0.000000e+00 : f32
    %18 = vector.broadcast %cst_18 : f32 to vector<256x32xf32>
    %c0_19 = arith.constant 0 : index
    %c0_20 = arith.constant 0 : index
    %c7 = arith.constant 7 : index
    %c0_21 = arith.constant 0 : index
    %19 = vector.load %arg15[%c0_19, %c0_20, %c7, %c0_21] : memref<4x10x17x32xf32, #tpu.memory_space<vmem>>, vector<4x8x8x32xf32>
    %20 = vector.shape_cast %19 : vector<4x8x8x32xf32> to vector<256x32xf32>
    %c0_22 = arith.constant 0 : index
    %c0_23 = arith.constant 0 : index
    %c0_24 = arith.constant 0 : index
    %c0_25 = arith.constant 0 : index
    %21 = vector.load %arg3[%c0_22, %c0_23, %c0_24, %c0_25] : memref<3x3x32x32xbf16, #tpu.memory_space<vmem>>, vector<1x1x32x32xbf16>
    %22 = vector.shape_cast %21 : vector<1x1x32x32xbf16> to vector<32x32xbf16>
    %23 = arith.truncf %20 : vector<256x32xf32> to vector<256x32xbf16>
    %cst_26 = arith.constant dense<0.000000e+00> : vector<256x32xf32>
    %24 = tpu.matmul %23, %22, %cst_26 {dimension_numbers = #tpu.dot_dimension_numbers<[1], [0], [0], [1], [0, 0, 1, 1], [], []>} : vector<256x32xbf16>, vector<32x32xbf16>, vector<256x32xf32> -> vector<256x32xf32>
    %25 = arith.addf %18, %24 : vector<256x32xf32>
    %c0_27 = arith.constant 0 : index
    %c0_28 = arith.constant 0 : index
    %c8_29 = arith.constant 8 : index
    %c0_30 = arith.constant 0 : index
    %26 = vector.load %arg15[%c0_27, %c0_28, %c8_29, %c0_30] : memref<4x10x17x32xf32, #tpu.memory_space<vmem>>, vector<4x8x8x32xf32>
    %27 = vector.shape_cast %26 : vector<4x8x8x32xf32> to vector<256x32xf32>
    %c0_31 = arith.constant 0 : index
    %c1_32 = arith.constant 1 : index
    %c0_33 = arith.constant 0 : index
    %c0_34 = arith.constant 0 : index
    %28 = vector.load %arg3[%c0_31, %c1_32, %c0_33, %c0_34] : memref<3x3x32x32xbf16, #tpu.memory_space<vmem>>, vector<1x1x32x32xbf16>
    %29 = vector.shape_cast %28 : vector<1x1x32x32xbf16> to vector<32x32xbf16>
    %30 = arith.truncf %27 : vector<256x32xf32> to vector<256x32xbf16>
    %cst_35 = arith.constant dense<0.000000e+00> : vector<256x32xf32>
    %31 = tpu.matmul %30, %29, %cst_35 {dimension_numbers = #tpu.dot_dimension_numbers<[1], [0], [0], [1], [0, 0, 1, 1], [], []>} : vector<256x32xbf16>, vector<32x32xbf16>, vector<256x32xf32> -> vector<256x32xf32>
    %32 = arith.addf %25, %31 : vector<256x32xf32>
    %c0_36 = arith.constant 0 : index
    %c0_37 = arith.constant 0 : index
    %c9 = arith.constant 9 : index
    %c0_38 = arith.constant 0 : index
    %33 = vector.load %arg15[%c0_36, %c0_37, %c9, %c0_38] : memref<4x10x17x32xf32, #tpu.memory_space<vmem>>, vector<4x8x8x32xf32>
    %34 = vector.shape_cast %33 : vector<4x8x8x32xf32> to vector<256x32xf32>
    %c0_39 = arith.constant 0 : index
    %c2 = arith.constant 2 : index
    %c0_40 = arith.constant 0 : index
    %c0_41 = arith.constant 0 : index
    %35 = vector.load %arg3[%c0_39, %c2, %c0_40, %c0_41] : memref<3x3x32x32xbf16, #tpu.memory_space<vmem>>, vector<1x1x32x32xbf16>
    %36 = vector.shape_cast %35 : vector<1x1x32x32xbf16> to vector<32x32xbf16>
    %37 = arith.truncf %34 : vector<256x32xf32> to vector<256x32xbf16>
    %cst_42 = arith.constant dense<0.000000e+00> : vector<256x32xf32>
    %38 = tpu.matmul %37, %36, %cst_42 {dimension_numbers = #tpu.dot_dimension_numbers<[1], [0], [0], [1], [0, 0, 1, 1], [], []>} : vector<256x32xbf16>, vector<32x32xbf16>, vector<256x32xf32> -> vector<256x32xf32>
    %39 = arith.addf %32, %38 : vector<256x32xf32>
    %c0_43 = arith.constant 0 : index
    %c1_44 = arith.constant 1 : index
    %c7_45 = arith.constant 7 : index
    %c0_46 = arith.constant 0 : index
    %40 = vector.load %arg15[%c0_43, %c1_44, %c7_45, %c0_46] : memref<4x10x17x32xf32, #tpu.memory_space<vmem>>, vector<4x8x8x32xf32>
    %41 = vector.shape_cast %40 : vector<4x8x8x32xf32> to vector<256x32xf32>
    %c1_47 = arith.constant 1 : index
    %c0_48 = arith.constant 0 : index
    %c0_49 = arith.constant 0 : index
    %c0_50 = arith.constant 0 : index
    %42 = vector.load %arg3[%c1_47, %c0_48, %c0_49, %c0_50] : memref<3x3x32x32xbf16, #tpu.memory_space<vmem>>, vector<1x1x32x32xbf16>
    %43 = vector.shape_cast %42 : vector<1x1x32x32xbf16> to vector<32x32xbf16>
    %44 = arith.truncf %41 : vector<256x32xf32> to vector<256x32xbf16>
    %cst_51 = arith.constant dense<0.000000e+00> : vector<256x32xf32>
    %45 = tpu.matmul %44, %43, %cst_51 {dimension_numbers = #tpu.dot_dimension_numbers<[1], [0], [0], [1], [0, 0, 1, 1], [], []>} : vector<256x32xbf16>, vector<32x32xbf16>, vector<256x32xf32> -> vector<256x32xf32>
    %46 = arith.addf %39, %45 : vector<256x32xf32>
    %c0_52 = arith.constant 0 : index
    %c1_53 = arith.constant 1 : index
    %c8_54 = arith.constant 8 : index
    %c0_55 = arith.constant 0 : index
    %47 = vector.load %arg15[%c0_52, %c1_53, %c8_54, %c0_55] : memref<4x10x17x32xf32, #tpu.memory_space<vmem>>, vector<4x8x8x32xf32>
    %48 = vector.shape_cast %47 : vector<4x8x8x32xf32> to vector<256x32xf32>
    %c1_56 = arith.constant 1 : index
    %c1_57 = arith.constant 1 : index
    %c0_58 = arith.constant 0 : index
    %c0_59 = arith.constant 0 : index
    %49 = vector.load %arg3[%c1_56, %c1_57, %c0_58, %c0_59] : memref<3x3x32x32xbf16, #tpu.memory_space<vmem>>, vector<1x1x32x32xbf16>
    %50 = vector.shape_cast %49 : vector<1x1x32x32xbf16> to vector<32x32xbf16>
    %51 = arith.truncf %48 : vector<256x32xf32> to vector<256x32xbf16>
    %cst_60 = arith.constant dense<0.000000e+00> : vector<256x32xf32>
    %52 = tpu.matmul %51, %50, %cst_60 {dimension_numbers = #tpu.dot_dimension_numbers<[1], [0], [0], [1], [0, 0, 1, 1], [], []>} : vector<256x32xbf16>, vector<32x32xbf16>, vector<256x32xf32> -> vector<256x32xf32>
    %53 = arith.addf %46, %52 : vector<256x32xf32>
    %c0_61 = arith.constant 0 : index
    %c1_62 = arith.constant 1 : index
    %c9_63 = arith.constant 9 : index
    %c0_64 = arith.constant 0 : index
    %54 = vector.load %arg15[%c0_61, %c1_62, %c9_63, %c0_64] : memref<4x10x17x32xf32, #tpu.memory_space<vmem>>, vector<4x8x8x32xf32>
    %55 = vector.shape_cast %54 : vector<4x8x8x32xf32> to vector<256x32xf32>
    %c1_65 = arith.constant 1 : index
    %c2_66 = arith.constant 2 : index
    %c0_67 = arith.constant 0 : index
    %c0_68 = arith.constant 0 : index
    %56 = vector.load %arg3[%c1_65, %c2_66, %c0_67, %c0_68] : memref<3x3x32x32xbf16, #tpu.memory_space<vmem>>, vector<1x1x32x32xbf16>
    %57 = vector.shape_cast %56 : vector<1x1x32x32xbf16> to vector<32x32xbf16>
    %58 = arith.truncf %55 : vector<256x32xf32> to vector<256x32xbf16>
    %cst_69 = arith.constant dense<0.000000e+00> : vector<256x32xf32>
    %59 = tpu.matmul %58, %57, %cst_69 {dimension_numbers = #tpu.dot_dimension_numbers<[1], [0], [0], [1], [0, 0, 1, 1], [], []>} : vector<256x32xbf16>, vector<32x32xbf16>, vector<256x32xf32> -> vector<256x32xf32>
    %60 = arith.addf %53, %59 : vector<256x32xf32>
    %c0_70 = arith.constant 0 : index
    %c2_71 = arith.constant 2 : index
    %c7_72 = arith.constant 7 : index
    %c0_73 = arith.constant 0 : index
    %61 = vector.load %arg15[%c0_70, %c2_71, %c7_72, %c0_73] : memref<4x10x17x32xf32, #tpu.memory_space<vmem>>, vector<4x8x8x32xf32>
    %62 = vector.shape_cast %61 : vector<4x8x8x32xf32> to vector<256x32xf32>
    %c2_74 = arith.constant 2 : index
    %c0_75 = arith.constant 0 : index
    %c0_76 = arith.constant 0 : index
    %c0_77 = arith.constant 0 : index
    %63 = vector.load %arg3[%c2_74, %c0_75, %c0_76, %c0_77] : memref<3x3x32x32xbf16, #tpu.memory_space<vmem>>, vector<1x1x32x32xbf16>
    %64 = vector.shape_cast %63 : vector<1x1x32x32xbf16> to vector<32x32xbf16>
    %65 = arith.truncf %62 : vector<256x32xf32> to vector<256x32xbf16>
    %cst_78 = arith.constant dense<0.000000e+00> : vector<256x32xf32>
    %66 = tpu.matmul %65, %64, %cst_78 {dimension_numbers = #tpu.dot_dimension_numbers<[1], [0], [0], [1], [0, 0, 1, 1], [], []>} : vector<256x32xbf16>, vector<32x32xbf16>, vector<256x32xf32> -> vector<256x32xf32>
    %67 = arith.addf %60, %66 : vector<256x32xf32>
    %c0_79 = arith.constant 0 : index
    %c2_80 = arith.constant 2 : index
    %c8_81 = arith.constant 8 : index
    %c0_82 = arith.constant 0 : index
    %68 = vector.load %arg15[%c0_79, %c2_80, %c8_81, %c0_82] : memref<4x10x17x32xf32, #tpu.memory_space<vmem>>, vector<4x8x8x32xf32>
    %69 = vector.shape_cast %68 : vector<4x8x8x32xf32> to vector<256x32xf32>
    %c2_83 = arith.constant 2 : index
    %c1_84 = arith.constant 1 : index
    %c0_85 = arith.constant 0 : index
    %c0_86 = arith.constant 0 : index
    %70 = vector.load %arg3[%c2_83, %c1_84, %c0_85, %c0_86] : memref<3x3x32x32xbf16, #tpu.memory_space<vmem>>, vector<1x1x32x32xbf16>
    %71 = vector.shape_cast %70 : vector<1x1x32x32xbf16> to vector<32x32xbf16>
    %72 = arith.truncf %69 : vector<256x32xf32> to vector<256x32xbf16>
    %cst_87 = arith.constant dense<0.000000e+00> : vector<256x32xf32>
    %73 = tpu.matmul %72, %71, %cst_87 {dimension_numbers = #tpu.dot_dimension_numbers<[1], [0], [0], [1], [0, 0, 1, 1], [], []>} : vector<256x32xbf16>, vector<32x32xbf16>, vector<256x32xf32> -> vector<256x32xf32>
    %74 = arith.addf %67, %73 : vector<256x32xf32>
    %c0_88 = arith.constant 0 : index
    %c2_89 = arith.constant 2 : index
    %c9_90 = arith.constant 9 : index
    %c0_91 = arith.constant 0 : index
    %75 = vector.load %arg15[%c0_88, %c2_89, %c9_90, %c0_91] : memref<4x10x17x32xf32, #tpu.memory_space<vmem>>, vector<4x8x8x32xf32>
    %76 = vector.shape_cast %75 : vector<4x8x8x32xf32> to vector<256x32xf32>
    %c2_92 = arith.constant 2 : index
    %c2_93 = arith.constant 2 : index
    %c0_94 = arith.constant 0 : index
    %c0_95 = arith.constant 0 : index
    %77 = vector.load %arg3[%c2_92, %c2_93, %c0_94, %c0_95] : memref<3x3x32x32xbf16, #tpu.memory_space<vmem>>, vector<1x1x32x32xbf16>
    %78 = vector.shape_cast %77 : vector<1x1x32x32xbf16> to vector<32x32xbf16>
    %79 = arith.truncf %76 : vector<256x32xf32> to vector<256x32xbf16>
    %cst_96 = arith.constant dense<0.000000e+00> : vector<256x32xf32>
    %80 = tpu.matmul %79, %78, %cst_96 {dimension_numbers = #tpu.dot_dimension_numbers<[1], [0], [0], [1], [0, 0, 1, 1], [], []>} : vector<256x32xbf16>, vector<32x32xbf16>, vector<256x32xf32> -> vector<256x32xf32>
    %81 = arith.addf %74, %80 : vector<256x32xf32>
    %c0_97 = arith.constant 0 : index
    %c0_98 = arith.constant 0 : index
    %82 = vector.load %arg8[%c0_97, %c0_98] : memref<1x32xf32, #tpu.memory_space<vmem>>, vector<1x32xf32>
    %83 = vector.broadcast %82 : vector<1x32xf32> to vector<256x32xf32>
    %84 = arith.mulf %81, %83 : vector<256x32xf32>
    %c0_99 = arith.constant 0 : index
    %c0_100 = arith.constant 0 : index
    %85 = vector.load %arg9[%c0_99, %c0_100] : memref<1x32xf32, #tpu.memory_space<vmem>>, vector<1x32xf32>
    %86 = vector.broadcast %85 : vector<1x32xf32> to vector<256x32xf32>
    %87 = arith.addf %84, %86 : vector<256x32xf32>
    %cst_101 = arith.constant 0.000000e+00 : f32
    %88 = vector.broadcast %cst_101 : f32 to vector<256x32xf32>
    %89 = arith.maximumf %87, %88 : vector<256x32xf32>
    %cst_102 = arith.constant 0.000000e+00 : f32
    %90 = vector.broadcast %cst_102 : f32 to vector<64x32xf32>
    %c0_103 = arith.constant 0 : index
    %c0_104 = arith.constant 0 : index
    %c0_105 = arith.constant 0 : index
    %91 = vector.load %arg16[%c0_103, %c0_104, %c0_105] : memref<6x64x32xf32, #tpu.memory_space<vmem>>, vector<1x64x32xf32>
    %92 = vector.shape_cast %91 : vector<1x64x32xf32> to vector<64x32xf32>
    %93 = vector.shape_cast %90 : vector<64x32xf32> to vector<1x64x32xf32>
    tpu.vector_store %arg16[%c0_103, %c0_104, %c0_105], %93 {strides = array<i32>} : memref<6x64x32xf32, #tpu.memory_space<vmem>>, vector<1x64x32xf32>,
    %cst_106 = arith.constant 0.000000e+00 : f32
    %94 = vector.broadcast %cst_106 : f32 to vector<64x32xf32>
    %c5 = arith.constant 5 : index
    %c0_107 = arith.constant 0 : index
    %c0_108 = arith.constant 0 : index
    %95 = vector.load %arg16[%c5, %c0_107, %c0_108] : memref<6x64x32xf32, #tpu.memory_space<vmem>>, vector<1x64x32xf32>
    %96 = vector.shape_cast %95 : vector<1x64x32xf32> to vector<64x32xf32>
    %97 = vector.shape_cast %94 : vector<64x32xf32> to vector<1x64x32xf32>
    tpu.vector_store %arg16[%c5, %c0_107, %c0_108], %97 {strides = array<i32>} : memref<6x64x32xf32, #tpu.memory_space<vmem>>, vector<1x64x32xf32>,
    %98 = vector.shape_cast %89 : vector<256x32xf32> to vector<4x64x32xf32>
    %c1_109 = arith.constant 1 : index
    %c0_110 = arith.constant 0 : index
    %c0_111 = arith.constant 0 : index
    %99 = vector.load %arg16[%c1_109, %c0_110, %c0_111] : memref<6x64x32xf32, #tpu.memory_space<vmem>>, vector<4x64x32xf32>
    tpu.vector_store %arg16[%c1_109, %c0_110, %c0_111], %98 {strides = array<i32>} : memref<6x64x32xf32, #tpu.memory_space<vmem>>, vector<4x64x32xf32>,
    %cst_112 = arith.constant 0.000000e+00 : f32
    %100 = vector.broadcast %cst_112 : f32 to vector<256x32xf32>
    %c0_113 = arith.constant 0 : index
    %c0_114 = arith.constant 0 : index
    %c0_115 = arith.constant 0 : index
    %101 = vector.load %arg16[%c0_113, %c0_114, %c0_115] : memref<6x64x32xf32, #tpu.memory_space<vmem>>, vector<4x64x32xf32>
    %102 = vector.shape_cast %101 : vector<4x64x32xf32> to vector<256x32xf32>
    %c0_116 = arith.constant 0 : index
    %c0_117 = arith.constant 0 : index
    %c0_118 = arith.constant 0 : index
    %103 = vector.load %arg4[%c0_116, %c0_117, %c0_118] : memref<3x32x32xbf16, #tpu.memory_space<vmem>>, vector<1x32x32xbf16>
    %104 = vector.shape_cast %103 : vector<1x32x32xbf16> to vector<32x32xbf16>
    %105 = arith.truncf %102 : vector<256x32xf32> to vector<256x32xbf16>
    %cst_119 = arith.constant dense<0.000000e+00> : vector<256x32xf32>
    %106 = tpu.matmul %105, %104, %cst_119 {dimension_numbers = #tpu.dot_dimension_numbers<[1], [0], [0], [1], [0, 0, 1, 1], [], []>} : vector<256x32xbf16>, vector<32x32xbf16>, vector<256x32xf32> -> vector<256x32xf32>
    %107 = arith.addf %100, %106 : vector<256x32xf32>
    %c1_120 = arith.constant 1 : index
    %c0_121 = arith.constant 0 : index
    %c0_122 = arith.constant 0 : index
    %108 = vector.load %arg16[%c1_120, %c0_121, %c0_122] : memref<6x64x32xf32, #tpu.memory_space<vmem>>, vector<4x64x32xf32>
    %109 = vector.shape_cast %108 : vector<4x64x32xf32> to vector<256x32xf32>
    %c1_123 = arith.constant 1 : index
    %c0_124 = arith.constant 0 : index
    %c0_125 = arith.constant 0 : index
    %110 = vector.load %arg4[%c1_123, %c0_124, %c0_125] : memref<3x32x32xbf16, #tpu.memory_space<vmem>>, vector<1x32x32xbf16>
    %111 = vector.shape_cast %110 : vector<1x32x32xbf16> to vector<32x32xbf16>
    %112 = arith.truncf %109 : vector<256x32xf32> to vector<256x32xbf16>
    %cst_126 = arith.constant dense<0.000000e+00> : vector<256x32xf32>
    %113 = tpu.matmul %112, %111, %cst_126 {dimension_numbers = #tpu.dot_dimension_numbers<[1], [0], [0], [1], [0, 0, 1, 1], [], []>} : vector<256x32xbf16>, vector<32x32xbf16>, vector<256x32xf32> -> vector<256x32xf32>
    %114 = arith.addf %107, %113 : vector<256x32xf32>
    %c2_127 = arith.constant 2 : index
    %c0_128 = arith.constant 0 : index
    %c0_129 = arith.constant 0 : index
    %115 = vector.load %arg16[%c2_127, %c0_128, %c0_129] : memref<6x64x32xf32, #tpu.memory_space<vmem>>, vector<4x64x32xf32>
    %116 = vector.shape_cast %115 : vector<4x64x32xf32> to vector<256x32xf32>
    %c2_130 = arith.constant 2 : index
    %c0_131 = arith.constant 0 : index
    %c0_132 = arith.constant 0 : index
    %117 = vector.load %arg4[%c2_130, %c0_131, %c0_132] : memref<3x32x32xbf16, #tpu.memory_space<vmem>>, vector<1x32x32xbf16>
    %118 = vector.shape_cast %117 : vector<1x32x32xbf16> to vector<32x32xbf16>
    %119 = arith.truncf %116 : vector<256x32xf32> to vector<256x32xbf16>
    %cst_133 = arith.constant dense<0.000000e+00> : vector<256x32xf32>
    %120 = tpu.matmul %119, %118, %cst_133 {dimension_numbers = #tpu.dot_dimension_numbers<[1], [0], [0], [1], [0, 0, 1, 1], [], []>} : vector<256x32xbf16>, vector<32x32xbf16>, vector<256x32xf32> -> vector<256x32xf32>
    %121 = arith.addf %114, %120 : vector<256x32xf32>
    %c0_134 = arith.constant 0 : index
    %c0_135 = arith.constant 0 : index
    %122 = vector.load %arg10[%c0_134, %c0_135] : memref<1x32xf32, #tpu.memory_space<vmem>>, vector<1x32xf32>
    %123 = vector.broadcast %122 : vector<1x32xf32> to vector<256x32xf32>
    %124 = arith.mulf %121, %123 : vector<256x32xf32>
    %c0_136 = arith.constant 0 : index
    %c0_137 = arith.constant 0 : index
    %125 = vector.load %arg11[%c0_136, %c0_137] : memref<1x32xf32, #tpu.memory_space<vmem>>, vector<1x32xf32>
    %126 = vector.broadcast %125 : vector<1x32xf32> to vector<256x32xf32>
    %127 = arith.addf %124, %126 : vector<256x32xf32>
    %cst_138 = arith.constant 0.000000e+00 : f32
    %128 = vector.broadcast %cst_138 : f32 to vector<256x32xf32>
    %129 = arith.maximumf %127, %128 : vector<256x32xf32>
    %c0_139 = arith.constant 0 : index
    %c0_140 = arith.constant 0 : index
    %c0_141 = arith.constant 0 : index
    %c0_142 = arith.constant 0 : index
    %c0_143 = arith.constant 0 : index
    %130 = vector.load %arg1[%c0_139, %c0_140, %c0_141, %c0_142, %c0_143] : memref<1x4x8x8x128xf32, #tpu.memory_space<vmem>>, vector<1x4x8x8x128xf32>
    %131 = vector.shape_cast %130 : vector<1x4x8x8x128xf32> to vector<4x8x8x128xf32>
    %132 = vector.shape_cast %131 : vector<4x8x8x128xf32> to vector<256x128xf32>
    %c0_144 = arith.constant 0 : index
    %c0_145 = arith.constant 0 : index
    %133 = vector.load %arg5[%c0_144, %c0_145] : memref<32x128xbf16, #tpu.memory_space<vmem>>, vector<32x128xbf16>
    %134 = arith.truncf %129 : vector<256x32xf32> to vector<256x32xbf16>
    %cst_146 = arith.constant dense<0.000000e+00> : vector<256x128xf32>
    %135 = tpu.matmul %134, %133, %cst_146 {dimension_numbers = #tpu.dot_dimension_numbers<[1], [0], [0], [1], [0, 0, 1, 1], [], []>} : vector<256x32xbf16>, vector<32x128xbf16>, vector<256x128xf32> -> vector<256x128xf32>
    %c0_147 = arith.constant 0 : index
    %c0_148 = arith.constant 0 : index
    %136 = vector.load %arg12[%c0_147, %c0_148] : memref<1x128xf32, #tpu.memory_space<vmem>>, vector<1x128xf32>
    %137 = vector.broadcast %136 : vector<1x128xf32> to vector<256x128xf32>
    %138 = arith.mulf %135, %137 : vector<256x128xf32>
    %c0_149 = arith.constant 0 : index
    %c0_150 = arith.constant 0 : index
    %139 = vector.load %arg13[%c0_149, %c0_150] : memref<1x128xf32, #tpu.memory_space<vmem>>, vector<1x128xf32>
    %140 = vector.broadcast %139 : vector<1x128xf32> to vector<256x128xf32>
    %141 = arith.addf %138, %140 : vector<256x128xf32>
    %142 = arith.addf %141, %132 : vector<256x128xf32>
    %cst_151 = arith.constant 0.000000e+00 : f32
    %143 = vector.broadcast %cst_151 : f32 to vector<256x128xf32>
    %144 = arith.maximumf %142, %143 : vector<256x128xf32>
    %145 = vector.shape_cast %144 : vector<256x128xf32> to vector<1x4x8x8x128xf32>
    %c0_152 = arith.constant 0 : index
    %c0_153 = arith.constant 0 : index
    %c0_154 = arith.constant 0 : index
    %c0_155 = arith.constant 0 : index
    %c0_156 = arith.constant 0 : index
    %146 = vector.load %arg14[%c0_152, %c0_153, %c0_154, %c0_155, %c0_156] : memref<1x4x8x8x128xf32, #tpu.memory_space<vmem>>, vector<1x4x8x8x128xf32>
    tpu.vector_store %arg14[%c0_152, %c0_153, %c0_154, %c0_155, %c0_156], %145 {strides = array<i32>} : memref<1x4x8x8x128xf32, #tpu.memory_space<vmem>>, vector<1x4x8x8x128xf32>,
    return
  }
  func.func @transform_0(%arg0: i32) -> (i32, i32, i32, i32, i32) {
    %c0_i32 = arith.constant 0 : i32
    %c0_i32_0 = arith.constant 0 : i32
    %c0_i32_1 = arith.constant 0 : i32
    %c0_i32_2 = arith.constant 0 : i32
    %c0_i32_3 = arith.constant 0 : i32
    return %arg0, %c0_i32, %c0_i32_0, %c0_i32_1, %c0_i32_2 : i32, i32, i32, i32, i32
  }
  func.func @transform_1(%arg0: i32) -> (i32, i32) {
    %c0_i32 = arith.constant 0 : i32
    %c0_i32_0 = arith.constant 0 : i32
    %c0_i32_1 = arith.constant 0 : i32
    return %c0_i32, %c0_i32_0 : i32, i32
  }
  func.func @transform_2(%arg0: i32) -> (i32, i32, i32, i32) {
    %c0_i32 = arith.constant 0 : i32
    %c0_i32_0 = arith.constant 0 : i32
    %c0_i32_1 = arith.constant 0 : i32
    %c0_i32_2 = arith.constant 0 : i32
    %c0_i32_3 = arith.constant 0 : i32
    return %c0_i32, %c0_i32_0, %c0_i32_1, %c0_i32_2 : i32, i32, i32, i32
  }
  func.func @transform_3(%arg0: i32) -> (i32, i32, i32) {
    %c0_i32 = arith.constant 0 : i32
    %c0_i32_0 = arith.constant 0 : i32
    %c0_i32_1 = arith.constant 0 : i32
    %c0_i32_2 = arith.constant 0 : i32
    return %c0_i32, %c0_i32_0, %c0_i32_1 : i32, i32, i32
  }
  func.func @transform_4(%arg0: i32) -> (i32, i32) {
    %c0_i32 = arith.constant 0 : i32
    %c0_i32_0 = arith.constant 0 : i32
    %c0_i32_1 = arith.constant 0 : i32
    return %c0_i32, %c0_i32_0 : i32, i32
  }
  func.func @transform_5(%arg0: i32) -> (i32, i32) {
    %c0_i32 = arith.constant 0 : i32
    %c0_i32_0 = arith.constant 0 : i32
    %c0_i32_1 = arith.constant 0 : i32
    return %c0_i32, %c0_i32_0 : i32, i32
  }
  func.func @transform_6(%arg0: i32) -> (i32, i32) {
    %c0_i32 = arith.constant 0 : i32
    %c0_i32_0 = arith.constant 0 : i32
    %c0_i32_1 = arith.constant 0 : i32
    return %c0_i32, %c0_i32_0 : i32, i32
  }
  func.func @transform_7(%arg0: i32) -> (i32, i32) {
    %c0_i32 = arith.constant 0 : i32
    %c0_i32_0 = arith.constant 0 : i32
    %c0_i32_1 = arith.constant 0 : i32
    return %c0_i32, %c0_i32_0 : i32, i32
  }
  func.func @transform_8(%arg0: i32) -> (i32, i32) {
    %c0_i32 = arith.constant 0 : i32
    %c0_i32_0 = arith.constant 0 : i32
    %c0_i32_1 = arith.constant 0 : i32
    return %c0_i32, %c0_i32_0 : i32, i32
  }
  func.func @transform_9(%arg0: i32) -> (i32, i32) {
    %c0_i32 = arith.constant 0 : i32
    %c0_i32_0 = arith.constant 0 : i32
    %c0_i32_1 = arith.constant 0 : i32
    return %c0_i32, %c0_i32_0 : i32, i32
  }
  func.func @transform_10(%arg0: i32) -> (i32, i32) {
    %c0_i32 = arith.constant 0 : i32
    %c0_i32_0 = arith.constant 0 : i32
    %c0_i32_1 = arith.constant 0 : i32
    return %c0_i32, %c0_i32_0 : i32, i32
  }
  func.func @transform_11(%arg0: i32) -> (i32, i32) {
    %c0_i32 = arith.constant 0 : i32
    %c0_i32_0 = arith.constant 0 : i32
    %c0_i32_1 = arith.constant 0 : i32
    return %c0_i32, %c0_i32_0 : i32, i32
  }
  func.func @transform_12(%arg0: i32) -> (i32, i32) {
    %c0_i32 = arith.constant 0 : i32
    %c0_i32_0 = arith.constant 0 : i32
    %c0_i32_1 = arith.constant 0 : i32
    return %c0_i32, %c0_i32_0 : i32, i32
  }
  func.func @transform_13(%arg0: i32) -> (i32, i32, i32, i32, i32) {
    %c0_i32 = arith.constant 0 : i32
    %c0_i32_0 = arith.constant 0 : i32
    %c0_i32_1 = arith.constant 0 : i32
    %c0_i32_2 = arith.constant 0 : i32
    %c0_i32_3 = arith.constant 0 : i32
    return %arg0, %c0_i32, %c0_i32_0, %c0_i32_1, %c0_i32_2 : i32, i32, i32, i32, i32
  }
}

</mosaic_0001>

<llo_original>
// kernel: bottleneck_forward.1
$region0: #{bottleneck_forward.1}
  #allocation0 [shape = 'u32[]', space=smem, size = 0x4, offset = 0x4, fixed_abs, tag = 'smem constant byte address 0x4 - core index']
  #allocation1 [shape = 'u32[144,128]{1,0:T(1,128)}', space=vmem, size = 0x12000, scoped, tag = 'internal scratch']
  #allocation2 [shape = 'f32[4,10,17,32]{3,2,1,0:T(8,128)}', space=vmem, size = 0x78000, scoped, tag = 'scratch operand']
  #allocation3 [shape = 'f32[6,64,32]{2,1,0:T(8,128)}', space=vmem, size = 0x30000, scoped, tag = 'scratch operand']
  %s0 = inlined_call_operand.vmem [shape: f32[2,4,8,8,128], index: 0, kind: input, shape index: {}]
  %s1 = inlined_call_operand.vmem [shape: bf16[128,32], index: 1, kind: input, shape index: {}]
  %s2 = inlined_call_operand.vmem [shape: bf16[3,3,32,32], index: 2, kind: input, shape index: {}]
  %s3 = inlined_call_operand.vmem [shape: bf16[3,32,32], index: 3, kind: input, shape index: {}]
  %s4 = inlined_call_operand.vmem [shape: bf16[32,128], index: 4, kind: input, shape index: {}]
  %s5 = inlined_call_operand.vmem [shape: f32[1,32], index: 5, kind: input, shape index: {}]
  %s6 = inlined_call_operand.vmem [shape: f32[1,32], index: 6, kind: input, shape index: {}]
  %s7 = inlined_call_operand.vmem [shape: f32[1,32], index: 7, kind: input, shape index: {}]
  %s8 = inlined_call_operand.vmem [shape: f32[1,32], index: 8, kind: input, shape index: {}]
  %s9 = inlined_call_operand.vmem [shape: f32[1,32], index: 9, kind: input, shape index: {}]
  %s10 = inlined_call_operand.vmem [shape: f32[1,32], index: 10, kind: input, shape index: {}]
  %s11 = inlined_call_operand.vmem [shape: f32[1,128], index: 11, kind: input, shape index: {}]
  %s12 = inlined_call_operand.vmem [shape: f32[1,128], index: 12, kind: input, shape index: {}]
  %s13 = inlined_call_operand.hbm [shape: f32[2,4,8,8,128], index: 13, kind: output, shape index: {}]
  %s14 = sld [smem:[#allocation0]]
  $region85: #{bottleneck_forward.1} parent=0
    _
  %s16 = ssub.s32 1, %s14
  %s17 = scalar_select 0, %s16, %s14
  $region1: #{bottleneck_forward.1} parent=0
    #allocation4 [shape = 'u8[262144]{0}', space=vmem, size = 0x40000, scoped, tag = 'output window, operand 0']
    #allocation5 [shape = 's32[2]{0}', space=sflag, size = 0x8, scoped, tag = 'scoped memory for bottleneck_forward.1']
    %18 = vsyncpa [#allocation5], 0
    %s19 = scalar_lea.sflag [#allocation5], 1
    %20 = vsyncpa %s19, 0
    loop: start=0, step=1, limit=4
    $region2: #{bottleneck_forward.1} parent=1 // loop_pre_header
      _
    $region3: #{bottleneck_forward.1} parent=1 // loop_header
      %s22 = sphi 0, %s26
      %p23 = scmp.ge.s32.totalorder %s22, 4
      %s32 = sphi 0, %s34
      %s35 = sphi 0, %s32
      %s36 = sphi 0, %s35
      %s52 = sphi 0, %s36
      %s56 = sphi 0, %s56
      %s58 = sphi 0, %s56
      %s59 = sphi 0, %s58
      %s73 = sphi 0, %s59
      %s77 = sphi 0, %s77
      %s79 = sphi 0, %s77
      %s80 = sphi 0, %s79
      %s94 = sphi 0, %s80
      %s98 = sphi 0, %s98
      %s100 = sphi 0, %s98
      %s101 = sphi 0, %s100
      %s115 = sphi 0, %s101
      %s119 = sphi 0, %s119
      %s121 = sphi 0, %s119
      %s122 = sphi 0, %s121
      %s136 = sphi 0, %s122
      %s140 = sphi 0, %s140
      %s142 = sphi 0, %s140
      %s143 = sphi 0, %s142
      %s157 = sphi 0, %s143
      %s161 = sphi 0, %s161
      %s163 = sphi 0, %s161
      %s164 = sphi 0, %s163
      %s178 = sphi 0, %s164
      %s182 = sphi 0, %s182
      %s184 = sphi 0, %s182
      %s185 = sphi 0, %s184
      %s199 = sphi 0, %s185
      %s203 = sphi 0, %s203
      %s205 = sphi 0, %s203
      %s206 = sphi 0, %s205
      %s220 = sphi 0, %s206
      %s224 = sphi 0, %s224
      %s226 = sphi 0, %s224
      %s227 = sphi 0, %s226
      %s241 = sphi 0, %s227
      %s245 = sphi 0, %s245
      %s247 = sphi 0, %s245
      %s248 = sphi 0, %s247
      %s262 = sphi 0, %s248
      %s266 = sphi 0, %s266
      %s268 = sphi 0, %s266
      %s269 = sphi 0, %s268
      %s283 = sphi 0, %s269
      %s287 = sphi 0, %s287
      %s289 = sphi 0, %s287
      %s290 = sphi 0, %s289
      %s304 = sphi 0, %s290
      %s310 = sphi 0, %s312
      %s313 = sphi 0, %s310
      %s314 = sphi 0, %s313
      %s330 = sphi 0, %s314
    $region4: #{bottleneck_forward.1} parent=1 // loop_header_branch
      %25 = sbr.rel (%p23) target = $region8
    $region5: #{bottleneck_forward.1} parent=1 // loop_body
      %s27 = ssub.s32 %s22, 1
      %s28 = ssub.s32 %s22, 2
      %s29 = sadd.s32 %s22, 1
      %s30 = ssub.s32 %s22, %s29
      %p31 = scmp.eq.s32.totalorder %s30, 0
      %s33 = sadd.s32 %s32, 1
      %s34 = scalar_select %p31, %s32, %s33
      %p37 = pneg %p31
      %p38 = scmp.eq.s32.totalorder %s22, 1
      %p39 = por %p37, %p38
      %p40 = scmp.ne.s32.totalorder %s32, %s35
      %p41 = scmp.eq.s32.totalorder %s22, 0
      %p42 = por %p40, %p41
      %p43 = scmp.ne.s32.totalorder %s32, %s35
      %p44 = scmp.eq.s32.totalorder %s27, 1
      %p45 = por %p43, %p44
      %p46 = scmp.ne.s32.totalorder %s35, %s36
      %p47 = scmp.eq.s32.totalorder %s27, 0
      %p48 = por %p46, %p47
      %p49 = scmp.ne.s32.totalorder %s35, %s36
      %p50 = scmp.eq.s32.totalorder %s28, 1
      %p51 = por %p49, %p50
      %p53 = scmp.ne.s32.totalorder %s36, %s52
      %p54 = scmp.eq.s32.totalorder %s28, 0
      %p55 = por %p53, %p54
      %s57 = sadd.s32 %s56, 1
      %p60 = scmp.eq.s32.totalorder %s22, 1
      %p61 = scmp.ne.s32.totalorder %s56, %s58
      %p62 = scmp.eq.s32.totalorder %s22, 0
      %p63 = por %p61, %p62
      %p64 = scmp.ne.s32.totalorder %s56, %s58
      %p65 = scmp.eq.s32.totalorder %s27, 1
      %p66 = por %p64, %p65
      %p67 = scmp.ne.s32.totalorder %s58, %s59
      %p68 = scmp.eq.s32.totalorder %s27, 0
      %p69 = por %p67, %p68
      %p70 = scmp.ne.s32.totalorder %s58, %s59
      %p71 = scmp.eq.s32.totalorder %s28, 1
      %p72 = por %p70, %p71
      %p74 = scmp.ne.s32.totalorder %s59, %s73
      %p75 = scmp.eq.s32.totalorder %s28, 0
      %p76 = por %p74, %p75
      %s78 = sadd.s32 %s77, 1
      %p81 = scmp.eq.s32.totalorder %s22, 1
      %p82 = scmp.ne.s32.totalorder %s77, %s79
      %p83 = scmp.eq.s32.totalorder %s22, 0
      %p84 = por %p82, %p83
      %p85 = scmp.ne.s32.totalorder %s77, %s79
      %p86 = scmp.eq.s32.totalorder %s27, 1
      %p87 = por %p85, %p86
      %p88 = scmp.ne.s32.totalorder %s79, %s80
      %p89 = scmp.eq.s32.totalorder %s27, 0
      %p90 = por %p88, %p89
      %p91 = scmp.ne.s32.totalorder %s79, %s80
      %p92 = scmp.eq.s32.totalorder %s28, 1
      %p93 = por %p91, %p92
      %p95 = scmp.ne.s32.totalorder %s80, %s94
      %p96 = scmp.eq.s32.totalorder %s28, 0
      %p97 = por %p95, %p96
      %s99 = sadd.s32 %s98, 1
      %p102 = scmp.eq.s32.totalorder %s22, 1
      %p103 = scmp.ne.s32.totalorder %s98, %s100
      %p104 = scmp.eq.s32.totalorder %s22, 0
      %p105 = por %p103, %p104
      %p106 = scmp.ne.s32.totalorder %s98, %s100
      %p107 = scmp.eq.s32.totalorder %s27, 1
      %p108 = por %p106, %p107
      %p109 = scmp.ne.s32.totalorder %s100, %s101
      %p110 = scmp.eq.s32.totalorder %s27, 0
      %p111 = por %p109, %p110
      %p112 = scmp.ne.s32.totalorder %s100, %s101
      %p113 = scmp.eq.s32.totalorder %s28, 1
      %p114 = por %p112, %p113
      %p116 = scmp.ne.s32.totalorder %s101, %s115
      %p117 = scmp.eq.s32.totalorder %s28, 0
      %p118 = por %p116, %p117
      %s120 = sadd.s32 %s119, 1
      %p123 = scmp.eq.s32.totalorder %s22, 1
      %p124 = scmp.ne.s32.totalorder %s119, %s121
      %p125 = scmp.eq.s32.totalorder %s22, 0
      %p126 = por %p124, %p125
      %p127 = scmp.ne.s32.totalorder %s119, %s121
      %p128 = scmp.eq.s32.totalorder %s27, 1
      %p129 = por %p127, %p128
      %p130 = scmp.ne.s32.totalorder %s121, %s122
      %p131 = scmp.eq.s32.totalorder %s27, 0
      %p132 = por %p130, %p131
      %p133 = scmp.ne.s32.totalorder %s121, %s122
      %p134 = scmp.eq.s32.totalorder %s28, 1
      %p135 = por %p133, %p134
      %p137 = scmp.ne.s32.totalorder %s122, %s136
      %p138 = scmp.eq.s32.totalorder %s28, 0
      %p139 = por %p137, %p138
      %s141 = sadd.s32 %s140, 1
      %p144 = scmp.eq.s32.totalorder %s22, 1
      %p145 = scmp.ne.s32.totalorder %s140, %s142
      %p146 = scmp.eq.s32.totalorder %s22, 0
      %p147 = por %p145, %p146
      %p148 = scmp.ne.s32.totalorder %s140, %s142
      %p149 = scmp.eq.s32.totalorder %s27, 1
      %p150 = por %p148, %p149
      %p151 = scmp.ne.s32.totalorder %s142, %s143
      %p152 = scmp.eq.s32.totalorder %s27, 0
      %p153 = por %p151, %p152
      %p154 = scmp.ne.s32.totalorder %s142, %s143
      %p155 = scmp.eq.s32.totalorder %s28, 1
      %p156 = por %p154, %p155
      %p158 = scmp.ne.s32.totalorder %s143, %s157
      %p159 = scmp.eq.s32.totalorder %s28, 0
      %p160 = por %p158, %p159
      %s162 = sadd.s32 %s161, 1
      %p165 = scmp.eq.s32.totalorder %s22, 1
      %p166 = scmp.ne.s32.totalorder %s161, %s163
      %p167 = scmp.eq.s32.totalorder %s22, 0
      %p168 = por %p166, %p167
      %p169 = scmp.ne.s32.totalorder %s161, %s163
      %p170 = scmp.eq.s32.totalorder %s27, 1
      %p171 = por %p169, %p170
      %p172 = scmp.ne.s32.totalorder %s163, %s164
      %p173 = scmp.eq.s32.totalorder %s27, 0
      %p174 = por %p172, %p173
      %p175 = scmp.ne.s32.totalorder %s163, %s164
      %p176 = scmp.eq.s32.totalorder %s28, 1
      %p177 = por %p175, %p176
      %p179 = scmp.ne.s32.totalorder %s164, %s178
      %p180 = scmp.eq.s32.totalorder %s28, 0
      %p181 = por %p179, %p180
      %s183 = sadd.s32 %s182, 1
      %p186 = scmp.eq.s32.totalorder %s22, 1
      %p187 = scmp.ne.s32.totalorder %s182, %s184
      %p188 = scmp.eq.s32.totalorder %s22, 0
      %p189 = por %p187, %p188
      %p190 = scmp.ne.s32.totalorder %s182, %s184
      %p191 = scmp.eq.s32.totalorder %s27, 1
      %p192 = por %p190, %p191
      %p193 = scmp.ne.s32.totalorder %s184, %s185
      %p194 = scmp.eq.s32.totalorder %s27, 0
      %p195 = por %p193, %p194
      %p196 = scmp.ne.s32.totalorder %s184, %s185
      %p197 = scmp.eq.s32.totalorder %s28, 1
      %p198 = por %p196, %p197
      %p200 = scmp.ne.s32.totalorder %s185, %s199
      %p201 = scmp.eq.s32.totalorder %s28, 0
      %p202 = por %p200, %p201
      %s204 = sadd.s32 %s203, 1
      %p207 = scmp.eq.s32.totalorder %s22, 1
      %p208 = scmp.ne.s32.totalorder %s203, %s205
      %p209 = scmp.eq.s32.totalorder %s22, 0
      %p210 = por %p208, %p209
      %p211 = scmp.ne.s32.totalorder %s203, %s205
      %p212 = scmp.eq.s32.totalorder %s27, 1
      %p213 = por %p211, %p212
      %p214 = scmp.ne.s32.totalorder %s205, %s206
      %p215 = scmp.eq.s32.totalorder %s27, 0
      %p216 = por %p214, %p215
      %p217 = scmp.ne.s32.totalorder %s205, %s206
      %p218 = scmp.eq.s32.totalorder %s28, 1
      %p219 = por %p217, %p218
      %p221 = scmp.ne.s32.totalorder %s206, %s220
      %p222 = scmp.eq.s32.totalorder %s28, 0
      %p223 = por %p221, %p222
      %s225 = sadd.s32 %s224, 1
      %p228 = scmp.eq.s32.totalorder %s22, 1
      %p229 = scmp.ne.s32.totalorder %s224, %s226
      %p230 = scmp.eq.s32.totalorder %s22, 0
      %p231 = por %p229, %p230
      %p232 = scmp.ne.s32.totalorder %s224, %s226
      %p233 = scmp.eq.s32.totalorder %s27, 1
      %p234 = por %p232, %p233
      %p235 = scmp.ne.s32.totalorder %s226, %s227
      %p236 = scmp.eq.s32.totalorder %s27, 0
      %p237 = por %p235, %p236
      %p238 = scmp.ne.s32.totalorder %s226, %s227
      %p239 = scmp.eq.s32.totalorder %s28, 1
      %p240 = por %p238, %p239
      %p242 = scmp.ne.s32.totalorder %s227, %s241
      %p243 = scmp.eq.s32.totalorder %s28, 0
      %p244 = por %p242, %p243
      %s246 = sadd.s32 %s245, 1
      %p249 = scmp.eq.s32.totalorder %s22, 1
      %p250 = scmp.ne.s32.totalorder %s245, %s247
      %p251 = scmp.eq.s32.totalorder %s22, 0
      %p252 = por %p250, %p251
      %p253 = scmp.ne.s32.totalorder %s245, %s247
      %p254 = scmp.eq.s32.totalorder %s27, 1
      %p255 = por %p253, %p254
      %p256 = scmp.ne.s32.totalorder %s247, %s248
      %p257 = scmp.eq.s32.totalorder %s27, 0
      %p258 = por %p256, %p257
      %p259 = scmp.ne.s32.totalorder %s247, %s248
      %p260 = scmp.eq.s32.totalorder %s28, 1
      %p261 = por %p259, %p260
      %p263 = scmp.ne.s32.totalorder %s248, %s262
      %p264 = scmp.eq.s32.totalorder %s28, 0
      %p265 = por %p263, %p264
      %s267 = sadd.s32 %s266, 1
      %p270 = scmp.eq.s32.totalorder %s22, 1
      %p271 = scmp.ne.s32.totalorder %s266, %s268
      %p272 = scmp.eq.s32.totalorder %s22, 0
      %p273 = por %p271, %p272
      %p274 = scmp.ne.s32.totalorder %s266, %s268
      %p275 = scmp.eq.s32.totalorder %s27, 1
      %p276 = por %p274, %p275
      %p277 = scmp.ne.s32.totalorder %s268, %s269
      %p278 = scmp.eq.s32.totalorder %s27, 0
      %p279 = por %p277, %p278
      %p280 = scmp.ne.s32.totalorder %s268, %s269
      %p281 = scmp.eq.s32.totalorder %s28, 1
      %p282 = por %p280, %p281
      %p284 = scmp.ne.s32.totalorder %s269, %s283
      %p285 = scmp.eq.s32.totalorder %s28, 0
      %p286 = por %p284, %p285
      %s288 = sadd.s32 %s287, 1
      %p291 = scmp.eq.s32.totalorder %s22, 1
      %p292 = scmp.ne.s32.totalorder %s287, %s289
      %p293 = scmp.eq.s32.totalorder %s22, 0
      %p294 = por %p292, %p293
      %p295 = scmp.ne.s32.totalorder %s287, %s289
      %p296 = scmp.eq.s32.totalorder %s27, 1
      %p297 = por %p295, %p296
      %p298 = scmp.ne.s32.totalorder %s289, %s290
      %p299 = scmp.eq.s32.totalorder %s27, 0
      %p300 = por %p298, %p299
      %p301 = scmp.ne.s32.totalorder %s289, %s290
      %p302 = scmp.eq.s32.totalorder %s28, 1
      %p303 = por %p301, %p302
      %p305 = scmp.ne.s32.totalorder %s290, %s304
      %p306 = scmp.eq.s32.totalorder %s28, 0
      %p307 = por %p305, %p306
      %s308 = ssub.s32 %s22, %s29
      %p309 = scmp.eq.s32.totalorder %s308, 0
      %s311 = sadd.s32 %s310, 1
      %s312 = scalar_select %p309, %s310, %s311
      %p315 = pneg %p309
      %p316 = scmp.eq.s32.totalorder %s22, 1
      %p317 = por %p315, %p316
      %p318 = scmp.ne.s32.totalorder %s310, %s313
      %p319 = scmp.eq.s32.totalorder %s22, 0
      %p320 = por %p318, %p319
      %p321 = scmp.ne.s32.totalorder %s310, %s313
      %p322 = scmp.eq.s32.totalorder %s27, 1
      %p323 = por %p321, %p322
      %p324 = scmp.ne.s32.totalorder %s313, %s314
      %p325 = scmp.eq.s32.totalorder %s27, 0
      %p326 = por %p324, %p325
      %p327 = scmp.ne.s32.totalorder %s313, %s314
      %p328 = scmp.eq.s32.totalorder %s28, 1
      %p329 = por %p327, %p328
      %p331 = scmp.ne.s32.totalorder %s314, %s330
      %p332 = scmp.eq.s32.totalorder %s28, 0
      %p333 = por %p331, %p332
      %p334 = scmp.le.s32.totalorder 1, %s22
      %p335 = scmp.lt.s32.totalorder %s22, 3
      %p336 = pnand %p334, %p335
      %p337 = pneg %p336
      // Predicated region
      $region9: #{bottleneck_forward.1} parent=5 // pred_check
        _
      $region10: #{bottleneck_forward.1} parent=5 // pred_check_branch
        %339 = sbr.rel (%p336) target = $region12
      $region11: #{bottleneck_forward.1} parent=5 // pred_region
        %s340 = ssub.s32 %s22, 1
        // Predicated region
        $region13: #{bottleneck_forward.1} parent=11 // pred_check
          %p341 = pneg %p69
        $region14: #{bottleneck_forward.1} parent=11 // pred_check_branch
          %343 = sbr.rel (%p341) target = $region16
        $region15: #{bottleneck_forward.1} parent=11 // pred_region
          _
        $region16: #{bottleneck_forward.1} parent=11 // pred_fallthru
          _
        // Predicated region
        $region17: #{bottleneck_forward.1} parent=11 // pred_check
          %p344 = pneg %p90
        $region18: #{bottleneck_forward.1} parent=11 // pred_check_branch
          %346 = sbr.rel (%p344) target = $region20
        $region19: #{bottleneck_forward.1} parent=11 // pred_region
          _
        $region20: #{bottleneck_forward.1} parent=11 // pred_fallthru
          _
        // Predicated region
        $region21: #{bottleneck_forward.1} parent=11 // pred_check
          %p347 = pneg %p111
        $region22: #{bottleneck_forward.1} parent=11 // pred_check_branch
          %349 = sbr.rel (%p347) target = $region24
        $region23: #{bottleneck_forward.1} parent=11 // pred_region
          _
        $region24: #{bottleneck_forward.1} parent=11 // pred_fallthru
          _
        // Predicated region
        $region25: #{bottleneck_forward.1} parent=11 // pred_check
          %p350 = pneg %p132
        $region26: #{bottleneck_forward.1} parent=11 // pred_check_branch
          %352 = sbr.rel (%p350) target = $region28
        $region27: #{bottleneck_forward.1} parent=11 // pred_region
          _
        $region28: #{bottleneck_forward.1} parent=11 // pred_fallthru
          _
        // Predicated region
        $region29: #{bottleneck_forward.1} parent=11 // pred_check
          %p353 = pneg %p153
        $region30: #{bottleneck_forward.1} parent=11 // pred_check_branch
          %355 = sbr.rel (%p353) target = $region32
        $region31: #{bottleneck_forward.1} parent=11 // pred_region
          _
        $region32: #{bottleneck_forward.1} parent=11 // pred_fallthru
          _
        // Predicated region
        $region33: #{bottleneck_forward.1} parent=11 // pred_check
          %p356 = pneg %p174
        $region34: #{bottleneck_forward.1} parent=11 // pred_check_branch
          %358 = sbr.rel (%p356) target = $region36
        $region35: #{bottleneck_forward.1} parent=11 // pred_region
          _
        $region36: #{bottleneck_forward.1} parent=11 // pred_fallthru
          _
        // Predicated region
        $region37: #{bottleneck_forward.1} parent=11 // pred_check
          %p359 = pneg %p195
        $region38: #{bottleneck_forward.1} parent=11 // pred_check_branch
          %361 = sbr.rel (%p359) target = $region40
        $region39: #{bottleneck_forward.1} parent=11 // pred_region
          _
        $region40: #{bottleneck_forward.1} parent=11 // pred_fallthru
          _
        // Predicated region
        $region41: #{bottleneck_forward.1} parent=11 // pred_check
          %p362 = pneg %p216
        $region42: #{bottleneck_forward.1} parent=11 // pred_check_branch
          %364 = sbr.rel (%p362) target = $region44
        $region43: #{bottleneck_forward.1} parent=11 // pred_region
          _
        $region44: #{bottleneck_forward.1} parent=11 // pred_fallthru
          _
        // Predicated region
        $region45: #{bottleneck_forward.1} parent=11 // pred_check
          %p365 = pneg %p237
        $region46: #{bottleneck_forward.1} parent=11 // pred_check_branch
          %367 = sbr.rel (%p365) target = $region48
        $region47: #{bottleneck_forward.1} parent=11 // pred_region
          _
        $region48: #{bottleneck_forward.1} parent=11 // pred_fallthru
          _
        // Predicated region
        $region49: #{bottleneck_forward.1} parent=11 // pred_check
          %p368 = pneg %p258
        $region50: #{bottleneck_forward.1} parent=11 // pred_check_branch
          %370 = sbr.rel (%p368) target = $region52
        $region51: #{bottleneck_forward.1} parent=11 // pred_region
          _
        $region52: #{bottleneck_forward.1} parent=11 // pred_fallthru
          _
        // Predicated region
        $region53: #{bottleneck_forward.1} parent=11 // pred_check
          %p371 = pneg %p279
        $region54: #{bottleneck_forward.1} parent=11 // pred_check_branch
          %373 = sbr.rel (%p371) target = $region56
        $region55: #{bottleneck_forward.1} parent=11 // pred_region
          _
        $region56: #{bottleneck_forward.1} parent=11 // pred_fallthru
          _
        // Predicated region
        $region57: #{bottleneck_forward.1} parent=11 // pred_check
          %p374 = pneg %p300
        $region58: #{bottleneck_forward.1} parent=11 // pred_check_branch
          %376 = sbr.rel (%p374) target = $region60
        $region59: #{bottleneck_forward.1} parent=11 // pred_region
          _
        $region60: #{bottleneck_forward.1} parent=11 // pred_fallthru
          _
      $region12: #{bottleneck_forward.1} parent=5 // pred_fallthru
        _
      %p377 = scmp.lt.s32.totalorder %s22, 2
      // Predicated region
      $region61: #{bottleneck_forward.1} parent=5 // pred_check
        %p378 = pneg %p377
      $region62: #{bottleneck_forward.1} parent=5 // pred_check_branch
        %380 = sbr.rel (%p378) target = $region64
      $region63: #{bottleneck_forward.1} parent=5 // pred_region
        // Predicated region
        $region65: #{bottleneck_forward.1} parent=63 // pred_check
          %p381 = pneg %p42
        $region66: #{bottleneck_forward.1} parent=63 // pred_check_branch
          %383 = sbr.rel (%p381) target = $region68
        $region67: #{bottleneck_forward.1} parent=63 // pred_region
          %p384 = scmp.lt.s32.totalorder %s22, 1
          %s385 = scalar_select %p384, %s22, 1
          %s386 = smul.addr %s385, 32
          %s387 = smul.addr %s386, 8
          %s388 = scalar_lea.vmem %s0, %s387
        $region68: #{bottleneck_forward.1} parent=63 // pred_fallthru
          _
      $region64: #{bottleneck_forward.1} parent=5 // pred_fallthru
        _
      %p389 = scmp.le.s32.totalorder 1, %s22
      %p390 = scmp.lt.s32.totalorder %s22, 3
      %p391 = pnand %p389, %p390
      %p392 = pneg %p391
      // Predicated region
      $region69: #{bottleneck_forward.1} parent=5 // pred_check
        _
      $region70: #{bottleneck_forward.1} parent=5 // pred_check_branch
        %394 = sbr.rel (%p391) target = $region72
      $region71: #{bottleneck_forward.1} parent=5 // pred_region
        %s395 = ssub.s32 %s22, 1
        %p396 = scmp.lt.s32.totalorder %s27, 1
        %s397 = scalar_select %p396, %s27, 1
        %s398 = smul.addr %s397, 32
        %s399 = smul.addr %s398, 8
        %s400 = scalar_lea.vmem %s0, %s399
        %p401 = pneg %p48
        %p402 = pneg %p45
        %p403 = pneg %p69
        %p404 = pneg %p66
        %p405 = pneg %p90
        %p406 = pneg %p87
        %p407 = pneg %p111
        %p408 = pneg %p108
        %p409 = pneg %p132
        %p410 = pneg %p129
        %p411 = pneg %p153
        %p412 = pneg %p150
        %p413 = pneg %p174
        %p414 = pneg %p171
        %p415 = pneg %p195
        %p416 = pneg %p192
        %p417 = pneg %p216
        %p418 = pneg %p213
        %p419 = pneg %p237
        %p420 = pneg %p234
        %p421 = pneg %p258
        %p422 = pneg %p255
        %p423 = pneg %p279
        %p424 = pneg %p276
        %p425 = pneg %p300
        %p426 = pneg %p297
        %p427 = pneg %p326
        %p428 = pneg %p323
        %s429 = sand.u32 %s313, 1
        %s430 = scalar_lea.sflag [#allocation5], %s429
        %s431 = sand.u32 %s313, 1
        %s432 = smul.addr %s431, 256
        %s433 = scalar_lea.vmem [#allocation4], %s432
        %p434 = scmp.lt.s32.totalorder %s27, 1
        %s435 = scalar_select %p434, %s27, 1
        %s436 = smul.addr %s435, 32
        %s437 = smul.addr %s436, 8
        %s438 = scalar_lea.vmem %s0, %s437
        %v440 = vld [vmem:[%s438] sm:$0xff]
        %v441 = vld [vmem:[%s438 + $0x8] sm:$0xff]
        %v442 = vld [vmem:[%s438 + $0x10] sm:$0xff]
        %v443 = vld [vmem:[%s438 + $0x18] sm:$0xff]
        %v444 = vld [vmem:[%s438 + $0x20] sm:$0xff]
        %v445 = vld [vmem:[%s438 + $0x28] sm:$0xff]
        %v446 = vld [vmem:[%s438 + $0x30] sm:$0xff]
        %v447 = vld [vmem:[%s438 + $0x38] sm:$0xff]
        %v448 = vld [vmem:[%s438 + $0x40] sm:$0xff]
        %v449 = vld [vmem:[%s438 + $0x48] sm:$0xff]
        %v450 = vld [vmem:[%s438 + $0x50] sm:$0xff]
        %v451 = vld [vmem:[%s438 + $0x58] sm:$0xff]
        %v452 = vld [vmem:[%s438 + $0x60] sm:$0xff]
        %v453 = vld [vmem:[%s438 + $0x68] sm:$0xff]
        %v454 = vld [vmem:[%s438 + $0x70] sm:$0xff]
        %v455 = vld [vmem:[%s438 + $0x78] sm:$0xff]
        %v456 = vld [vmem:[%s438 + $0x80] sm:$0xff]
        %v457 = vld [vmem:[%s438 + $0x88] sm:$0xff]
        %v458 = vld [vmem:[%s438 + $0x90] sm:$0xff]
        %v459 = vld [vmem:[%s438 + $0x98] sm:$0xff]
        %v460 = vld [vmem:[%s438 + $0xa0] sm:$0xff]
        %v461 = vld [vmem:[%s438 + $0xa8] sm:$0xff]
        %v462 = vld [vmem:[%s438 + $0xb0] sm:$0xff]
        %v463 = vld [vmem:[%s438 + $0xb8] sm:$0xff]
        %v464 = vld [vmem:[%s438 + $0xc0] sm:$0xff]
        %v465 = vld [vmem:[%s438 + $0xc8] sm:$0xff]
        %v466 = vld [vmem:[%s438 + $0xd0] sm:$0xff]
        %v467 = vld [vmem:[%s438 + $0xd8] sm:$0xff]
        %v468 = vld [vmem:[%s438 + $0xe0] sm:$0xff]
        %v469 = vld [vmem:[%s438 + $0xe8] sm:$0xff]
        %v470 = vld [vmem:[%s438 + $0xf0] sm:$0xff]
        %v471 = vld [vmem:[%s438 + $0xf8] sm:$0xff]
        %v472 = vld [vmem:[%s1] sm:$0xf]
        %v473 = vld [vmem:[%s1 + $0x4] sm:$0xf]
        %v474 = vld [vmem:[%s1 + $0x8] sm:$0xf]
        %v475 = vld [vmem:[%s1 + $0xc] sm:$0xf]
        %v476 = vld [vmem:[%s1 + $0x10] sm:$0xf]
        %v477 = vld [vmem:[%s1 + $0x14] sm:$0xf]
        %v478 = vld [vmem:[%s1 + $0x18] sm:$0xf]
        %v479 = vld [vmem:[%s1 + $0x1c] sm:$0xf]
        %v480 = vld [vmem:[%s1 + $0x20] sm:$0xf]
        %v481 = vld [vmem:[%s1 + $0x24] sm:$0xf]
        %v482 = vld [vmem:[%s1 + $0x28] sm:$0xf]
        %v483 = vld [vmem:[%s1 + $0x2c] sm:$0xf]
        %v484 = vld [vmem:[%s1 + $0x30] sm:$0xf]
        %v485 = vld [vmem:[%s1 + $0x34] sm:$0xf]
        %v486 = vld [vmem:[%s1 + $0x38] sm:$0xf]
        %v487 = vld [vmem:[%s1 + $0x3c] sm:$0xf]
        %v488 = vpack.c.bf16 %v441, %v440
        %v489 = vpack.c.bf16 %v443, %v442
        %v490 = vpack.c.bf16 %v445, %v444
        %v491 = vpack.c.bf16 %v447, %v446
        %v492 = vpack.c.bf16 %v449, %v448
        %v493 = vpack.c.bf16 %v451, %v450
        %v494 = vpack.c.bf16 %v453, %v452
        %v495 = vpack.c.bf16 %v455, %v454
        %v496 = vpack.c.bf16 %v457, %v456
        %v497 = vpack.c.bf16 %v459, %v458
        %v498 = vpack.c.bf16 %v461, %v460
        %v499 = vpack.c.bf16 %v463, %v462
        %v500 = vpack.c.bf16 %v465, %v464
        %v501 = vpack.c.bf16 %v467, %v466
        %v502 = vpack.c.bf16 %v469, %v468
        %v503 = vpack.c.bf16 %v471, %v470
        %v520 = vunpack.c.l.b16 %v472
        %v521 = vunpack.c.l.b16 %v473
        %v522 = vunpack.c.l.b16 %v474
        %v523 = vunpack.c.l.b16 %v475
        %v524 = vunpack.c.l.b16 %v476
        %v525 = vunpack.c.l.b16 %v477
        %v526 = vunpack.c.l.b16 %v478
        %v527 = vunpack.c.l.b16 %v479
        %v528 = vunpack.c.l.b16 %v480
        %v529 = vunpack.c.l.b16 %v481
        %v530 = vunpack.c.l.b16 %v482
        %v531 = vunpack.c.l.b16 %v483
        %v532 = vunpack.c.l.b16 %v484
        %v533 = vunpack.c.l.b16 %v485
        %v534 = vunpack.c.l.b16 %v486
        %v535 = vunpack.c.l.b16 %v487
        %v536 = vpack.c.b16 %v521, %v520
        %v537 = vpack.c.b16 %v523, %v522
        %v538 = vpack.c.b16 %v525, %v524
        %v539 = vpack.c.b16 %v527, %v526
        %v540 = vpack.c.b16 %v529, %v528
        %v541 = vpack.c.b16 %v531, %v530
        %v542 = vpack.c.b16 %v533, %v532
        %v543 = vpack.c.b16 %v535, %v534
        %552 = vmatprep.subr.bf16.mxu0 0
        %553 = vmatpush1.bf16.msra.mxu0 %v543
        %554 = vmatprep.subr.bf16.mxu0 0
        %555 = vmatpush1.bf16.msra.mxu0 %v542
        %556 = vmatprep.subr.bf16.mxu0 0
        %557 = vmatpush1.bf16.msra.mxu0 %v541
        %558 = vmatprep.subr.bf16.mxu0 0
        %559 = vmatpush1.bf16.msra.mxu0 %v540
        %560 = vmatprep.subr.bf16.mxu0 0
        %561 = vmatpush1.bf16.msra.mxu0 %v539
        %562 = vmatprep.subr.bf16.mxu0 0
        %563 = vmatpush1.bf16.msra.mxu0 %v538
        %564 = vmatprep.subr.bf16.mxu0 0
        %565 = vmatpush1.bf16.msra.mxu0 %v537
        %566 = vmatprep.subr.bf16.mxu0 0
        %567 = vmatpush1.bf16.msra.mxu0 %v536
        %568 = vmatprep.subr.bf16.mxu0 0
        %569 = vmatpush2.bf16.msra.mxu0 0
        %570 = vmatprep.subr.bf16.mxu0 0
        %571 = vmatpush2.bf16.msra.mxu0 0
        %572 = vmatprep.subr.bf16.mxu0 0
        %573 = vmatpush2.bf16.msra.mxu0 0
        %574 = vmatprep.subr.bf16.mxu0 0
        %575 = vmatpush2.bf16.msra.mxu0 0
        %576 = vmatprep.subr.bf16.mxu0 0
        %577 = vmatpush2.bf16.msra.mxu0 0
        %578 = vmatprep.subr.bf16.mxu0 0
        %579 = vmatpush2.bf16.msra.mxu0 0
        %580 = vmatprep.subr.bf16.mxu0 0
        %581 = vmatpush2.bf16.msra.mxu0 0
        %582 = vmatprep.subr.bf16.mxu0 0
        %583 = vmatpush2.bf16.msra.mxu0 0
        %584 = vmatprep.mubr.bf16.mxu0 0
        %585 = vmatmul.mubr.bf16.gmra.mxu0 %v488
        %v586 = vpop.f32.mrf.mxu0
        %v587 = vadd.f32 0.0, %v586
        %v588 = vpop.f32.mrf.mxu0
        %v589 = vpop.f32.mrf.mxu0
        %v590 = vadd.f32 0.0, %v589
        %v591 = vpop.f32.mrf.mxu0
        %592 = vmatprep.mubr.bf16.mxu0 0
        %593 = vmatmul.mubr.bf16.gmra.mxu0 %v489
        %v594 = vpop.f32.mrf.mxu0
        %v595 = vadd.f32 0.0, %v594
        %v596 = vpop.f32.mrf.mxu0
        %v597 = vpop.f32.mrf.mxu0
        %v598 = vadd.f32 0.0, %v597
        %v599 = vpop.f32.mrf.mxu0
        %600 = vmatprep.mubr.bf16.mxu0 0
        %601 = vmatmul.mubr.bf16.gmra.mxu0 %v490
        %v602 = vpop.f32.mrf.mxu0
        %v603 = vadd.f32 0.0, %v602
        %v604 = vpop.f32.mrf.mxu0
        %v605 = vpop.f32.mrf.mxu0
        %v606 = vadd.f32 0.0, %v605
        %v607 = vpop.f32.mrf.mxu0
        %608 = vmatprep.mubr.bf16.mxu0 0
        %609 = vmatmul.mubr.bf16.gmra.mxu0 %v491
        %v610 = vpop.f32.mrf.mxu0
        %v611 = vadd.f32 0.0, %v610
        %v612 = vpop.f32.mrf.mxu0
        %v613 = vpop.f32.mrf.mxu0
        %v614 = vadd.f32 0.0, %v613
        %v615 = vpop.f32.mrf.mxu0
        %616 = vmatprep.mubr.bf16.mxu0 0
        %617 = vmatmul.mubr.bf16.gmra.mxu0 %v492
        %v618 = vpop.f32.mrf.mxu0
        %v619 = vadd.f32 0.0, %v618
        %v620 = vpop.f32.mrf.mxu0
        %v621 = vpop.f32.mrf.mxu0
        %v622 = vadd.f32 0.0, %v621
        %v623 = vpop.f32.mrf.mxu0
        %624 = vmatprep.mubr.bf16.mxu0 0
        %625 = vmatmul.mubr.bf16.gmra.mxu0 %v493
        %v626 = vpop.f32.mrf.mxu0
        %v627 = vadd.f32 0.0, %v626
        %v628 = vpop.f32.mrf.mxu0
        %v629 = vpop.f32.mrf.mxu0
        %v630 = vadd.f32 0.0, %v629
        %v631 = vpop.f32.mrf.mxu0
        %632 = vmatprep.mubr.bf16.mxu0 0
        %633 = vmatmul.mubr.bf16.gmra.mxu0 %v494
        %v634 = vpop.f32.mrf.mxu0
        %v635 = vadd.f32 0.0, %v634
        %v636 = vpop.f32.mrf.mxu0
        %v637 = vpop.f32.mrf.mxu0
        %v638 = vadd.f32 0.0, %v637
        %v639 = vpop.f32.mrf.mxu0
        %640 = vmatprep.mubr.bf16.mxu0 0
        %641 = vmatmul.mubr.bf16.gmra.mxu0 %v495
        %v642 = vpop.f32.mrf.mxu0
        %v643 = vadd.f32 0.0, %v642
        %v644 = vpop.f32.mrf.mxu0
        %v645 = vpop.f32.mrf.mxu0
        %v646 = vadd.f32 0.0, %v645
        %v647 = vpop.f32.mrf.mxu0
        %648 = vmatprep.mubr.bf16.mxu0 0
        %649 = vmatmul.mubr.bf16.gmra.mxu0 %v496
        %v650 = vpop.f32.mrf.mxu0
        %v651 = vadd.f32 0.0, %v650
        %v652 = vpop.f32.mrf.mxu0
        %v653 = vpop.f32.mrf.mxu0
        %v654 = vadd.f32 0.0, %v653
        %v655 = vpop.f32.mrf.mxu0
        %656 = vmatprep.mubr.bf16.mxu0 0
        %657 = vmatmul.mubr.bf16.gmra.mxu0 %v497
        %v658 = vpop.f32.mrf.mxu0
        %v659 = vadd.f32 0.0, %v658
        %v660 = vpop.f32.mrf.mxu0
        %v661 = vpop.f32.mrf.mxu0
        %v662 = vadd.f32 0.0, %v661
        %v663 = vpop.f32.mrf.mxu0
        %664 = vmatprep.mubr.bf16.mxu0 0
        %665 = vmatmul.mubr.bf16.gmra.mxu0 %v498
        %v666 = vpop.f32.mrf.mxu0
        %v667 = vadd.f32 0.0, %v666
        %v668 = vpop.f32.mrf.mxu0
        %v669 = vpop.f32.mrf.mxu0
        %v670 = vadd.f32 0.0, %v669
        %v671 = vpop.f32.mrf.mxu0
        %672 = vmatprep.mubr.bf16.mxu0 0
        %673 = vmatmul.mubr.bf16.gmra.mxu0 %v499
        %v674 = vpop.f32.mrf.mxu0
        %v675 = vadd.f32 0.0, %v674
        %v676 = vpop.f32.mrf.mxu0
        %v677 = vpop.f32.mrf.mxu0
        %v678 = vadd.f32 0.0, %v677
        %v679 = vpop.f32.mrf.mxu0
        %680 = vmatprep.mubr.bf16.mxu0 0
        %681 = vmatmul.mubr.bf16.gmra.mxu0 %v500
        %v682 = vpop.f32.mrf.mxu0
        %v683 = vadd.f32 0.0, %v682
        %v684 = vpop.f32.mrf.mxu0
        %v685 = vpop.f32.mrf.mxu0
        %v686 = vadd.f32 0.0, %v685
        %v687 = vpop.f32.mrf.mxu0
        %688 = vmatprep.mubr.bf16.mxu0 0
        %689 = vmatmul.mubr.bf16.gmra.mxu0 %v501
        %v690 = vpop.f32.mrf.mxu0
        %v691 = vadd.f32 0.0, %v690
        %v692 = vpop.f32.mrf.mxu0
        %v693 = vpop.f32.mrf.mxu0
        %v694 = vadd.f32 0.0, %v693
        %v695 = vpop.f32.mrf.mxu0
        %696 = vmatprep.mubr.bf16.mxu0 0
        %697 = vmatmul.mubr.bf16.gmra.mxu0 %v502
        %v698 = vpop.f32.mrf.mxu0
        %v699 = vadd.f32 0.0, %v698
        %v700 = vpop.f32.mrf.mxu0
        %v701 = vpop.f32.mrf.mxu0
        %v702 = vadd.f32 0.0, %v701
        %v703 = vpop.f32.mrf.mxu0
        %704 = vmatprep.mubr.bf16.mxu0 0
        %705 = vmatmul.mubr.bf16.gmra.mxu0 %v503
        %v706 = vpop.f32.mrf.mxu0
        %v707 = vadd.f32 0.0, %v706
        %v708 = vpop.f32.mrf.mxu0
        %v709 = vpop.f32.mrf.mxu0
        %v710 = vadd.f32 0.0, %v709
        %v711 = vpop.f32.mrf.mxu0
        %712 = vdwg.mxu0
        %v713 = vld [vmem:[%s5] sm:$0x1]
        %v715 = vlaneseq
        %v716 = vshrl.u32 %v715, 7
        %v717 = vsub.s32 0, %v716
        %v718 = vrot.slane %v713, %v717
        %v720 = vmul.f32 %v587, %v718
        %v721 = vmul.f32 %v590, %v718
        %v722 = vmul.f32 %v595, %v718
        %v723 = vmul.f32 %v598, %v718
        %v724 = vmul.f32 %v603, %v718
        %v725 = vmul.f32 %v606, %v718
        %v726 = vmul.f32 %v611, %v718
        %v727 = vmul.f32 %v614, %v718
        %v728 = vmul.f32 %v619, %v718
        %v729 = vmul.f32 %v622, %v718
        %v730 = vmul.f32 %v627, %v718
        %v731 = vmul.f32 %v630, %v718
        %v732 = vmul.f32 %v635, %v718
        %v733 = vmul.f32 %v638, %v718
        %v734 = vmul.f32 %v643, %v718
        %v735 = vmul.f32 %v646, %v718
        %v736 = vmul.f32 %v651, %v718
        %v737 = vmul.f32 %v654, %v718
        %v738 = vmul.f32 %v659, %v718
        %v739 = vmul.f32 %v662, %v718
        %v740 = vmul.f32 %v667, %v718
        %v741 = vmul.f32 %v670, %v718
        %v742 = vmul.f32 %v675, %v718
        %v743 = vmul.f32 %v678, %v718
        %v744 = vmul.f32 %v683, %v718
        %v745 = vmul.f32 %v686, %v718
        %v746 = vmul.f32 %v691, %v718
        %v747 = vmul.f32 %v694, %v718
        %v748 = vmul.f32 %v699, %v718
        %v749 = vmul.f32 %v702, %v718
        %v750 = vmul.f32 %v707, %v718
        %v751 = vmul.f32 %v710, %v718
        %v752 = vld [vmem:[%s6] sm:$0x1]
        %v754 = vlaneseq
        %v755 = vshrl.u32 %v754, 7
        %v756 = vsub.s32 0, %v755
        %v757 = vrot.slane %v752, %v756
        %v759 = vadd.f32 %v720, %v757
        %v760 = vadd.f32 %v721, %v757
        %v761 = vadd.f32 %v722, %v757
        %v762 = vadd.f32 %v723, %v757
        %v763 = vadd.f32 %v724, %v757
        %v764 = vadd.f32 %v725, %v757
        %v765 = vadd.f32 %v726, %v757
        %v766 = vadd.f32 %v727, %v757
        %v767 = vadd.f32 %v728, %v757
        %v768 = vadd.f32 %v729, %v757
        %v769 = vadd.f32 %v730, %v757
        %v770 = vadd.f32 %v731, %v757
        %v771 = vadd.f32 %v732, %v757
        %v772 = vadd.f32 %v733, %v757
        %v773 = vadd.f32 %v734, %v757
        %v774 = vadd.f32 %v735, %v757
        %v775 = vadd.f32 %v736, %v757
        %v776 = vadd.f32 %v737, %v757
        %v777 = vadd.f32 %v738, %v757
        %v778 = vadd.f32 %v739, %v757
        %v779 = vadd.f32 %v740, %v757
        %v780 = vadd.f32 %v741, %v757
        %v781 = vadd.f32 %v742, %v757
        %v782 = vadd.f32 %v743, %v757
        %v783 = vadd.f32 %v744, %v757
        %v784 = vadd.f32 %v745, %v757
        %v785 = vadd.f32 %v746, %v757
        %v786 = vadd.f32 %v747, %v757
        %v787 = vadd.f32 %v748, %v757
        %v788 = vadd.f32 %v749, %v757
        %v789 = vadd.f32 %v750, %v757
        %v790 = vadd.f32 %v751, %v757
        %v791 = vmax.f32 %v759, 0.0
        %v792 = vmax.f32 %v760, 0.0
        %v793 = vmax.f32 %v761, 0.0
        %v794 = vmax.f32 %v762, 0.0
        %v795 = vmax.f32 %v763, 0.0
        %v796 = vmax.f32 %v764, 0.0
        %v797 = vmax.f32 %v765, 0.0
        %v798 = vmax.f32 %v766, 0.0
        %v799 = vmax.f32 %v767, 0.0
        %v800 = vmax.f32 %v768, 0.0
        %v801 = vmax.f32 %v769, 0.0
        %v802 = vmax.f32 %v770, 0.0
        %v803 = vmax.f32 %v771, 0.0
        %v804 = vmax.f32 %v772, 0.0
        %v805 = vmax.f32 %v773, 0.0
        %v806 = vmax.f32 %v774, 0.0
        %v807 = vmax.f32 %v775, 0.0
        %v808 = vmax.f32 %v776, 0.0
        %v809 = vmax.f32 %v777, 0.0
        %v810 = vmax.f32 %v778, 0.0
        %v811 = vmax.f32 %v779, 0.0
        %v812 = vmax.f32 %v780, 0.0
        %v813 = vmax.f32 %v781, 0.0
        %v814 = vmax.f32 %v782, 0.0
        %v815 = vmax.f32 %v783, 0.0
        %v816 = vmax.f32 %v784, 0.0
        %v817 = vmax.f32 %v785, 0.0
        %v818 = vmax.f32 %v786, 0.0
        %v819 = vmax.f32 %v787, 0.0
        %v820 = vmax.f32 %v788, 0.0
        %v821 = vmax.f32 %v789, 0.0
        %v822 = vmax.f32 %v790, 0.0
        %vm823 = vcmask 261120
        %824 = vst.msk [vmem:[#allocation2] sm:$0xff] %vm823, 0.0
        %825 = vst.msk [vmem:[#allocation2 + $0x8] sm:$0xff] %vm823, 0.0
        %vm826 = vcmask 253952
        %827 = vst.msk [vmem:[#allocation2 + $0x10] sm:$0x1] %vm826, 0.0
        %828 = vst.msk [vmem:[#allocation2 + $0x18] sm:$0xff] %vm823, 0.0
        %829 = vst.msk [vmem:[#allocation2 + $0x20] sm:$0xff] %vm823, 0.0
        %830 = vst.msk [vmem:[#allocation2 + $0x28] sm:$0x1] %vm826, 0.0
        %831 = vst.msk [vmem:[#allocation2 + $0x30] sm:$0xff] %vm823, 0.0
        %832 = vst.msk [vmem:[#allocation2 + $0x38] sm:$0xff] %vm823, 0.0
        %833 = vst.msk [vmem:[#allocation2 + $0x40] sm:$0x1] %vm826, 0.0
        %834 = vst.msk [vmem:[#allocation2 + $0x48] sm:$0xff] %vm823, 0.0
        %835 = vst.msk [vmem:[#allocation2 + $0x50] sm:$0xff] %vm823, 0.0
        %836 = vst.msk [vmem:[#allocation2 + $0x58] sm:$0x1] %vm826, 0.0
        %837 = vst.msk [vmem:[#allocation2 + $0x60] sm:$0xff] %vm823, 0.0
        %838 = vst.msk [vmem:[#allocation2 + $0x68] sm:$0xff] %vm823, 0.0
        %839 = vst.msk [vmem:[#allocation2 + $0x70] sm:$0x1] %vm826, 0.0
        %840 = vst.msk [vmem:[#allocation2 + $0x78] sm:$0xff] %vm823, 0.0
        %841 = vst.msk [vmem:[#allocation2 + $0x80] sm:$0xff] %vm823, 0.0
        %842 = vst.msk [vmem:[#allocation2 + $0x88] sm:$0x1] %vm826, 0.0
        %843 = vst.msk [vmem:[#allocation2 + $0x90] sm:$0xff] %vm823, 0.0
        %844 = vst.msk [vmem:[#allocation2 + $0x98] sm:$0xff] %vm823, 0.0
        %845 = vst.msk [vmem:[#allocation2 + $0xa0] sm:$0x1] %vm826, 0.0
        %846 = vst.msk [vmem:[#allocation2 + $0xa8] sm:$0xff] %vm823, 0.0
        %847 = vst.msk [vmem:[#allocation2 + $0xb0] sm:$0xff] %vm823, 0.0
        %848 = vst.msk [vmem:[#allocation2 + $0xb8] sm:$0x1] %vm826, 0.0
        %849 = vst.msk [vmem:[#allocation2 + $0xc0] sm:$0xff] %vm823, 0.0
        %850 = vst.msk [vmem:[#allocation2 + $0xc8] sm:$0xff] %vm823, 0.0
        %851 = vst.msk [vmem:[#allocation2 + $0xd0] sm:$0x1] %vm826, 0.0
        %852 = vst.msk [vmem:[#allocation2 + $0xd8] sm:$0xff] %vm823, 0.0
        %853 = vst.msk [vmem:[#allocation2 + $0xe0] sm:$0xff] %vm823, 0.0
        %854 = vst.msk [vmem:[#allocation2 + $0xe8] sm:$0x1] %vm826, 0.0
        %855 = vst.msk [vmem:[#allocation2 + $0xf0] sm:$0xff] %vm823, 0.0
        %856 = vst.msk [vmem:[#allocation2 + $0xf8] sm:$0xff] %vm823, 0.0
        %857 = vst.msk [vmem:[#allocation2 + $0x100] sm:$0x1] %vm826, 0.0
        %858 = vst.msk [vmem:[#allocation2 + $0x108] sm:$0xff] %vm823, 0.0
        %859 = vst.msk [vmem:[#allocation2 + $0x110] sm:$0xff] %vm823, 0.0
        %860 = vst.msk [vmem:[#allocation2 + $0x118] sm:$0x1] %vm826, 0.0
        %861 = vst.msk [vmem:[#allocation2 + $0x120] sm:$0xff] %vm823, 0.0
        %862 = vst.msk [vmem:[#allocation2 + $0x128] sm:$0xff] %vm823, 0.0
        %863 = vst.msk [vmem:[#allocation2 + $0x130] sm:$0x1] %vm826, 0.0
        %864 = vst.msk [vmem:[#allocation2 + $0x138] sm:$0xff] %vm823, 0.0
        %865 = vst.msk [vmem:[#allocation2 + $0x140] sm:$0xff] %vm823, 0.0
        %866 = vst.msk [vmem:[#allocation2 + $0x148] sm:$0x1] %vm826, 0.0
        %867 = vst.msk [vmem:[#allocation2 + $0x150] sm:$0xff] %vm823, 0.0
        %868 = vst.msk [vmem:[#allocation2 + $0x158] sm:$0xff] %vm823, 0.0
        %869 = vst.msk [vmem:[#allocation2 + $0x160] sm:$0x1] %vm826, 0.0
        %870 = vst.msk [vmem:[#allocation2 + $0x168] sm:$0xff] %vm823, 0.0
        %871 = vst.msk [vmem:[#allocation2 + $0x170] sm:$0xff] %vm823, 0.0
        %872 = vst.msk [vmem:[#allocation2 + $0x178] sm:$0x1] %vm826, 0.0
        %873 = vst.msk [vmem:[#allocation2 + $0x180] sm:$0xff] %vm823, 0.0
        %874 = vst.msk [vmem:[#allocation2 + $0x188] sm:$0xff] %vm823, 0.0
        %875 = vst.msk [vmem:[#allocation2 + $0x190] sm:$0x1] %vm826, 0.0
        %876 = vst.msk [vmem:[#allocation2 + $0x198] sm:$0xff] %vm823, 0.0
        %877 = vst.msk [vmem:[#allocation2 + $0x1a0] sm:$0xff] %vm823, 0.0
        %878 = vst.msk [vmem:[#allocation2 + $0x1a8] sm:$0x1] %vm826, 0.0
        %879 = vst.msk [vmem:[#allocation2 + $0x1b0] sm:$0xff] %vm823, 0.0
        %880 = vst.msk [vmem:[#allocation2 + $0x1b8] sm:$0xff] %vm823, 0.0
        %881 = vst.msk [vmem:[#allocation2 + $0x1c0] sm:$0x1] %vm826, 0.0
        %882 = vst.msk [vmem:[#allocation2 + $0x1c8] sm:$0xff] %vm823, 0.0
        %883 = vst.msk [vmem:[#allocation2 + $0x1d0] sm:$0xff] %vm823, 0.0
        %884 = vst.msk [vmem:[#allocation2 + $0x1d8] sm:$0x1] %vm826, 0.0
        %885 = vst.msk [vmem:[#allocation2 + $0x1e0] sm:$0xff] %vm823, 0.0
        %886 = vst.msk [vmem:[#allocation2 + $0x1e8] sm:$0xff] %vm823, 0.0
        %887 = vst.msk [vmem:[#allocation2 + $0x1f0] sm:$0x1] %vm826, 0.0
        %888 = vst.msk [vmem:[#allocation2 + $0x1f8] sm:$0xff] %vm823, 0.0
        %889 = vst.msk [vmem:[#allocation2 + $0x200] sm:$0xff] %vm823, 0.0
        %890 = vst.msk [vmem:[#allocation2 + $0x208] sm:$0x1] %vm826, 0.0
        %891 = vst.msk [vmem:[#allocation2 + $0x210] sm:$0xff] %vm823, 0.0
        %892 = vst.msk [vmem:[#allocation2 + $0x218] sm:$0xff] %vm823, 0.0
        %893 = vst.msk [vmem:[#allocation2 + $0x220] sm:$0x1] %vm826, 0.0
        %894 = vst.msk [vmem:[#allocation2 + $0x228] sm:$0xff] %vm823, 0.0
        %895 = vst.msk [vmem:[#allocation2 + $0x230] sm:$0xff] %vm823, 0.0
        %896 = vst.msk [vmem:[#allocation2 + $0x238] sm:$0x1] %vm826, 0.0
        %897 = vst.msk [vmem:[#allocation2 + $0x240] sm:$0xff] %vm823, 0.0
        %898 = vst.msk [vmem:[#allocation2 + $0x248] sm:$0xff] %vm823, 0.0
        %899 = vst.msk [vmem:[#allocation2 + $0x250] sm:$0x1] %vm826, 0.0
        %900 = vst.msk [vmem:[#allocation2 + $0x258] sm:$0xff] %vm823, 0.0
        %901 = vst.msk [vmem:[#allocation2 + $0x260] sm:$0xff] %vm823, 0.0
        %902 = vst.msk [vmem:[#allocation2 + $0x268] sm:$0x1] %vm826, 0.0
        %903 = vst.msk [vmem:[#allocation2 + $0x270] sm:$0xff] %vm823, 0.0
        %904 = vst.msk [vmem:[#allocation2 + $0x278] sm:$0xff] %vm823, 0.0
        %905 = vst.msk [vmem:[#allocation2 + $0x280] sm:$0x1] %vm826, 0.0
        %906 = vst.msk [vmem:[#allocation2 + $0x288] sm:$0xff] %vm823, 0.0
        %907 = vst.msk [vmem:[#allocation2 + $0x290] sm:$0xff] %vm823, 0.0
        %908 = vst.msk [vmem:[#allocation2 + $0x298] sm:$0x1] %vm826, 0.0
        %909 = vst.msk [vmem:[#allocation2 + $0x2a0] sm:$0xff] %vm823, 0.0
        %910 = vst.msk [vmem:[#allocation2 + $0x2a8] sm:$0xff] %vm823, 0.0
        %911 = vst.msk [vmem:[#allocation2 + $0x2b0] sm:$0x1] %vm826, 0.0
        %912 = vst.msk [vmem:[#allocation2 + $0x2b8] sm:$0xff] %vm823, 0.0
        %913 = vst.msk [vmem:[#allocation2 + $0x2c0] sm:$0xff] %vm823, 0.0
        %914 = vst.msk [vmem:[#allocation2 + $0x2c8] sm:$0x1] %vm826, 0.0
        %915 = vst.msk [vmem:[#allocation2 + $0x2d0] sm:$0xff] %vm823, 0.0
        %916 = vst.msk [vmem:[#allocation2 + $0x2d8] sm:$0xff] %vm823, 0.0
        %917 = vst.msk [vmem:[#allocation2 + $0x2e0] sm:$0x1] %vm826, 0.0
        %918 = vst.msk [vmem:[#allocation2 + $0x2e8] sm:$0xff] %vm823, 0.0
        %919 = vst.msk [vmem:[#allocation2 + $0x2f0] sm:$0xff] %vm823, 0.0
        %920 = vst.msk [vmem:[#allocation2 + $0x2f8] sm:$0x1] %vm826, 0.0
        %921 = vst.msk [vmem:[#allocation2 + $0x300] sm:$0xff] %vm823, 0.0
        %922 = vst.msk [vmem:[#allocation2 + $0x308] sm:$0xff] %vm823, 0.0
        %923 = vst.msk [vmem:[#allocation2 + $0x310] sm:$0x1] %vm826, 0.0
        %924 = vst.msk [vmem:[#allocation2 + $0x318] sm:$0xff] %vm823, 0.0
        %925 = vst.msk [vmem:[#allocation2 + $0x320] sm:$0xff] %vm823, 0.0
        %926 = vst.msk [vmem:[#allocation2 + $0x328] sm:$0x1] %vm826, 0.0
        %927 = vst.msk [vmem:[#allocation2 + $0x330] sm:$0xff] %vm823, 0.0
        %928 = vst.msk [vmem:[#allocation2 + $0x338] sm:$0xff] %vm823, 0.0
        %929 = vst.msk [vmem:[#allocation2 + $0x340] sm:$0x1] %vm826, 0.0
        %930 = vst.msk [vmem:[#allocation2 + $0x348] sm:$0xff] %vm823, 0.0
        %931 = vst.msk [vmem:[#allocation2 + $0x350] sm:$0xff] %vm823, 0.0
        %932 = vst.msk [vmem:[#allocation2 + $0x358] sm:$0x1] %vm826, 0.0
        %933 = vst.msk [vmem:[#allocation2 + $0x360] sm:$0xff] %vm823, 0.0
        %934 = vst.msk [vmem:[#allocation2 + $0x368] sm:$0xff] %vm823, 0.0
        %935 = vst.msk [vmem:[#allocation2 + $0x370] sm:$0x1] %vm826, 0.0
        %936 = vst.msk [vmem:[#allocation2 + $0x378] sm:$0xff] %vm823, 0.0
        %937 = vst.msk [vmem:[#allocation2 + $0x380] sm:$0xff] %vm823, 0.0
        %938 = vst.msk [vmem:[#allocation2 + $0x388] sm:$0x1] %vm826, 0.0
        %939 = vst.msk [vmem:[#allocation2 + $0x390] sm:$0xff] %vm823, 0.0
        %940 = vst.msk [vmem:[#allocation2 + $0x398] sm:$0xff] %vm823, 0.0
        %941 = vst.msk [vmem:[#allocation2 + $0x3a0] sm:$0x1] %vm826, 0.0
        %942 = vst.msk [vmem:[#allocation2 + $0x3a8] sm:$0xff] %vm823, 0.0
        %943 = vst.msk [vmem:[#allocation2 + $0x3b0] sm:$0xff] %vm823, 0.0
        %944 = vst.msk [vmem:[#allocation2 + $0x3b8] sm:$0x1] %vm826, 0.0
        %s945 = scalar_lea.vmem [#allocation2], 24
        %946 = vst.msk [vmem:[%s945 + $0x8] sm:$0xff] %vm823, %v791
        %947 = vst.msk [vmem:[%s945 + $0x20] sm:$0xff] %vm823, %v792
        %948 = vst.msk [vmem:[%s945 + $0x38] sm:$0xff] %vm823, %v793
        %949 = vst.msk [vmem:[%s945 + $0x50] sm:$0xff] %vm823, %v794
        %950 = vst.msk [vmem:[%s945 + $0x68] sm:$0xff] %vm823, %v795
        %951 = vst.msk [vmem:[%s945 + $0x80] sm:$0xff] %vm823, %v796
        %952 = vst.msk [vmem:[%s945 + $0x98] sm:$0xff] %vm823, %v797
        %953 = vst.msk [vmem:[%s945 + $0xb0] sm:$0xff] %vm823, %v798
        %954 = vst.msk [vmem:[%s945 + $0xf8] sm:$0xff] %vm823, %v799
        %955 = vst.msk [vmem:[%s945 + $0x110] sm:$0xff] %vm823, %v800
        %956 = vst.msk [vmem:[%s945 + $0x128] sm:$0xff] %vm823, %v801
        %957 = vst.msk [vmem:[%s945 + $0x140] sm:$0xff] %vm823, %v802
        %958 = vst.msk [vmem:[%s945 + $0x158] sm:$0xff] %vm823, %v803
        %959 = vst.msk [vmem:[%s945 + $0x170] sm:$0xff] %vm823, %v804
        %960 = vst.msk [vmem:[%s945 + $0x188] sm:$0xff] %vm823, %v805
        %961 = vst.msk [vmem:[%s945 + $0x1a0] sm:$0xff] %vm823, %v806
        %962 = vst.msk [vmem:[%s945 + $0x1e8] sm:$0xff] %vm823, %v807
        %963 = vst.msk [vmem:[%s945 + $0x200] sm:$0xff] %vm823, %v808
        %964 = vst.msk [vmem:[%s945 + $0x218] sm:$0xff] %vm823, %v809
        %965 = vst.msk [vmem:[%s945 + $0x230] sm:$0xff] %vm823, %v810
        %966 = vst.msk [vmem:[%s945 + $0x248] sm:$0xff] %vm823, %v811
        %967 = vst.msk [vmem:[%s945 + $0x260] sm:$0xff] %vm823, %v812
        %968 = vst.msk [vmem:[%s945 + $0x278] sm:$0xff] %vm823, %v813
        %969 = vst.msk [vmem:[%s945 + $0x290] sm:$0xff] %vm823, %v814
        %970 = vst.msk [vmem:[%s945 + $0x2d8] sm:$0xff] %vm823, %v815
        %971 = vst.msk [vmem:[%s945 + $0x2f0] sm:$0xff] %vm823, %v816
        %972 = vst.msk [vmem:[%s945 + $0x308] sm:$0xff] %vm823, %v817
        %973 = vst.msk [vmem:[%s945 + $0x320] sm:$0xff] %vm823, %v818
        %974 = vst.msk [vmem:[%s945 + $0x338] sm:$0xff] %vm823, %v819
        %975 = vst.msk [vmem:[%s945 + $0x350] sm:$0xff] %vm823, %v820
        %976 = vst.msk [vmem:[%s945 + $0x368] sm:$0xff] %vm823, %v821
        %977 = vst.msk [vmem:[%s945 + $0x380] sm:$0xff] %vm823, %v822
        %v978 = vld [vmem:[#allocation2 + $0x7] sm:$0xff]
        %v979 = vld [vmem:[#allocation2 + $0x1f] sm:$0xff]
        %v980 = vld [vmem:[#allocation2 + $0x37] sm:$0xff]
        %v981 = vld [vmem:[#allocation2 + $0x4f] sm:$0xff]
        %v982 = vld [vmem:[#allocation2 + $0x67] sm:$0xff]
        %v983 = vld [vmem:[#allocation2 + $0x7f] sm:$0xff]
        %v984 = vld [vmem:[#allocation2 + $0x97] sm:$0xff]
        %v985 = vld [vmem:[#allocation2 + $0xaf] sm:$0xff]
        %v986 = vld [vmem:[#allocation2 + $0xf7] sm:$0xff]
        %v987 = vld [vmem:[#allocation2 + $0x10f] sm:$0xff]
        %v988 = vld [vmem:[#allocation2 + $0x127] sm:$0xff]
        %v989 = vld [vmem:[#allocation2 + $0x13f] sm:$0xff]
        %v990 = vld [vmem:[#allocation2 + $0x157] sm:$0xff]
        %v991 = vld [vmem:[#allocation2 + $0x16f] sm:$0xff]
        %v992 = vld [vmem:[#allocation2 + $0x187] sm:$0xff]
        %v993 = vld [vmem:[#allocation2 + $0x19f] sm:$0xff]
        %v994 = vld [vmem:[#allocation2 + $0x1e7] sm:$0xff]
        %v995 = vld [vmem:[#allocation2 + $0x1ff] sm:$0xff]
        %v996 = vld [vmem:[#allocation2 + $0x217] sm:$0xff]
        %v997 = vld [vmem:[#allocation2 + $0x22f] sm:$0xff]
        %v998 = vld [vmem:[#allocation2 + $0x247] sm:$0xff]
        %v999 = vld [vmem:[#allocation2 + $0x25f] sm:$0xff]
        %v1000 = vld [vmem:[#allocation2 + $0x277] sm:$0xff]
        %v1001 = vld [vmem:[#allocation2 + $0x28f] sm:$0xff]
        %v1002 = vld [vmem:[#allocation2 + $0x2d7] sm:$0xff]
        %v1003 = vld [vmem:[#allocation2 + $0x2ef] sm:$0xff]
        %v1004 = vld [vmem:[#allocation2 + $0x307] sm:$0xff]
        %v1005 = vld [vmem:[#allocation2 + $0x31f] sm:$0xff]
        %v1006 = vld [vmem:[#allocation2 + $0x337] sm:$0xff]
        %v1007 = vld [vmem:[#allocation2 + $0x34f] sm:$0xff]
        %v1008 = vld [vmem:[#allocation2 + $0x367] sm:$0xff]
        %v1009 = vld [vmem:[#allocation2 + $0x37f] sm:$0xff]
        %v1010 = vld [vmem:[%s2] sm:$0xf]
        %v1011 = vld [vmem:[%s2 + $0x4] sm:$0xf]
        %v1012 = vld [vmem:[%s2 + $0x8] sm:$0xf]
        %v1013 = vld [vmem:[%s2 + $0xc] sm:$0xf]
        %v1014 = vpack.c.bf16 %v979, %v978
        %v1015 = vpack.c.bf16 %v981, %v980
        %v1016 = vpack.c.bf16 %v983, %v982
        %v1017 = vpack.c.bf16 %v985, %v984
        %v1018 = vpack.c.bf16 %v987, %v986
        %v1019 = vpack.c.bf16 %v989, %v988
        %v1020 = vpack.c.bf16 %v991, %v990
        %v1021 = vpack.c.bf16 %v993, %v992
        %v1022 = vpack.c.bf16 %v995, %v994
        %v1023 = vpack.c.bf16 %v997, %v996
        %v1024 = vpack.c.bf16 %v999, %v998
        %v1025 = vpack.c.bf16 %v1001, %v1000
        %v1026 = vpack.c.bf16 %v1003, %v1002
        %v1027 = vpack.c.bf16 %v1005, %v1004
        %v1028 = vpack.c.bf16 %v1007, %v1006
        %v1029 = vpack.c.bf16 %v1009, %v1008
        %v1030 = vld [vmem:[#allocation2 + $0x8] sm:$0xff]
        %v1031 = vld [vmem:[#allocation2 + $0x20] sm:$0xff]
        %v1032 = vld [vmem:[#allocation2 + $0x38] sm:$0xff]
        %v1033 = vld [vmem:[#allocation2 + $0x50] sm:$0xff]
        %v1034 = vld [vmem:[#allocation2 + $0x68] sm:$0xff]
        %v1035 = vld [vmem:[#allocation2 + $0x80] sm:$0xff]
        %v1036 = vld [vmem:[#allocation2 + $0x98] sm:$0xff]
        %v1037 = vld [vmem:[#allocation2 + $0xb0] sm:$0xff]
        %v1038 = vld [vmem:[#allocation2 + $0xf8] sm:$0xff]
        %v1039 = vld [vmem:[#allocation2 + $0x110] sm:$0xff]
        %v1040 = vld [vmem:[#allocation2 + $0x128] sm:$0xff]
        %v1041 = vld [vmem:[#allocation2 + $0x140] sm:$0xff]
        %v1042 = vld [vmem:[#allocation2 + $0x158] sm:$0xff]
        %v1043 = vld [vmem:[#allocation2 + $0x170] sm:$0xff]
        %v1044 = vld [vmem:[#allocation2 + $0x188] sm:$0xff]
        %v1045 = vld [vmem:[#allocation2 + $0x1a0] sm:$0xff]
        %v1046 = vld [vmem:[#allocation2 + $0x1e8] sm:$0xff]
        %v1047 = vld [vmem:[#allocation2 + $0x200] sm:$0xff]
        %v1048 = vld [vmem:[#allocation2 + $0x218] sm:$0xff]
        %v1049 = vld [vmem:[#allocation2 + $0x230] sm:$0xff]
        %v1050 = vld [vmem:[#allocation2 + $0x248] sm:$0xff]
        %v1051 = vld [vmem:[#allocation2 + $0x260] sm:$0xff]
        %v1052 = vld [vmem:[#allocation2 + $0x278] sm:$0xff]
        %v1053 = vld [vmem:[#allocation2 + $0x290] sm:$0xff]
        %v1054 = vld [vmem:[#allocation2 + $0x2d8] sm:$0xff]
        %v1055 = vld [vmem:[#allocation2 + $0x2f0] sm:$0xff]
        %v1056 = vld [vmem:[#allocation2 + $0x308] sm:$0xff]
        %v1057 = vld [vmem:[#allocation2 + $0x320] sm:$0xff]
        %v1058 = vld [vmem:[#allocation2 + $0x338] sm:$0xff]
        %v1059 = vld [vmem:[#allocation2 + $0x350] sm:$0xff]
        %v1060 = vld [vmem:[#allocation2 + $0x368] sm:$0xff]
        %v1061 = vld [vmem:[#allocation2 + $0x380] sm:$0xff]
        %s1062 = scalar_lea.vmem %s2, 16
        %v1063 = vld [vmem:[%s1062] sm:$0xf]
        %v1064 = vld [vmem:[%s1062 + $0x4] sm:$0xf]
        %v1065 = vld [vmem:[%s1062 + $0x8] sm:$0xf]
        %v1066 = vld [vmem:[%s1062 + $0xc] sm:$0xf]
        %v1067 = vpack.c.bf16 %v1031, %v1030
        %v1068 = vpack.c.bf16 %v1033, %v1032
        %v1069 = vpack.c.bf16 %v1035, %v1034
        %v1070 = vpack.c.bf16 %v1037, %v1036
        %v1071 = vpack.c.bf16 %v1039, %v1038
        %v1072 = vpack.c.bf16 %v1041, %v1040
        %v1073 = vpack.c.bf16 %v1043, %v1042
        %v1074 = vpack.c.bf16 %v1045, %v1044
        %v1075 = vpack.c.bf16 %v1047, %v1046
        %v1076 = vpack.c.bf16 %v1049, %v1048
        %v1077 = vpack.c.bf16 %v1051, %v1050
        %v1078 = vpack.c.bf16 %v1053, %v1052
        %v1079 = vpack.c.bf16 %v1055, %v1054
        %v1080 = vpack.c.bf16 %v1057, %v1056
        %v1081 = vpack.c.bf16 %v1059, %v1058
        %v1082 = vpack.c.bf16 %v1061, %v1060
        %v1087 = vunpack.c.l.b16 %v1063
        %v1088 = vunpack.c.l.b16 %v1064
        %v1089 = vunpack.c.l.b16 %v1065
        %v1090 = vunpack.c.l.b16 %v1066
        %v1091 = vpack.c.b16 %v1088, %v1087
        %v1092 = vpack.c.b16 %v1090, %v1089
        %v1096 = vsel %vm823, %v1067, 0
        %v1099 = vsel %vm823, %v1068, 0
        %v1102 = vsel %vm823, %v1069, 0
        %v1105 = vsel %vm823, %v1070, 0
        %v1108 = vsel %vm823, %v1071, 0
        %v1111 = vsel %vm823, %v1072, 0
        %v1114 = vsel %vm823, %v1073, 0
        %v1117 = vsel %vm823, %v1074, 0
        %v1120 = vsel %vm823, %v1075, 0
        %v1123 = vsel %vm823, %v1076, 0
        %v1126 = vsel %vm823, %v1077, 0
        %v1129 = vsel %vm823, %v1078, 0
        %v1132 = vsel %vm823, %v1079, 0
        %v1135 = vsel %vm823, %v1080, 0
        %v1138 = vsel %vm823, %v1081, 0
        %v1141 = vsel %vm823, %v1082, 0
        %1143 = vmatprep.subr.bf16.mxu0 0
        %1144 = vmatpush1.bf16.msra.mxu0 0
        %1145 = vmatprep.subr.bf16.mxu0 0
        %1146 = vmatpush1.bf16.msra.mxu0 0
        %1147 = vmatprep.subr.bf16.mxu0 0
        %1148 = vmatpush1.bf16.msra.mxu0 0
        %1149 = vmatprep.subr.bf16.mxu0 0
        %1150 = vmatpush1.bf16.msra.mxu0 0
        %1151 = vmatprep.subr.bf16.mxu0 0
        %1152 = vmatpush1.bf16.msra.mxu0 0
        %1153 = vmatprep.subr.bf16.mxu0 0
        %1154 = vmatpush1.bf16.msra.mxu0 0
        %1155 = vmatprep.subr.bf16.mxu0 0
        %1156 = vmatpush1.bf16.msra.mxu0 %v1092
        %1157 = vmatprep.subr.bf16.mxu0 0
        %1158 = vmatpush1.bf16.msra.mxu0 %v1091
        %1159 = vmatprep.subr.bf16.mxu0 0
        %1160 = vmatpush2.bf16.msra.mxu0 0
        %1161 = vmatprep.subr.bf16.mxu0 0
        %1162 = vmatpush2.bf16.msra.mxu0 0
        %1163 = vmatprep.subr.bf16.mxu0 0
        %1164 = vmatpush2.bf16.msra.mxu0 0
        %1165 = vmatprep.subr.bf16.mxu0 0
        %1166 = vmatpush2.bf16.msra.mxu0 0
        %1167 = vmatprep.subr.bf16.mxu0 0
        %1168 = vmatpush2.bf16.msra.mxu0 0
        %1169 = vmatprep.subr.bf16.mxu0 0
        %1170 = vmatpush2.bf16.msra.mxu0 0
        %1171 = vmatprep.subr.bf16.mxu0 0
        %1172 = vmatpush2.bf16.msra.mxu0 0
        %1173 = vmatprep.subr.bf16.mxu0 0
        %1174 = vmatpush2.bf16.msra.mxu0 0
        %1175 = vmatprep.mubr.bf16.mxu0 0
        %1176 = vmatmul.mubr.bf16.gmra.mxu0 %v1096
        %v1177 = vpop.f32.mrf.mxu0
        %v1178 = vadd.f32 0.0, %v1177
        %v1179 = vpop.f32.mrf.mxu0
        %v1180 = vpop.f32.mrf.mxu0
        %v1181 = vadd.f32 0.0, %v1180
        %v1182 = vpop.f32.mrf.mxu0
        %1183 = vmatprep.mubr.bf16.mxu0 0
        %1184 = vmatmul.mubr.bf16.gmra.mxu0 %v1099
        %v1185 = vpop.f32.mrf.mxu0
        %v1186 = vadd.f32 0.0, %v1185
        %v1187 = vpop.f32.mrf.mxu0
        %v1188 = vpop.f32.mrf.mxu0
        %v1189 = vadd.f32 0.0, %v1188
        %v1190 = vpop.f32.mrf.mxu0
        %1191 = vmatprep.mubr.bf16.mxu0 0
        %1192 = vmatmul.mubr.bf16.gmra.mxu0 %v1102
        %v1193 = vpop.f32.mrf.mxu0
        %v1194 = vadd.f32 0.0, %v1193
        %v1195 = vpop.f32.mrf.mxu0
        %v1196 = vpop.f32.mrf.mxu0
        %v1197 = vadd.f32 0.0, %v1196
        %v1198 = vpop.f32.mrf.mxu0
        %1199 = vmatprep.mubr.bf16.mxu0 0
        %1200 = vmatmul.mubr.bf16.gmra.mxu0 %v1105
        %v1201 = vpop.f32.mrf.mxu0
        %v1202 = vadd.f32 0.0, %v1201
        %v1203 = vpop.f32.mrf.mxu0
        %v1204 = vpop.f32.mrf.mxu0
        %v1205 = vadd.f32 0.0, %v1204
        %v1206 = vpop.f32.mrf.mxu0
        %1207 = vmatprep.mubr.bf16.mxu0 0
        %1208 = vmatmul.mubr.bf16.gmra.mxu0 %v1108
        %v1209 = vpop.f32.mrf.mxu0
        %v1210 = vadd.f32 0.0, %v1209
        %v1211 = vpop.f32.mrf.mxu0
        %v1212 = vpop.f32.mrf.mxu0
        %v1213 = vadd.f32 0.0, %v1212
        %v1214 = vpop.f32.mrf.mxu0
        %1215 = vmatprep.mubr.bf16.mxu0 0
        %1216 = vmatmul.mubr.bf16.gmra.mxu0 %v1111
        %v1217 = vpop.f32.mrf.mxu0
        %v1218 = vadd.f32 0.0, %v1217
        %v1219 = vpop.f32.mrf.mxu0
        %v1220 = vpop.f32.mrf.mxu0
        %v1221 = vadd.f32 0.0, %v1220
        %v1222 = vpop.f32.mrf.mxu0
        %1223 = vmatprep.mubr.bf16.mxu0 0
        %1224 = vmatmul.mubr.bf16.gmra.mxu0 %v1114
        %v1225 = vpop.f32.mrf.mxu0
        %v1226 = vadd.f32 0.0, %v1225
        %v1227 = vpop.f32.mrf.mxu0
        %v1228 = vpop.f32.mrf.mxu0
        %v1229 = vadd.f32 0.0, %v1228
        %v1230 = vpop.f32.mrf.mxu0
        %1231 = vmatprep.mubr.bf16.mxu0 0
        %1232 = vmatmul.mubr.bf16.gmra.mxu0 %v1117
        %v1233 = vpop.f32.mrf.mxu0
        %v1234 = vadd.f32 0.0, %v1233
        %v1235 = vpop.f32.mrf.mxu0
        %v1236 = vpop.f32.mrf.mxu0
        %v1237 = vadd.f32 0.0, %v1236
        %v1238 = vpop.f32.mrf.mxu0
        %1239 = vmatprep.mubr.bf16.mxu0 0
        %1240 = vmatmul.mubr.bf16.gmra.mxu0 %v1120
        %v1241 = vpop.f32.mrf.mxu0
        %v1242 = vadd.f32 0.0, %v1241
        %v1243 = vpop.f32.mrf.mxu0
        %v1244 = vpop.f32.mrf.mxu0
        %v1245 = vadd.f32 0.0, %v1244
        %v1246 = vpop.f32.mrf.mxu0
        %1247 = vmatprep.mubr.bf16.mxu0 0
        %1248 = vmatmul.mubr.bf16.gmra.mxu0 %v1123
        %v1249 = vpop.f32.mrf.mxu0
        %v1250 = vadd.f32 0.0, %v1249
        %v1251 = vpop.f32.mrf.mxu0
        %v1252 = vpop.f32.mrf.mxu0
        %v1253 = vadd.f32 0.0, %v1252
        %v1254 = vpop.f32.mrf.mxu0
        %1255 = vmatprep.mubr.bf16.mxu0 0
        %1256 = vmatmul.mubr.bf16.gmra.mxu0 %v1126
        %v1257 = vpop.f32.mrf.mxu0
        %v1258 = vadd.f32 0.0, %v1257
        %v1259 = vpop.f32.mrf.mxu0
        %v1260 = vpop.f32.mrf.mxu0
        %v1261 = vadd.f32 0.0, %v1260
        %v1262 = vpop.f32.mrf.mxu0
        %1263 = vmatprep.mubr.bf16.mxu0 0
        %1264 = vmatmul.mubr.bf16.gmra.mxu0 %v1129
        %v1265 = vpop.f32.mrf.mxu0
        %v1266 = vadd.f32 0.0, %v1265
        %v1267 = vpop.f32.mrf.mxu0
        %v1268 = vpop.f32.mrf.mxu0
        %v1269 = vadd.f32 0.0, %v1268
        %v1270 = vpop.f32.mrf.mxu0
        %1271 = vmatprep.mubr.bf16.mxu0 0
        %1272 = vmatmul.mubr.bf16.gmra.mxu0 %v1132
        %v1273 = vpop.f32.mrf.mxu0
        %v1274 = vadd.f32 0.0, %v1273
        %v1275 = vpop.f32.mrf.mxu0
        %v1276 = vpop.f32.mrf.mxu0
        %v1277 = vadd.f32 0.0, %v1276
        %v1278 = vpop.f32.mrf.mxu0
        %1279 = vmatprep.mubr.bf16.mxu0 0
        %1280 = vmatmul.mubr.bf16.gmra.mxu0 %v1135
        %v1281 = vpop.f32.mrf.mxu0
        %v1282 = vadd.f32 0.0, %v1281
        %v1283 = vpop.f32.mrf.mxu0
        %v1284 = vpop.f32.mrf.mxu0
        %v1285 = vadd.f32 0.0, %v1284
        %v1286 = vpop.f32.mrf.mxu0
        %1287 = vmatprep.mubr.bf16.mxu0 0
        %1288 = vmatmul.mubr.bf16.gmra.mxu0 %v1138
        %v1289 = vpop.f32.mrf.mxu0
        %v1290 = vadd.f32 0.0, %v1289
        %v1291 = vpop.f32.mrf.mxu0
        %v1292 = vpop.f32.mrf.mxu0
        %v1293 = vadd.f32 0.0, %v1292
        %v1294 = vpop.f32.mrf.mxu0
        %1295 = vmatprep.mubr.bf16.mxu0 0
        %1296 = vmatmul.mubr.bf16.gmra.mxu0 %v1141
        %v1297 = vpop.f32.mrf.mxu0
        %v1298 = vadd.f32 0.0, %v1297
        %v1299 = vpop.f32.mrf.mxu0
        %v1300 = vpop.f32.mrf.mxu0
        %v1301 = vadd.f32 0.0, %v1300
        %v1302 = vpop.f32.mrf.mxu0
        %1303 = vdwg.mxu0
        %v1308 = vunpack.c.l.b16 %v1010
        %v1309 = vunpack.c.l.b16 %v1011
        %v1310 = vunpack.c.l.b16 %v1012
        %v1311 = vunpack.c.l.b16 %v1013
        %v1312 = vpack.c.b16 %v1309, %v1308
        %v1313 = vpack.c.b16 %v1311, %v1310
        %v1317 = vsel %vm823, %v1014, 0
        %v1320 = vsel %vm823, %v1015, 0
        %v1323 = vsel %vm823, %v1016, 0
        %v1326 = vsel %vm823, %v1017, 0
        %v1329 = vsel %vm823, %v1018, 0
        %v1332 = vsel %vm823, %v1019, 0
        %v1335 = vsel %vm823, %v1020, 0
        %v1338 = vsel %vm823, %v1021, 0
        %v1341 = vsel %vm823, %v1022, 0
        %v1344 = vsel %vm823, %v1023, 0
        %v1347 = vsel %vm823, %v1024, 0
        %v1350 = vsel %vm823, %v1025, 0
        %v1353 = vsel %vm823, %v1026, 0
        %v1356 = vsel %vm823, %v1027, 0
        %v1359 = vsel %vm823, %v1028, 0
        %v1362 = vsel %vm823, %v1029, 0
        %1364 = vmatprep.subr.bf16.mxu0 0
        %1365 = vmatpush1.bf16.msra.mxu0 0
        %1366 = vmatprep.subr.bf16.mxu0 0
        %1367 = vmatpush1.bf16.msra.mxu0 0
        %1368 = vmatprep.subr.bf16.mxu0 0
        %1369 = vmatpush1.bf16.msra.mxu0 0
        %1370 = vmatprep.subr.bf16.mxu0 0
        %1371 = vmatpush1.bf16.msra.mxu0 0
        %1372 = vmatprep.subr.bf16.mxu0 0
        %1373 = vmatpush1.bf16.msra.mxu0 0
        %1374 = vmatprep.subr.bf16.mxu0 0
        %1375 = vmatpush1.bf16.msra.mxu0 0
        %1376 = vmatprep.subr.bf16.mxu0 0
        %1377 = vmatpush1.bf16.msra.mxu0 %v1313
        %1378 = vmatprep.subr.bf16.mxu0 0
        %1379 = vmatpush1.bf16.msra.mxu0 %v1312
        %1380 = vmatprep.subr.bf16.mxu0 0
        %1381 = vmatpush2.bf16.msra.mxu0 0
        %1382 = vmatprep.subr.bf16.mxu0 0
        %1383 = vmatpush2.bf16.msra.mxu0 0
        %1384 = vmatprep.subr.bf16.mxu0 0
        %1385 = vmatpush2.bf16.msra.mxu0 0
        %1386 = vmatprep.subr.bf16.mxu0 0
        %1387 = vmatpush2.bf16.msra.mxu0 0
        %1388 = vmatprep.subr.bf16.mxu0 0
        %1389 = vmatpush2.bf16.msra.mxu0 0
        %1390 = vmatprep.subr.bf16.mxu0 0
        %1391 = vmatpush2.bf16.msra.mxu0 0
        %1392 = vmatprep.subr.bf16.mxu0 0
        %1393 = vmatpush2.bf16.msra.mxu0 0
        %1394 = vmatprep.subr.bf16.mxu0 0
        %1395 = vmatpush2.bf16.msra.mxu0 0
        %1396 = vmatprep.mubr.bf16.mxu0 0
        %1397 = vmatmul.mubr.bf16.gmra.mxu0 %v1317
        %v1398 = vpop.f32.mrf.mxu0
        %v1399 = vadd.f32 %v1178, %v1398
        %v1400 = vpop.f32.mrf.mxu0
        %v1401 = vpop.f32.mrf.mxu0
        %v1402 = vadd.f32 %v1181, %v1401
        %v1403 = vpop.f32.mrf.mxu0
        %1404 = vmatprep.mubr.bf16.mxu0 0
        %1405 = vmatmul.mubr.bf16.gmra.mxu0 %v1320
        %v1406 = vpop.f32.mrf.mxu0
        %v1407 = vadd.f32 %v1186, %v1406
        %v1408 = vpop.f32.mrf.mxu0
        %v1409 = vpop.f32.mrf.mxu0
        %v1410 = vadd.f32 %v1189, %v1409
        %v1411 = vpop.f32.mrf.mxu0
        %1412 = vmatprep.mubr.bf16.mxu0 0
        %1413 = vmatmul.mubr.bf16.gmra.mxu0 %v1323
        %v1414 = vpop.f32.mrf.mxu0
        %v1415 = vadd.f32 %v1194, %v1414
        %v1416 = vpop.f32.mrf.mxu0
        %v1417 = vpop.f32.mrf.mxu0
        %v1418 = vadd.f32 %v1197, %v1417
        %v1419 = vpop.f32.mrf.mxu0
        %1420 = vmatprep.mubr.bf16.mxu0 0
        %1421 = vmatmul.mubr.bf16.gmra.mxu0 %v1326
        %v1422 = vpop.f32.mrf.mxu0
        %v1423 = vadd.f32 %v1202, %v1422
        %v1424 = vpop.f32.mrf.mxu0
        %v1425 = vpop.f32.mrf.mxu0
        %v1426 = vadd.f32 %v1205, %v1425
        %v1427 = vpop.f32.mrf.mxu0
        %1428 = vmatprep.mubr.bf16.mxu0 0
        %1429 = vmatmul.mubr.bf16.gmra.mxu0 %v1329
        %v1430 = vpop.f32.mrf.mxu0
        %v1431 = vadd.f32 %v1210, %v1430
        %v1432 = vpop.f32.mrf.mxu0
        %v1433 = vpop.f32.mrf.mxu0
        %v1434 = vadd.f32 %v1213, %v1433
        %v1435 = vpop.f32.mrf.mxu0
        %1436 = vmatprep.mubr.bf16.mxu0 0
        %1437 = vmatmul.mubr.bf16.gmra.mxu0 %v1332
        %v1438 = vpop.f32.mrf.mxu0
        %v1439 = vadd.f32 %v1218, %v1438
        %v1440 = vpop.f32.mrf.mxu0
        %v1441 = vpop.f32.mrf.mxu0
        %v1442 = vadd.f32 %v1221, %v1441
        %v1443 = vpop.f32.mrf.mxu0
        %1444 = vmatprep.mubr.bf16.mxu0 0
        %1445 = vmatmul.mubr.bf16.gmra.mxu0 %v1335
        %v1446 = vpop.f32.mrf.mxu0
        %v1447 = vadd.f32 %v1226, %v1446
        %v1448 = vpop.f32.mrf.mxu0
        %v1449 = vpop.f32.mrf.mxu0
        %v1450 = vadd.f32 %v1229, %v1449
        %v1451 = vpop.f32.mrf.mxu0
        %1452 = vmatprep.mubr.bf16.mxu0 0
        %1453 = vmatmul.mubr.bf16.gmra.mxu0 %v1338
        %v1454 = vpop.f32.mrf.mxu0
        %v1455 = vadd.f32 %v1234, %v1454
        %v1456 = vpop.f32.mrf.mxu0
        %v1457 = vpop.f32.mrf.mxu0
        %v1458 = vadd.f32 %v1237, %v1457
        %v1459 = vpop.f32.mrf.mxu0
        %1460 = vmatprep.mubr.bf16.mxu0 0
        %1461 = vmatmul.mubr.bf16.gmra.mxu0 %v1341
        %v1462 = vpop.f32.mrf.mxu0
        %v1463 = vadd.f32 %v1242, %v1462
        %v1464 = vpop.f32.mrf.mxu0
        %v1465 = vpop.f32.mrf.mxu0
        %v1466 = vadd.f32 %v1245, %v1465
        %v1467 = vpop.f32.mrf.mxu0
        %1468 = vmatprep.mubr.bf16.mxu0 0
        %1469 = vmatmul.mubr.bf16.gmra.mxu0 %v1344
        %v1470 = vpop.f32.mrf.mxu0
        %v1471 = vadd.f32 %v1250, %v1470
        %v1472 = vpop.f32.mrf.mxu0
        %v1473 = vpop.f32.mrf.mxu0
        %v1474 = vadd.f32 %v1253, %v1473
        %v1475 = vpop.f32.mrf.mxu0
        %1476 = vmatprep.mubr.bf16.mxu0 0
        %1477 = vmatmul.mubr.bf16.gmra.mxu0 %v1347
        %v1478 = vpop.f32.mrf.mxu0
        %v1479 = vadd.f32 %v1258, %v1478
        %v1480 = vpop.f32.mrf.mxu0
        %v1481 = vpop.f32.mrf.mxu0
        %v1482 = vadd.f32 %v1261, %v1481
        %v1483 = vpop.f32.mrf.mxu0
        %1484 = vmatprep.mubr.bf16.mxu0 0
        %1485 = vmatmul.mubr.bf16.gmra.mxu0 %v1350
        %v1486 = vpop.f32.mrf.mxu0
        %v1487 = vadd.f32 %v1266, %v1486
        %v1488 = vpop.f32.mrf.mxu0
        %v1489 = vpop.f32.mrf.mxu0
        %v1490 = vadd.f32 %v1269, %v1489
        %v1491 = vpop.f32.mrf.mxu0
        %1492 = vmatprep.mubr.bf16.mxu0 0
        %1493 = vmatmul.mubr.bf16.gmra.mxu0 %v1353
        %v1494 = vpop.f32.mrf.mxu0
        %v1495 = vadd.f32 %v1274, %v1494
        %v1496 = vpop.f32.mrf.mxu0
        %v1497 = vpop.f32.mrf.mxu0
        %v1498 = vadd.f32 %v1277, %v1497
        %v1499 = vpop.f32.mrf.mxu0
        %1500 = vmatprep.mubr.bf16.mxu0 0
        %1501 = vmatmul.mubr.bf16.gmra.mxu0 %v1356
        %v1502 = vpop.f32.mrf.mxu0
        %v1503 = vadd.f32 %v1282, %v1502
        %v1504 = vpop.f32.mrf.mxu0
        %v1505 = vpop.f32.mrf.mxu0
        %v1506 = vadd.f32 %v1285, %v1505
        %v1507 = vpop.f32.mrf.mxu0
        %1508 = vmatprep.mubr.bf16.mxu0 0
        %1509 = vmatmul.mubr.bf16.gmra.mxu0 %v1359
        %v1510 = vpop.f32.mrf.mxu0
        %v1511 = vadd.f32 %v1290, %v1510
        %v1512 = vpop.f32.mrf.mxu0
        %v1513 = vpop.f32.mrf.mxu0
        %v1514 = vadd.f32 %v1293, %v1513
        %v1515 = vpop.f32.mrf.mxu0
        %1516 = vmatprep.mubr.bf16.mxu0 0
        %1517 = vmatmul.mubr.bf16.gmra.mxu0 %v1362
        %v1518 = vpop.f32.mrf.mxu0
        %v1519 = vadd.f32 %v1298, %v1518
        %v1520 = vpop.f32.mrf.mxu0
        %v1521 = vpop.f32.mrf.mxu0
        %v1522 = vadd.f32 %v1301, %v1521
        %v1523 = vpop.f32.mrf.mxu0
        %1524 = vdwg.mxu0
        %v1525 = vld [vmem:[#allocation2 + $0x9] sm:$0xff]
        %v1526 = vld [vmem:[#allocation2 + $0x21] sm:$0xff]
        %v1527 = vld [vmem:[#allocation2 + $0x39] sm:$0xff]
        %v1528 = vld [vmem:[#allocation2 + $0x51] sm:$0xff]
        %v1529 = vld [vmem:[#allocation2 + $0x69] sm:$0xff]
        %v1530 = vld [vmem:[#allocation2 + $0x81] sm:$0xff]
        %v1531 = vld [vmem:[#allocation2 + $0x99] sm:$0xff]
        %v1532 = vld [vmem:[#allocation2 + $0xb1] sm:$0xff]
        %v1533 = vld [vmem:[#allocation2 + $0xf9] sm:$0xff]
        %v1534 = vld [vmem:[#allocation2 + $0x111] sm:$0xff]
        %v1535 = vld [vmem:[#allocation2 + $0x129] sm:$0xff]
        %v1536 = vld [vmem:[#allocation2 + $0x141] sm:$0xff]
        %v1537 = vld [vmem:[#allocation2 + $0x159] sm:$0xff]
        %v1538 = vld [vmem:[#allocation2 + $0x171] sm:$0xff]
        %v1539 = vld [vmem:[#allocation2 + $0x189] sm:$0xff]
        %v1540 = vld [vmem:[#allocation2 + $0x1a1] sm:$0xff]
        %v1541 = vld [vmem:[#allocation2 + $0x1e9] sm:$0xff]
        %v1542 = vld [vmem:[#allocation2 + $0x201] sm:$0xff]
        %v1543 = vld [vmem:[#allocation2 + $0x219] sm:$0xff]
        %v1544 = vld [vmem:[#allocation2 + $0x231] sm:$0xff]
        %v1545 = vld [vmem:[#allocation2 + $0x249] sm:$0xff]
        %v1546 = vld [vmem:[#allocation2 + $0x261] sm:$0xff]
        %v1547 = vld [vmem:[#allocation2 + $0x279] sm:$0xff]
        %v1548 = vld [vmem:[#allocation2 + $0x291] sm:$0xff]
        %v1549 = vld [vmem:[#allocation2 + $0x2d9] sm:$0xff]
        %v1550 = vld [vmem:[#allocation2 + $0x2f1] sm:$0xff]
        %v1551 = vld [vmem:[#allocation2 + $0x309] sm:$0xff]
        %v1552 = vld [vmem:[#allocation2 + $0x321] sm:$0xff]
        %v1553 = vld [vmem:[#allocation2 + $0x339] sm:$0xff]
        %v1554 = vld [vmem:[#allocation2 + $0x351] sm:$0xff]
        %v1555 = vld [vmem:[#allocation2 + $0x369] sm:$0xff]
        %v1556 = vld [vmem:[#allocation2 + $0x381] sm:$0xff]
        %s1557 = scalar_lea.vmem %s2, 32
        %v1558 = vld [vmem:[%s1557] sm:$0xf]
        %v1559 = vld [vmem:[%s1557 + $0x4] sm:$0xf]
        %v1560 = vld [vmem:[%s1557 + $0x8] sm:$0xf]
        %v1561 = vld [vmem:[%s1557 + $0xc] sm:$0xf]
        %v1562 = vpack.c.bf16 %v1526, %v1525
        %v1563 = vpack.c.bf16 %v1528, %v1527
        %v1564 = vpack.c.bf16 %v1530, %v1529
        %v1565 = vpack.c.bf16 %v1532, %v1531
        %v1566 = vpack.c.bf16 %v1534, %v1533
        %v1567 = vpack.c.bf16 %v1536, %v1535
        %v1568 = vpack.c.bf16 %v1538, %v1537
        %v1569 = vpack.c.bf16 %v1540, %v1539
        %v1570 = vpack.c.bf16 %v1542, %v1541
        %v1571 = vpack.c.bf16 %v1544, %v1543
        %v1572 = vpack.c.bf16 %v1546, %v1545
        %v1573 = vpack.c.bf16 %v1548, %v1547
        %v1574 = vpack.c.bf16 %v1550, %v1549
        %v1575 = vpack.c.bf16 %v1552, %v1551
        %v1576 = vpack.c.bf16 %v1554, %v1553
        %v1577 = vpack.c.bf16 %v1556, %v1555
        %v1582 = vunpack.c.l.b16 %v1558
        %v1583 = vunpack.c.l.b16 %v1559
        %v1584 = vunpack.c.l.b16 %v1560
        %v1585 = vunpack.c.l.b16 %v1561
        %v1586 = vpack.c.b16 %v1583, %v1582
        %v1587 = vpack.c.b16 %v1585, %v1584
        %v1591 = vsel %vm823, %v1562, 0
        %v1594 = vsel %vm823, %v1563, 0
        %v1597 = vsel %vm823, %v1564, 0
        %v1600 = vsel %vm823, %v1565, 0
        %v1603 = vsel %vm823, %v1566, 0
        %v1606 = vsel %vm823, %v1567, 0
        %v1609 = vsel %vm823, %v1568, 0
        %v1612 = vsel %vm823, %v1569, 0
        %v1615 = vsel %vm823, %v1570, 0
        %v1618 = vsel %vm823, %v1571, 0
        %v1621 = vsel %vm823, %v1572, 0
        %v1624 = vsel %vm823, %v1573, 0
        %v1627 = vsel %vm823, %v1574, 0
        %v1630 = vsel %vm823, %v1575, 0
        %v1633 = vsel %vm823, %v1576, 0
        %v1636 = vsel %vm823, %v1577, 0
        %1638 = vmatprep.subr.bf16.mxu0 0
        %1639 = vmatpush1.bf16.msra.mxu0 0
        %1640 = vmatprep.subr.bf16.mxu0 0
        %1641 = vmatpush1.bf16.msra.mxu0 0
        %1642 = vmatprep.subr.bf16.mxu0 0
        %1643 = vmatpush1.bf16.msra.mxu0 0
        %1644 = vmatprep.subr.bf16.mxu0 0
        %1645 = vmatpush1.bf16.msra.mxu0 0
        %1646 = vmatprep.subr.bf16.mxu0 0
        %1647 = vmatpush1.bf16.msra.mxu0 0
        %1648 = vmatprep.subr.bf16.mxu0 0
        %1649 = vmatpush1.bf16.msra.mxu0 0
        %1650 = vmatprep.subr.bf16.mxu0 0
        %1651 = vmatpush1.bf16.msra.mxu0 %v1587
        %1652 = vmatprep.subr.bf16.mxu0 0
        %1653 = vmatpush1.bf16.msra.mxu0 %v1586
        %1654 = vmatprep.subr.bf16.mxu0 0
        %1655 = vmatpush2.bf16.msra.mxu0 0
        %1656 = vmatprep.subr.bf16.mxu0 0
        %1657 = vmatpush2.bf16.msra.mxu0 0
        %1658 = vmatprep.subr.bf16.mxu0 0
        %1659 = vmatpush2.bf16.msra.mxu0 0
        %1660 = vmatprep.subr.bf16.mxu0 0
        %1661 = vmatpush2.bf16.msra.mxu0 0
        %1662 = vmatprep.subr.bf16.mxu0 0
        %1663 = vmatpush2.bf16.msra.mxu0 0
        %1664 = vmatprep.subr.bf16.mxu0 0
        %1665 = vmatpush2.bf16.msra.mxu0 0
        %1666 = vmatprep.subr.bf16.mxu0 0
        %1667 = vmatpush2.bf16.msra.mxu0 0
        %1668 = vmatprep.subr.bf16.mxu0 0
        %1669 = vmatpush2.bf16.msra.mxu0 0
        %1670 = vmatprep.mubr.bf16.mxu0 0
        %1671 = vmatmul.mubr.bf16.gmra.mxu0 %v1591
        %v1672 = vpop.f32.mrf.mxu0
        %v1673 = vadd.f32 0.0, %v1672
        %v1674 = vpop.f32.mrf.mxu0
        %v1675 = vpop.f32.mrf.mxu0
        %v1676 = vadd.f32 0.0, %v1675
        %v1677 = vpop.f32.mrf.mxu0
        %1678 = vmatprep.mubr.bf16.mxu0 0
        %1679 = vmatmul.mubr.bf16.gmra.mxu0 %v1594
        %v1680 = vpop.f32.mrf.mxu0
        %v1681 = vadd.f32 0.0, %v1680
        %v1682 = vpop.f32.mrf.mxu0
        %v1683 = vpop.f32.mrf.mxu0
        %v1684 = vadd.f32 0.0, %v1683
        %v1685 = vpop.f32.mrf.mxu0
        %1686 = vmatprep.mubr.bf16.mxu0 0
        %1687 = vmatmul.mubr.bf16.gmra.mxu0 %v1597
        %v1688 = vpop.f32.mrf.mxu0
        %v1689 = vadd.f32 0.0, %v1688
        %v1690 = vpop.f32.mrf.mxu0
        %v1691 = vpop.f32.mrf.mxu0
        %v1692 = vadd.f32 0.0, %v1691
        %v1693 = vpop.f32.mrf.mxu0
        %1694 = vmatprep.mubr.bf16.mxu0 0
        %1695 = vmatmul.mubr.bf16.gmra.mxu0 %v1600
        %v1696 = vpop.f32.mrf.mxu0
        %v1697 = vadd.f32 0.0, %v1696
        %v1698 = vpop.f32.mrf.mxu0
        %v1699 = vpop.f32.mrf.mxu0
        %v1700 = vadd.f32 0.0, %v1699
        %v1701 = vpop.f32.mrf.mxu0
        %1702 = vmatprep.mubr.bf16.mxu0 0
        %1703 = vmatmul.mubr.bf16.gmra.mxu0 %v1603
        %v1704 = vpop.f32.mrf.mxu0
        %v1705 = vadd.f32 0.0, %v1704
        %v1706 = vpop.f32.mrf.mxu0
        %v1707 = vpop.f32.mrf.mxu0
        %v1708 = vadd.f32 0.0, %v1707
        %v1709 = vpop.f32.mrf.mxu0
        %1710 = vmatprep.mubr.bf16.mxu0 0
        %1711 = vmatmul.mubr.bf16.gmra.mxu0 %v1606
        %v1712 = vpop.f32.mrf.mxu0
        %v1713 = vadd.f32 0.0, %v1712
        %v1714 = vpop.f32.mrf.mxu0
        %v1715 = vpop.f32.mrf.mxu0
        %v1716 = vadd.f32 0.0, %v1715
        %v1717 = vpop.f32.mrf.mxu0
        %1718 = vmatprep.mubr.bf16.mxu0 0
        %1719 = vmatmul.mubr.bf16.gmra.mxu0 %v1609
        %v1720 = vpop.f32.mrf.mxu0
        %v1721 = vadd.f32 0.0, %v1720
        %v1722 = vpop.f32.mrf.mxu0
        %v1723 = vpop.f32.mrf.mxu0
        %v1724 = vadd.f32 0.0, %v1723
        %v1725 = vpop.f32.mrf.mxu0
        %1726 = vmatprep.mubr.bf16.mxu0 0
        %1727 = vmatmul.mubr.bf16.gmra.mxu0 %v1612
        %v1728 = vpop.f32.mrf.mxu0
        %v1729 = vadd.f32 0.0, %v1728
        %v1730 = vpop.f32.mrf.mxu0
        %v1731 = vpop.f32.mrf.mxu0
        %v1732 = vadd.f32 0.0, %v1731
        %v1733 = vpop.f32.mrf.mxu0
        %1734 = vmatprep.mubr.bf16.mxu0 0
        %1735 = vmatmul.mubr.bf16.gmra.mxu0 %v1615
        %v1736 = vpop.f32.mrf.mxu0
        %v1737 = vadd.f32 0.0, %v1736
        %v1738 = vpop.f32.mrf.mxu0
        %v1739 = vpop.f32.mrf.mxu0
        %v1740 = vadd.f32 0.0, %v1739
        %v1741 = vpop.f32.mrf.mxu0
        %1742 = vmatprep.mubr.bf16.mxu0 0
        %1743 = vmatmul.mubr.bf16.gmra.mxu0 %v1618
        %v1744 = vpop.f32.mrf.mxu0
        %v1745 = vadd.f32 0.0, %v1744
        %v1746 = vpop.f32.mrf.mxu0
        %v1747 = vpop.f32.mrf.mxu0
        %v1748 = vadd.f32 0.0, %v1747
        %v1749 = vpop.f32.mrf.mxu0
        %1750 = vmatprep.mubr.bf16.mxu0 0
        %1751 = vmatmul.mubr.bf16.gmra.mxu0 %v1621
        %v1752 = vpop.f32.mrf.mxu0
        %v1753 = vadd.f32 0.0, %v1752
        %v1754 = vpop.f32.mrf.mxu0
        %v1755 = vpop.f32.mrf.mxu0
        %v1756 = vadd.f32 0.0, %v1755
        %v1757 = vpop.f32.mrf.mxu0
        %1758 = vmatprep.mubr.bf16.mxu0 0
        %1759 = vmatmul.mubr.bf16.gmra.mxu0 %v1624
        %v1760 = vpop.f32.mrf.mxu0
        %v1761 = vadd.f32 0.0, %v1760
        %v1762 = vpop.f32.mrf.mxu0
        %v1763 = vpop.f32.mrf.mxu0
        %v1764 = vadd.f32 0.0, %v1763
        %v1765 = vpop.f32.mrf.mxu0
        %1766 = vmatprep.mubr.bf16.mxu0 0
        %1767 = vmatmul.mubr.bf16.gmra.mxu0 %v1627
        %v1768 = vpop.f32.mrf.mxu0
        %v1769 = vadd.f32 0.0, %v1768
        %v1770 = vpop.f32.mrf.mxu0
        %v1771 = vpop.f32.mrf.mxu0
        %v1772 = vadd.f32 0.0, %v1771
        %v1773 = vpop.f32.mrf.mxu0
        %1774 = vmatprep.mubr.bf16.mxu0 0
        %1775 = vmatmul.mubr.bf16.gmra.mxu0 %v1630
        %v1776 = vpop.f32.mrf.mxu0
        %v1777 = vadd.f32 0.0, %v1776
        %v1778 = vpop.f32.mrf.mxu0
        %v1779 = vpop.f32.mrf.mxu0
        %v1780 = vadd.f32 0.0, %v1779
        %v1781 = vpop.f32.mrf.mxu0
        %1782 = vmatprep.mubr.bf16.mxu0 0
        %1783 = vmatmul.mubr.bf16.gmra.mxu0 %v1633
        %v1784 = vpop.f32.mrf.mxu0
        %v1785 = vadd.f32 0.0, %v1784
        %v1786 = vpop.f32.mrf.mxu0
        %v1787 = vpop.f32.mrf.mxu0
        %v1788 = vadd.f32 0.0, %v1787
        %v1789 = vpop.f32.mrf.mxu0
        %1790 = vmatprep.mubr.bf16.mxu0 0
        %1791 = vmatmul.mubr.bf16.gmra.mxu0 %v1636
        %v1792 = vpop.f32.mrf.mxu0
        %v1793 = vadd.f32 0.0, %v1792
        %v1794 = vpop.f32.mrf.mxu0
        %v1795 = vpop.f32.mrf.mxu0
        %v1796 = vadd.f32 0.0, %v1795
        %v1797 = vpop.f32.mrf.mxu0
        %1798 = vdwg.mxu0
        %v1799 = vadd.f32 %v1399, %v1673
        %v1800 = vadd.f32 %v1402, %v1676
        %v1801 = vadd.f32 %v1407, %v1681
        %v1802 = vadd.f32 %v1410, %v1684
        %v1803 = vadd.f32 %v1415, %v1689
        %v1804 = vadd.f32 %v1418, %v1692
        %v1805 = vadd.f32 %v1423, %v1697
        %v1806 = vadd.f32 %v1426, %v1700
        %v1807 = vadd.f32 %v1431, %v1705
        %v1808 = vadd.f32 %v1434, %v1708
        %v1809 = vadd.f32 %v1439, %v1713
        %v1810 = vadd.f32 %v1442, %v1716
        %v1811 = vadd.f32 %v1447, %v1721
        %v1812 = vadd.f32 %v1450, %v1724
        %v1813 = vadd.f32 %v1455, %v1729
        %v1814 = vadd.f32 %v1458, %v1732
        %v1815 = vadd.f32 %v1463, %v1737
        %v1816 = vadd.f32 %v1466, %v1740
        %v1817 = vadd.f32 %v1471, %v1745
        %v1818 = vadd.f32 %v1474, %v1748
        %v1819 = vadd.f32 %v1479, %v1753
        %v1820 = vadd.f32 %v1482, %v1756
        %v1821 = vadd.f32 %v1487, %v1761
        %v1822 = vadd.f32 %v1490, %v1764
        %v1823 = vadd.f32 %v1495, %v1769
        %v1824 = vadd.f32 %v1498, %v1772
        %v1825 = vadd.f32 %v1503, %v1777
        %v1826 = vadd.f32 %v1506, %v1780
        %v1827 = vadd.f32 %v1511, %v1785
        %v1828 = vadd.f32 %v1514, %v1788
        %v1829 = vadd.f32 %v1519, %v1793
        %v1830 = vadd.f32 %v1522, %v1796
        %v1831 = vld [vmem:[%s945 + $0x7] sm:$0xff]
        %v1832 = vld [vmem:[%s945 + $0x1f] sm:$0xff]
        %v1833 = vld [vmem:[%s945 + $0x37] sm:$0xff]
        %v1834 = vld [vmem:[%s945 + $0x4f] sm:$0xff]
        %v1835 = vld [vmem:[%s945 + $0x67] sm:$0xff]
        %v1836 = vld [vmem:[%s945 + $0x7f] sm:$0xff]
        %v1837 = vld [vmem:[%s945 + $0x97] sm:$0xff]
        %v1838 = vld [vmem:[%s945 + $0xaf] sm:$0xff]
        %v1839 = vld [vmem:[%s945 + $0xf7] sm:$0xff]
        %v1840 = vld [vmem:[%s945 + $0x10f] sm:$0xff]
        %v1841 = vld [vmem:[%s945 + $0x127] sm:$0xff]
        %v1842 = vld [vmem:[%s945 + $0x13f] sm:$0xff]
        %v1843 = vld [vmem:[%s945 + $0x157] sm:$0xff]
        %v1844 = vld [vmem:[%s945 + $0x16f] sm:$0xff]
        %v1845 = vld [vmem:[%s945 + $0x187] sm:$0xff]
        %v1846 = vld [vmem:[%s945 + $0x19f] sm:$0xff]
        %v1847 = vld [vmem:[%s945 + $0x1e7] sm:$0xff]
        %v1848 = vld [vmem:[%s945 + $0x1ff] sm:$0xff]
        %v1849 = vld [vmem:[%s945 + $0x217] sm:$0xff]
        %v1850 = vld [vmem:[%s945 + $0x22f] sm:$0xff]
        %v1851 = vld [vmem:[%s945 + $0x247] sm:$0xff]
        %v1852 = vld [vmem:[%s945 + $0x25f] sm:$0xff]
        %v1853 = vld [vmem:[%s945 + $0x277] sm:$0xff]
        %v1854 = vld [vmem:[%s945 + $0x28f] sm:$0xff]
        %v1855 = vld [vmem:[%s945 + $0x2d7] sm:$0xff]
        %v1856 = vld [vmem:[%s945 + $0x2ef] sm:$0xff]
        %v1857 = vld [vmem:[%s945 + $0x307] sm:$0xff]
        %v1858 = vld [vmem:[%s945 + $0x31f] sm:$0xff]
        %v1859 = vld [vmem:[%s945 + $0x337] sm:$0xff]
        %v1860 = vld [vmem:[%s945 + $0x34f] sm:$0xff]
        %v1861 = vld [vmem:[%s945 + $0x367] sm:$0xff]
        %v1862 = vld [vmem:[%s945 + $0x37f] sm:$0xff]
        %s1863 = scalar_lea.vmem %s2, 48
        %v1864 = vld [vmem:[%s1863] sm:$0xf]
        %v1865 = vld [vmem:[%s1863 + $0x4] sm:$0xf]
        %v1866 = vld [vmem:[%s1863 + $0x8] sm:$0xf]
        %v1867 = vld [vmem:[%s1863 + $0xc] sm:$0xf]
        %v1868 = vpack.c.bf16 %v1832, %v1831
        %v1869 = vpack.c.bf16 %v1834, %v1833
        %v1870 = vpack.c.bf16 %v1836, %v1835
        %v1871 = vpack.c.bf16 %v1838, %v1837
        %v1872 = vpack.c.bf16 %v1840, %v1839
        %v1873 = vpack.c.bf16 %v1842, %v1841
        %v1874 = vpack.c.bf16 %v1844, %v1843
        %v1875 = vpack.c.bf16 %v1846, %v1845
        %v1876 = vpack.c.bf16 %v1848, %v1847
        %v1877 = vpack.c.bf16 %v1850, %v1849
        %v1878 = vpack.c.bf16 %v1852, %v1851
        %v1879 = vpack.c.bf16 %v1854, %v1853
        %v1880 = vpack.c.bf16 %v1856, %v1855
        %v1881 = vpack.c.bf16 %v1858, %v1857
        %v1882 = vpack.c.bf16 %v1860, %v1859
        %v1883 = vpack.c.bf16 %v1862, %v1861
        %v1888 = vunpack.c.l.b16 %v1864
        %v1889 = vunpack.c.l.b16 %v1865
        %v1890 = vunpack.c.l.b16 %v1866
        %v1891 = vunpack.c.l.b16 %v1867
        %v1892 = vpack.c.b16 %v1889, %v1888
        %v1893 = vpack.c.b16 %v1891, %v1890
        %v1897 = vsel %vm823, %v1868, 0
        %v1900 = vsel %vm823, %v1869, 0
        %v1903 = vsel %vm823, %v1870, 0
        %v1906 = vsel %vm823, %v1871, 0
        %v1909 = vsel %vm823, %v1872, 0
        %v1912 = vsel %vm823, %v1873, 0
        %v1915 = vsel %vm823, %v1874, 0
        %v1918 = vsel %vm823, %v1875, 0
        %v1921 = vsel %vm823, %v1876, 0
        %v1924 = vsel %vm823, %v1877, 0
        %v1927 = vsel %vm823, %v1878, 0
        %v1930 = vsel %vm823, %v1879, 0
        %v1933 = vsel %vm823, %v1880, 0
        %v1936 = vsel %vm823, %v1881, 0
        %v1939 = vsel %vm823, %v1882, 0
        %v1942 = vsel %vm823, %v1883, 0
        %1944 = vmatprep.subr.bf16.mxu0 0
        %1945 = vmatpush1.bf16.msra.mxu0 0
        %1946 = vmatprep.subr.bf16.mxu0 0
        %1947 = vmatpush1.bf16.msra.mxu0 0
        %1948 = vmatprep.subr.bf16.mxu0 0
        %1949 = vmatpush1.bf16.msra.mxu0 0
        %1950 = vmatprep.subr.bf16.mxu0 0
        %1951 = vmatpush1.bf16.msra.mxu0 0
        %1952 = vmatprep.subr.bf16.mxu0 0
        %1953 = vmatpush1.bf16.msra.mxu0 0
        %1954 = vmatprep.subr.bf16.mxu0 0
        %1955 = vmatpush1.bf16.msra.mxu0 0
        %1956 = vmatprep.subr.bf16.mxu0 0
        %1957 = vmatpush1.bf16.msra.mxu0 %v1893
        %1958 = vmatprep.subr.bf16.mxu0 0
        %1959 = vmatpush1.bf16.msra.mxu0 %v1892
        %1960 = vmatprep.subr.bf16.mxu0 0
        %1961 = vmatpush2.bf16.msra.mxu0 0
        %1962 = vmatprep.subr.bf16.mxu0 0
        %1963 = vmatpush2.bf16.msra.mxu0 0
        %1964 = vmatprep.subr.bf16.mxu0 0
        %1965 = vmatpush2.bf16.msra.mxu0 0
        %1966 = vmatprep.subr.bf16.mxu0 0
        %1967 = vmatpush2.bf16.msra.mxu0 0
        %1968 = vmatprep.subr.bf16.mxu0 0
        %1969 = vmatpush2.bf16.msra.mxu0 0
        %1970 = vmatprep.subr.bf16.mxu0 0
        %1971 = vmatpush2.bf16.msra.mxu0 0
        %1972 = vmatprep.subr.bf16.mxu0 0
        %1973 = vmatpush2.bf16.msra.mxu0 0
        %1974 = vmatprep.subr.bf16.mxu0 0
        %1975 = vmatpush2.bf16.msra.mxu0 0
        %1976 = vmatprep.mubr.bf16.mxu0 0
        %1977 = vmatmul.mubr.bf16.gmra.mxu0 %v1897
        %v1978 = vpop.f32.mrf.mxu0
        %v1979 = vadd.f32 0.0, %v1978
        %v1980 = vpop.f32.mrf.mxu0
        %v1981 = vpop.f32.mrf.mxu0
        %v1982 = vadd.f32 0.0, %v1981
        %v1983 = vpop.f32.mrf.mxu0
        %1984 = vmatprep.mubr.bf16.mxu0 0
        %1985 = vmatmul.mubr.bf16.gmra.mxu0 %v1900
        %v1986 = vpop.f32.mrf.mxu0
        %v1987 = vadd.f32 0.0, %v1986
        %v1988 = vpop.f32.mrf.mxu0
        %v1989 = vpop.f32.mrf.mxu0
        %v1990 = vadd.f32 0.0, %v1989
        %v1991 = vpop.f32.mrf.mxu0
        %1992 = vmatprep.mubr.bf16.mxu0 0
        %1993 = vmatmul.mubr.bf16.gmra.mxu0 %v1903
        %v1994 = vpop.f32.mrf.mxu0
        %v1995 = vadd.f32 0.0, %v1994
        %v1996 = vpop.f32.mrf.mxu0
        %v1997 = vpop.f32.mrf.mxu0
        %v1998 = vadd.f32 0.0, %v1997
        %v1999 = vpop.f32.mrf.mxu0
        %2000 = vmatprep.mubr.bf16.mxu0 0
        %2001 = vmatmul.mubr.bf16.gmra.mxu0 %v1906
        %v2002 = vpop.f32.mrf.mxu0
        %v2003 = vadd.f32 0.0, %v2002
        %v2004 = vpop.f32.mrf.mxu0
        %v2005 = vpop.f32.mrf.mxu0
        %v2006 = vadd.f32 0.0, %v2005
        %v2007 = vpop.f32.mrf.mxu0
        %2008 = vmatprep.mubr.bf16.mxu0 0
        %2009 = vmatmul.mubr.bf16.gmra.mxu0 %v1909
        %v2010 = vpop.f32.mrf.mxu0
        %v2011 = vadd.f32 0.0, %v2010
        %v2012 = vpop.f32.mrf.mxu0
        %v2013 = vpop.f32.mrf.mxu0
        %v2014 = vadd.f32 0.0, %v2013
        %v2015 = vpop.f32.mrf.mxu0
        %2016 = vmatprep.mubr.bf16.mxu0 0
        %2017 = vmatmul.mubr.bf16.gmra.mxu0 %v1912
        %v2018 = vpop.f32.mrf.mxu0
        %v2019 = vadd.f32 0.0, %v2018
        %v2020 = vpop.f32.mrf.mxu0
        %v2021 = vpop.f32.mrf.mxu0
        %v2022 = vadd.f32 0.0, %v2021
        %v2023 = vpop.f32.mrf.mxu0
        %2024 = vmatprep.mubr.bf16.mxu0 0
        %2025 = vmatmul.mubr.bf16.gmra.mxu0 %v1915
        %v2026 = vpop.f32.mrf.mxu0
        %v2027 = vadd.f32 0.0, %v2026
        %v2028 = vpop.f32.mrf.mxu0
        %v2029 = vpop.f32.mrf.mxu0
        %v2030 = vadd.f32 0.0, %v2029
        %v2031 = vpop.f32.mrf.mxu0
        %2032 = vmatprep.mubr.bf16.mxu0 0
        %2033 = vmatmul.mubr.bf16.gmra.mxu0 %v1918
        %v2034 = vpop.f32.mrf.mxu0
        %v2035 = vadd.f32 0.0, %v2034
        %v2036 = vpop.f32.mrf.mxu0
        %v2037 = vpop.f32.mrf.mxu0
        %v2038 = vadd.f32 0.0, %v2037
        %v2039 = vpop.f32.mrf.mxu0
        %2040 = vmatprep.mubr.bf16.mxu0 0
        %2041 = vmatmul.mubr.bf16.gmra.mxu0 %v1921
        %v2042 = vpop.f32.mrf.mxu0
        %v2043 = vadd.f32 0.0, %v2042
        %v2044 = vpop.f32.mrf.mxu0
        %v2045 = vpop.f32.mrf.mxu0
        %v2046 = vadd.f32 0.0, %v2045
        %v2047 = vpop.f32.mrf.mxu0
        %2048 = vmatprep.mubr.bf16.mxu0 0
        %2049 = vmatmul.mubr.bf16.gmra.mxu0 %v1924
        %v2050 = vpop.f32.mrf.mxu0
        %v2051 = vadd.f32 0.0, %v2050
        %v2052 = vpop.f32.mrf.mxu0
        %v2053 = vpop.f32.mrf.mxu0
        %v2054 = vadd.f32 0.0, %v2053
        %v2055 = vpop.f32.mrf.mxu0
        %2056 = vmatprep.mubr.bf16.mxu0 0
        %2057 = vmatmul.mubr.bf16.gmra.mxu0 %v1927
        %v2058 = vpop.f32.mrf.mxu0
        %v2059 = vadd.f32 0.0, %v2058
        %v2060 = vpop.f32.mrf.mxu0
        %v2061 = vpop.f32.mrf.mxu0
        %v2062 = vadd.f32 0.0, %v2061
        %v2063 = vpop.f32.mrf.mxu0
        %2064 = vmatprep.mubr.bf16.mxu0 0
        %2065 = vmatmul.mubr.bf16.gmra.mxu0 %v1930
        %v2066 = vpop.f32.mrf.mxu0
        %v2067 = vadd.f32 0.0, %v2066
        %v2068 = vpop.f32.mrf.mxu0
        %v2069 = vpop.f32.mrf.mxu0
        %v2070 = vadd.f32 0.0, %v2069
        %v2071 = vpop.f32.mrf.mxu0
        %2072 = vmatprep.mubr.bf16.mxu0 0
        %2073 = vmatmul.mubr.bf16.gmra.mxu0 %v1933
        %v2074 = vpop.f32.mrf.mxu0
        %v2075 = vadd.f32 0.0, %v2074
        %v2076 = vpop.f32.mrf.mxu0
        %v2077 = vpop.f32.mrf.mxu0
        %v2078 = vadd.f32 0.0, %v2077
        %v2079 = vpop.f32.mrf.mxu0
        %2080 = vmatprep.mubr.bf16.mxu0 0
        %2081 = vmatmul.mubr.bf16.gmra.mxu0 %v1936
        %v2082 = vpop.f32.mrf.mxu0
        %v2083 = vadd.f32 0.0, %v2082
        %v2084 = vpop.f32.mrf.mxu0
        %v2085 = vpop.f32.mrf.mxu0
        %v2086 = vadd.f32 0.0, %v2085
        %v2087 = vpop.f32.mrf.mxu0
        %2088 = vmatprep.mubr.bf16.mxu0 0
        %2089 = vmatmul.mubr.bf16.gmra.mxu0 %v1939
        %v2090 = vpop.f32.mrf.mxu0
        %v2091 = vadd.f32 0.0, %v2090
        %v2092 = vpop.f32.mrf.mxu0
        %v2093 = vpop.f32.mrf.mxu0
        %v2094 = vadd.f32 0.0, %v2093
        %v2095 = vpop.f32.mrf.mxu0
        %2096 = vmatprep.mubr.bf16.mxu0 0
        %2097 = vmatmul.mubr.bf16.gmra.mxu0 %v1942
        %v2098 = vpop.f32.mrf.mxu0
        %v2099 = vadd.f32 0.0, %v2098
        %v2100 = vpop.f32.mrf.mxu0
        %v2101 = vpop.f32.mrf.mxu0
        %v2102 = vadd.f32 0.0, %v2101
        %v2103 = vpop.f32.mrf.mxu0
        %2104 = vdwg.mxu0
        %v2105 = vadd.f32 %v1799, %v1979
        %v2106 = vadd.f32 %v1800, %v1982
        %v2107 = vadd.f32 %v1801, %v1987
        %v2108 = vadd.f32 %v1802, %v1990
        %v2109 = vadd.f32 %v1803, %v1995
        %v2110 = vadd.f32 %v1804, %v1998
        %v2111 = vadd.f32 %v1805, %v2003
        %v2112 = vadd.f32 %v1806, %v2006
        %v2113 = vadd.f32 %v1807, %v2011
        %v2114 = vadd.f32 %v1808, %v2014
        %v2115 = vadd.f32 %v1809, %v2019
        %v2116 = vadd.f32 %v1810, %v2022
        %v2117 = vadd.f32 %v1811, %v2027
        %v2118 = vadd.f32 %v1812, %v2030
        %v2119 = vadd.f32 %v1813, %v2035
        %v2120 = vadd.f32 %v1814, %v2038
        %v2121 = vadd.f32 %v1815, %v2043
        %v2122 = vadd.f32 %v1816, %v2046
        %v2123 = vadd.f32 %v1817, %v2051
        %v2124 = vadd.f32 %v1818, %v2054
        %v2125 = vadd.f32 %v1819, %v2059
        %v2126 = vadd.f32 %v1820, %v2062
        %v2127 = vadd.f32 %v1821, %v2067
        %v2128 = vadd.f32 %v1822, %v2070
        %v2129 = vadd.f32 %v1823, %v2075
        %v2130 = vadd.f32 %v1824, %v2078
        %v2131 = vadd.f32 %v1825, %v2083
        %v2132 = vadd.f32 %v1826, %v2086
        %v2133 = vadd.f32 %v1827, %v2091
        %v2134 = vadd.f32 %v1828, %v2094
        %v2135 = vadd.f32 %v1829, %v2099
        %v2136 = vadd.f32 %v1830, %v2102
        %v2137 = vld [vmem:[%s945 + $0x8] sm:$0xff]
        %v2138 = vld [vmem:[%s945 + $0x20] sm:$0xff]
        %v2139 = vld [vmem:[%s945 + $0x38] sm:$0xff]
        %v2140 = vld [vmem:[%s945 + $0x50] sm:$0xff]
        %v2141 = vld [vmem:[%s945 + $0x68] sm:$0xff]
        %v2142 = vld [vmem:[%s945 + $0x80] sm:$0xff]
        %v2143 = vld [vmem:[%s945 + $0x98] sm:$0xff]
        %v2144 = vld [vmem:[%s945 + $0xb0] sm:$0xff]
        %v2145 = vld [vmem:[%s945 + $0xf8] sm:$0xff]
        %v2146 = vld [vmem:[%s945 + $0x110] sm:$0xff]
        %v2147 = vld [vmem:[%s945 + $0x128] sm:$0xff]
        %v2148 = vld [vmem:[%s945 + $0x140] sm:$0xff]
        %v2149 = vld [vmem:[%s945 + $0x158] sm:$0xff]
        %v2150 = vld [vmem:[%s945 + $0x170] sm:$0xff]
        %v2151 = vld [vmem:[%s945 + $0x188] sm:$0xff]
        %v2152 = vld [vmem:[%s945 + $0x1a0] sm:$0xff]
        %v2153 = vld [vmem:[%s945 + $0x1e8] sm:$0xff]
        %v2154 = vld [vmem:[%s945 + $0x200] sm:$0xff]
        %v2155 = vld [vmem:[%s945 + $0x218] sm:$0xff]
        %v2156 = vld [vmem:[%s945 + $0x230] sm:$0xff]
        %v2157 = vld [vmem:[%s945 + $0x248] sm:$0xff]
        %v2158 = vld [vmem:[%s945 + $0x260] sm:$0xff]
        %v2159 = vld [vmem:[%s945 + $0x278] sm:$0xff]
        %v2160 = vld [vmem:[%s945 + $0x290] sm:$0xff]
        %v2161 = vld [vmem:[%s945 + $0x2d8] sm:$0xff]
        %v2162 = vld [vmem:[%s945 + $0x2f0] sm:$0xff]
        %v2163 = vld [vmem:[%s945 + $0x308] sm:$0xff]
        %v2164 = vld [vmem:[%s945 + $0x320] sm:$0xff]
        %v2165 = vld [vmem:[%s945 + $0x338] sm:$0xff]
        %v2166 = vld [vmem:[%s945 + $0x350] sm:$0xff]
        %v2167 = vld [vmem:[%s945 + $0x368] sm:$0xff]
        %v2168 = vld [vmem:[%s945 + $0x380] sm:$0xff]
        %s2169 = scalar_lea.vmem %s2, 64
        %v2170 = vld [vmem:[%s2169] sm:$0xf]
        %v2171 = vld [vmem:[%s2169 + $0x4] sm:$0xf]
        %v2172 = vld [vmem:[%s2169 + $0x8] sm:$0xf]
        %v2173 = vld [vmem:[%s2169 + $0xc] sm:$0xf]
        %v2174 = vpack.c.bf16 %v2138, %v2137
        %v2175 = vpack.c.bf16 %v2140, %v2139
        %v2176 = vpack.c.bf16 %v2142, %v2141
        %v2177 = vpack.c.bf16 %v2144, %v2143
        %v2178 = vpack.c.bf16 %v2146, %v2145
        %v2179 = vpack.c.bf16 %v2148, %v2147
        %v2180 = vpack.c.bf16 %v2150, %v2149
        %v2181 = vpack.c.bf16 %v2152, %v2151
        %v2182 = vpack.c.bf16 %v2154, %v2153
        %v2183 = vpack.c.bf16 %v2156, %v2155
        %v2184 = vpack.c.bf16 %v2158, %v2157
        %v2185 = vpack.c.bf16 %v2160, %v2159
        %v2186 = vpack.c.bf16 %v2162, %v2161
        %v2187 = vpack.c.bf16 %v2164, %v2163
        %v2188 = vpack.c.bf16 %v2166, %v2165
        %v2189 = vpack.c.bf16 %v2168, %v2167
        %v2194 = vunpack.c.l.b16 %v2170
        %v2195 = vunpack.c.l.b16 %v2171
        %v2196 = vunpack.c.l.b16 %v2172
        %v2197 = vunpack.c.l.b16 %v2173
        %v2198 = vpack.c.b16 %v2195, %v2194
        %v2199 = vpack.c.b16 %v2197, %v2196
        %v2203 = vsel %vm823, %v2174, 0
        %v2206 = vsel %vm823, %v2175, 0
        %v2209 = vsel %vm823, %v2176, 0
        %v2212 = vsel %vm823, %v2177, 0
        %v2215 = vsel %vm823, %v2178, 0
        %v2218 = vsel %vm823, %v2179, 0
        %v2221 = vsel %vm823, %v2180, 0
        %v2224 = vsel %vm823, %v2181, 0
        %v2227 = vsel %vm823, %v2182, 0
        %v2230 = vsel %vm823, %v2183, 0
        %v2233 = vsel %vm823, %v2184, 0
        %v2236 = vsel %vm823, %v2185, 0
        %v2239 = vsel %vm823, %v2186, 0
        %v2242 = vsel %vm823, %v2187, 0
        %v2245 = vsel %vm823, %v2188, 0
        %v2248 = vsel %vm823, %v2189, 0
        %2250 = vmatprep.subr.bf16.mxu0 0
        %2251 = vmatpush1.bf16.msra.mxu0 0
        %2252 = vmatprep.subr.bf16.mxu0 0
        %2253 = vmatpush1.bf16.msra.mxu0 0
        %2254 = vmatprep.subr.bf16.mxu0 0
        %2255 = vmatpush1.bf16.msra.mxu0 0
        %2256 = vmatprep.subr.bf16.mxu0 0
        %2257 = vmatpush1.bf16.msra.mxu0 0
        %2258 = vmatprep.subr.bf16.mxu0 0
        %2259 = vmatpush1.bf16.msra.mxu0 0
        %2260 = vmatprep.subr.bf16.mxu0 0
        %2261 = vmatpush1.bf16.msra.mxu0 0
        %2262 = vmatprep.subr.bf16.mxu0 0
        %2263 = vmatpush1.bf16.msra.mxu0 %v2199
        %2264 = vmatprep.subr.bf16.mxu0 0
        %2265 = vmatpush1.bf16.msra.mxu0 %v2198
        %2266 = vmatprep.subr.bf16.mxu0 0
        %2267 = vmatpush2.bf16.msra.mxu0 0
        %2268 = vmatprep.subr.bf16.mxu0 0
        %2269 = vmatpush2.bf16.msra.mxu0 0
        %2270 = vmatprep.subr.bf16.mxu0 0
        %2271 = vmatpush2.bf16.msra.mxu0 0
        %2272 = vmatprep.subr.bf16.mxu0 0
        %2273 = vmatpush2.bf16.msra.mxu0 0
        %2274 = vmatprep.subr.bf16.mxu0 0
        %2275 = vmatpush2.bf16.msra.mxu0 0
        %2276 = vmatprep.subr.bf16.mxu0 0
        %2277 = vmatpush2.bf16.msra.mxu0 0
        %2278 = vmatprep.subr.bf16.mxu0 0
        %2279 = vmatpush2.bf16.msra.mxu0 0
        %2280 = vmatprep.subr.bf16.mxu0 0
        %2281 = vmatpush2.bf16.msra.mxu0 0
        %2282 = vmatprep.mubr.bf16.mxu0 0
        %2283 = vmatmul.mubr.bf16.gmra.mxu0 %v2203
        %v2284 = vpop.f32.mrf.mxu0
        %v2285 = vadd.f32 0.0, %v2284
        %v2286 = vpop.f32.mrf.mxu0
        %v2287 = vpop.f32.mrf.mxu0
        %v2288 = vadd.f32 0.0, %v2287
        %v2289 = vpop.f32.mrf.mxu0
        %2290 = vmatprep.mubr.bf16.mxu0 0
        %2291 = vmatmul.mubr.bf16.gmra.mxu0 %v2206
        %v2292 = vpop.f32.mrf.mxu0
        %v2293 = vadd.f32 0.0, %v2292
        %v2294 = vpop.f32.mrf.mxu0
        %v2295 = vpop.f32.mrf.mxu0
        %v2296 = vadd.f32 0.0, %v2295
        %v2297 = vpop.f32.mrf.mxu0
        %2298 = vmatprep.mubr.bf16.mxu0 0
        %2299 = vmatmul.mubr.bf16.gmra.mxu0 %v2209
        %v2300 = vpop.f32.mrf.mxu0
        %v2301 = vadd.f32 0.0, %v2300
        %v2302 = vpop.f32.mrf.mxu0
        %v2303 = vpop.f32.mrf.mxu0
        %v2304 = vadd.f32 0.0, %v2303
        %v2305 = vpop.f32.mrf.mxu0
        %2306 = vmatprep.mubr.bf16.mxu0 0
        %2307 = vmatmul.mubr.bf16.gmra.mxu0 %v2212
        %v2308 = vpop.f32.mrf.mxu0
        %v2309 = vadd.f32 0.0, %v2308
        %v2310 = vpop.f32.mrf.mxu0
        %v2311 = vpop.f32.mrf.mxu0
        %v2312 = vadd.f32 0.0, %v2311
        %v2313 = vpop.f32.mrf.mxu0
        %2314 = vmatprep.mubr.bf16.mxu0 0
        %2315 = vmatmul.mubr.bf16.gmra.mxu0 %v2215
        %v2316 = vpop.f32.mrf.mxu0
        %v2317 = vadd.f32 0.0, %v2316
        %v2318 = vpop.f32.mrf.mxu0
        %v2319 = vpop.f32.mrf.mxu0
        %v2320 = vadd.f32 0.0, %v2319
        %v2321 = vpop.f32.mrf.mxu0
        %2322 = vmatprep.mubr.bf16.mxu0 0
        %2323 = vmatmul.mubr.bf16.gmra.mxu0 %v2218
        %v2324 = vpop.f32.mrf.mxu0
        %v2325 = vadd.f32 0.0, %v2324
        %v2326 = vpop.f32.mrf.mxu0
        %v2327 = vpop.f32.mrf.mxu0
        %v2328 = vadd.f32 0.0, %v2327
        %v2329 = vpop.f32.mrf.mxu0
        %2330 = vmatprep.mubr.bf16.mxu0 0
        %2331 = vmatmul.mubr.bf16.gmra.mxu0 %v2221
        %v2332 = vpop.f32.mrf.mxu0
        %v2333 = vadd.f32 0.0, %v2332
        %v2334 = vpop.f32.mrf.mxu0
        %v2335 = vpop.f32.mrf.mxu0
        %v2336 = vadd.f32 0.0, %v2335
        %v2337 = vpop.f32.mrf.mxu0
        %2338 = vmatprep.mubr.bf16.mxu0 0
        %2339 = vmatmul.mubr.bf16.gmra.mxu0 %v2224
        %v2340 = vpop.f32.mrf.mxu0
        %v2341 = vadd.f32 0.0, %v2340
        %v2342 = vpop.f32.mrf.mxu0
        %v2343 = vpop.f32.mrf.mxu0
        %v2344 = vadd.f32 0.0, %v2343
        %v2345 = vpop.f32.mrf.mxu0
        %2346 = vmatprep.mubr.bf16.mxu0 0
        %2347 = vmatmul.mubr.bf16.gmra.mxu0 %v2227
        %v2348 = vpop.f32.mrf.mxu0
        %v2349 = vadd.f32 0.0, %v2348
        %v2350 = vpop.f32.mrf.mxu0
        %v2351 = vpop.f32.mrf.mxu0
        %v2352 = vadd.f32 0.0, %v2351
        %v2353 = vpop.f32.mrf.mxu0
        %2354 = vmatprep.mubr.bf16.mxu0 0
        %2355 = vmatmul.mubr.bf16.gmra.mxu0 %v2230
        %v2356 = vpop.f32.mrf.mxu0
        %v2357 = vadd.f32 0.0, %v2356
        %v2358 = vpop.f32.mrf.mxu0
        %v2359 = vpop.f32.mrf.mxu0
        %v2360 = vadd.f32 0.0, %v2359
        %v2361 = vpop.f32.mrf.mxu0
        %2362 = vmatprep.mubr.bf16.mxu0 0
        %2363 = vmatmul.mubr.bf16.gmra.mxu0 %v2233
        %v2364 = vpop.f32.mrf.mxu0
        %v2365 = vadd.f32 0.0, %v2364
        %v2366 = vpop.f32.mrf.mxu0
        %v2367 = vpop.f32.mrf.mxu0
        %v2368 = vadd.f32 0.0, %v2367
        %v2369 = vpop.f32.mrf.mxu0
        %2370 = vmatprep.mubr.bf16.mxu0 0
        %2371 = vmatmul.mubr.bf16.gmra.mxu0 %v2236
        %v2372 = vpop.f32.mrf.mxu0
        %v2373 = vadd.f32 0.0, %v2372
        %v2374 = vpop.f32.mrf.mxu0
        %v2375 = vpop.f32.mrf.mxu0
        %v2376 = vadd.f32 0.0, %v2375
        %v2377 = vpop.f32.mrf.mxu0
        %2378 = vmatprep.mubr.bf16.mxu0 0
        %2379 = vmatmul.mubr.bf16.gmra.mxu0 %v2239
        %v2380 = vpop.f32.mrf.mxu0
        %v2381 = vadd.f32 0.0, %v2380
        %v2382 = vpop.f32.mrf.mxu0
        %v2383 = vpop.f32.mrf.mxu0
        %v2384 = vadd.f32 0.0, %v2383
        %v2385 = vpop.f32.mrf.mxu0
        %2386 = vmatprep.mubr.bf16.mxu0 0
        %2387 = vmatmul.mubr.bf16.gmra.mxu0 %v2242
        %v2388 = vpop.f32.mrf.mxu0
        %v2389 = vadd.f32 0.0, %v2388
        %v2390 = vpop.f32.mrf.mxu0
        %v2391 = vpop.f32.mrf.mxu0
        %v2392 = vadd.f32 0.0, %v2391
        %v2393 = vpop.f32.mrf.mxu0
        %2394 = vmatprep.mubr.bf16.mxu0 0
        %2395 = vmatmul.mubr.bf16.gmra.mxu0 %v2245
        %v2396 = vpop.f32.mrf.mxu0
        %v2397 = vadd.f32 0.0, %v2396
        %v2398 = vpop.f32.mrf.mxu0
        %v2399 = vpop.f32.mrf.mxu0
        %v2400 = vadd.f32 0.0, %v2399
        %v2401 = vpop.f32.mrf.mxu0
        %2402 = vmatprep.mubr.bf16.mxu0 0
        %2403 = vmatmul.mubr.bf16.gmra.mxu0 %v2248
        %v2404 = vpop.f32.mrf.mxu0
        %v2405 = vadd.f32 0.0, %v2404
        %v2406 = vpop.f32.mrf.mxu0
        %v2407 = vpop.f32.mrf.mxu0
        %v2408 = vadd.f32 0.0, %v2407
        %v2409 = vpop.f32.mrf.mxu0
        %2410 = vdwg.mxu0
        %v2411 = vadd.f32 %v2105, %v2285
        %v2412 = vadd.f32 %v2106, %v2288
        %v2413 = vadd.f32 %v2107, %v2293
        %v2414 = vadd.f32 %v2108, %v2296
        %v2415 = vadd.f32 %v2109, %v2301
        %v2416 = vadd.f32 %v2110, %v2304
        %v2417 = vadd.f32 %v2111, %v2309
        %v2418 = vadd.f32 %v2112, %v2312
        %v2419 = vadd.f32 %v2113, %v2317
        %v2420 = vadd.f32 %v2114, %v2320
        %v2421 = vadd.f32 %v2115, %v2325
        %v2422 = vadd.f32 %v2116, %v2328
        %v2423 = vadd.f32 %v2117, %v2333
        %v2424 = vadd.f32 %v2118, %v2336
        %v2425 = vadd.f32 %v2119, %v2341
        %v2426 = vadd.f32 %v2120, %v2344
        %v2427 = vadd.f32 %v2121, %v2349
        %v2428 = vadd.f32 %v2122, %v2352
        %v2429 = vadd.f32 %v2123, %v2357
        %v2430 = vadd.f32 %v2124, %v2360
        %v2431 = vadd.f32 %v2125, %v2365
        %v2432 = vadd.f32 %v2126, %v2368
        %v2433 = vadd.f32 %v2127, %v2373
        %v2434 = vadd.f32 %v2128, %v2376
        %v2435 = vadd.f32 %v2129, %v2381
        %v2436 = vadd.f32 %v2130, %v2384
        %v2437 = vadd.f32 %v2131, %v2389
        %v2438 = vadd.f32 %v2132, %v2392
        %v2439 = vadd.f32 %v2133, %v2397
        %v2440 = vadd.f32 %v2134, %v2400
        %v2441 = vadd.f32 %v2135, %v2405
        %v2442 = vadd.f32 %v2136, %v2408
        %v2443 = vld [vmem:[%s945 + $0x9] sm:$0xff]
        %v2444 = vld [vmem:[%s945 + $0x21] sm:$0xff]
        %v2445 = vld [vmem:[%s945 + $0x39] sm:$0xff]
        %v2446 = vld [vmem:[%s945 + $0x51] sm:$0xff]
        %v2447 = vld [vmem:[%s945 + $0x69] sm:$0xff]
        %v2448 = vld [vmem:[%s945 + $0x81] sm:$0xff]
        %v2449 = vld [vmem:[%s945 + $0x99] sm:$0xff]
        %v2450 = vld [vmem:[%s945 + $0xb1] sm:$0xff]
        %v2451 = vld [vmem:[%s945 + $0xf9] sm:$0xff]
        %v2452 = vld [vmem:[%s945 + $0x111] sm:$0xff]
        %v2453 = vld [vmem:[%s945 + $0x129] sm:$0xff]
        %v2454 = vld [vmem:[%s945 + $0x141] sm:$0xff]
        %v2455 = vld [vmem:[%s945 + $0x159] sm:$0xff]
        %v2456 = vld [vmem:[%s945 + $0x171] sm:$0xff]
        %v2457 = vld [vmem:[%s945 + $0x189] sm:$0xff]
        %v2458 = vld [vmem:[%s945 + $0x1a1] sm:$0xff]
        %v2459 = vld [vmem:[%s945 + $0x1e9] sm:$0xff]
        %v2460 = vld [vmem:[%s945 + $0x201] sm:$0xff]
        %v2461 = vld [vmem:[%s945 + $0x219] sm:$0xff]
        %v2462 = vld [vmem:[%s945 + $0x231] sm:$0xff]
        %v2463 = vld [vmem:[%s945 + $0x249] sm:$0xff]
        %v2464 = vld [vmem:[%s945 + $0x261] sm:$0xff]
        %v2465 = vld [vmem:[%s945 + $0x279] sm:$0xff]
        %v2466 = vld [vmem:[%s945 + $0x291] sm:$0xff]
        %v2467 = vld [vmem:[%s945 + $0x2d9] sm:$0xff]
        %v2468 = vld [vmem:[%s945 + $0x2f1] sm:$0xff]
        %v2469 = vld [vmem:[%s945 + $0x309] sm:$0xff]
        %v2470 = vld [vmem:[%s945 + $0x321] sm:$0xff]
        %v2471 = vld [vmem:[%s945 + $0x339] sm:$0xff]
        %v2472 = vld [vmem:[%s945 + $0x351] sm:$0xff]
        %v2473 = vld [vmem:[%s945 + $0x369] sm:$0xff]
        %v2474 = vld [vmem:[%s945 + $0x381] sm:$0xff]
        %s2475 = scalar_lea.vmem %s2, 80
        %v2476 = vld [vmem:[%s2475] sm:$0xf]
        %v2477 = vld [vmem:[%s2475 + $0x4] sm:$0xf]
        %v2478 = vld [vmem:[%s2475 + $0x8] sm:$0xf]
        %v2479 = vld [vmem:[%s2475 + $0xc] sm:$0xf]
        %v2480 = vpack.c.bf16 %v2444, %v2443
        %v2481 = vpack.c.bf16 %v2446, %v2445
        %v2482 = vpack.c.bf16 %v2448, %v2447
        %v2483 = vpack.c.bf16 %v2450, %v2449
        %v2484 = vpack.c.bf16 %v2452, %v2451
        %v2485 = vpack.c.bf16 %v2454, %v2453
        %v2486 = vpack.c.bf16 %v2456, %v2455
        %v2487 = vpack.c.bf16 %v2458, %v2457
        %v2488 = vpack.c.bf16 %v2460, %v2459
        %v2489 = vpack.c.bf16 %v2462, %v2461
        %v2490 = vpack.c.bf16 %v2464, %v2463
        %v2491 = vpack.c.bf16 %v2466, %v2465
        %v2492 = vpack.c.bf16 %v2468, %v2467
        %v2493 = vpack.c.bf16 %v2470, %v2469
        %v2494 = vpack.c.bf16 %v2472, %v2471
        %v2495 = vpack.c.bf16 %v2474, %v2473
        %v2500 = vunpack.c.l.b16 %v2476
        %v2501 = vunpack.c.l.b16 %v2477
        %v2502 = vunpack.c.l.b16 %v2478
        %v2503 = vunpack.c.l.b16 %v2479
        %v2504 = vpack.c.b16 %v2501, %v2500
        %v2505 = vpack.c.b16 %v2503, %v2502
        %v2509 = vsel %vm823, %v2480, 0
        %v2512 = vsel %vm823, %v2481, 0
        %v2515 = vsel %vm823, %v2482, 0
        %v2518 = vsel %vm823, %v2483, 0
        %v2521 = vsel %vm823, %v2484, 0
        %v2524 = vsel %vm823, %v2485, 0
        %v2527 = vsel %vm823, %v2486, 0
        %v2530 = vsel %vm823, %v2487, 0
        %v2533 = vsel %vm823, %v2488, 0
        %v2536 = vsel %vm823, %v2489, 0
        %v2539 = vsel %vm823, %v2490, 0
        %v2542 = vsel %vm823, %v2491, 0
        %v2545 = vsel %vm823, %v2492, 0
        %v2548 = vsel %vm823, %v2493, 0
        %v2551 = vsel %vm823, %v2494, 0
        %v2554 = vsel %vm823, %v2495, 0
        %2556 = vmatprep.subr.bf16.mxu0 0
        %2557 = vmatpush1.bf16.msra.mxu0 0
        %2558 = vmatprep.subr.bf16.mxu0 0
        %2559 = vmatpush1.bf16.msra.mxu0 0
        %2560 = vmatprep.subr.bf16.mxu0 0
        %2561 = vmatpush1.bf16.msra.mxu0 0
        %2562 = vmatprep.subr.bf16.mxu0 0
        %2563 = vmatpush1.bf16.msra.mxu0 0
        %2564 = vmatprep.subr.bf16.mxu0 0
        %2565 = vmatpush1.bf16.msra.mxu0 0
        %2566 = vmatprep.subr.bf16.mxu0 0
        %2567 = vmatpush1.bf16.msra.mxu0 0
        %2568 = vmatprep.subr.bf16.mxu0 0
        %2569 = vmatpush1.bf16.msra.mxu0 %v2505
        %2570 = vmatprep.subr.bf16.mxu0 0
        %2571 = vmatpush1.bf16.msra.mxu0 %v2504
        %2572 = vmatprep.subr.bf16.mxu0 0
        %2573 = vmatpush2.bf16.msra.mxu0 0
        %2574 = vmatprep.subr.bf16.mxu0 0
        %2575 = vmatpush2.bf16.msra.mxu0 0
        %2576 = vmatprep.subr.bf16.mxu0 0
        %2577 = vmatpush2.bf16.msra.mxu0 0
        %2578 = vmatprep.subr.bf16.mxu0 0
        %2579 = vmatpush2.bf16.msra.mxu0 0
        %2580 = vmatprep.subr.bf16.mxu0 0
        %2581 = vmatpush2.bf16.msra.mxu0 0
        %2582 = vmatprep.subr.bf16.mxu0 0
        %2583 = vmatpush2.bf16.msra.mxu0 0
        %2584 = vmatprep.subr.bf16.mxu0 0
        %2585 = vmatpush2.bf16.msra.mxu0 0
        %2586 = vmatprep.subr.bf16.mxu0 0
        %2587 = vmatpush2.bf16.msra.mxu0 0
        %2588 = vmatprep.mubr.bf16.mxu0 0
        %2589 = vmatmul.mubr.bf16.gmra.mxu0 %v2509
        %v2590 = vpop.f32.mrf.mxu0
        %v2591 = vadd.f32 0.0, %v2590
        %v2592 = vpop.f32.mrf.mxu0
        %v2593 = vpop.f32.mrf.mxu0
        %v2594 = vadd.f32 0.0, %v2593
        %v2595 = vpop.f32.mrf.mxu0
        %2596 = vmatprep.mubr.bf16.mxu0 0
        %2597 = vmatmul.mubr.bf16.gmra.mxu0 %v2512
        %v2598 = vpop.f32.mrf.mxu0
        %v2599 = vadd.f32 0.0, %v2598
        %v2600 = vpop.f32.mrf.mxu0
        %v2601 = vpop.f32.mrf.mxu0
        %v2602 = vadd.f32 0.0, %v2601
        %v2603 = vpop.f32.mrf.mxu0
        %2604 = vmatprep.mubr.bf16.mxu0 0
        %2605 = vmatmul.mubr.bf16.gmra.mxu0 %v2515
        %v2606 = vpop.f32.mrf.mxu0
        %v2607 = vadd.f32 0.0, %v2606
        %v2608 = vpop.f32.mrf.mxu0
        %v2609 = vpop.f32.mrf.mxu0
        %v2610 = vadd.f32 0.0, %v2609
        %v2611 = vpop.f32.mrf.mxu0
        %2612 = vmatprep.mubr.bf16.mxu0 0
        %2613 = vmatmul.mubr.bf16.gmra.mxu0 %v2518
        %v2614 = vpop.f32.mrf.mxu0
        %v2615 = vadd.f32 0.0, %v2614
        %v2616 = vpop.f32.mrf.mxu0
        %v2617 = vpop.f32.mrf.mxu0
        %v2618 = vadd.f32 0.0, %v2617
        %v2619 = vpop.f32.mrf.mxu0
        %2620 = vmatprep.mubr.bf16.mxu0 0
        %2621 = vmatmul.mubr.bf16.gmra.mxu0 %v2521
        %v2622 = vpop.f32.mrf.mxu0
        %v2623 = vadd.f32 0.0, %v2622
        %v2624 = vpop.f32.mrf.mxu0
        %v2625 = vpop.f32.mrf.mxu0
        %v2626 = vadd.f32 0.0, %v2625
        %v2627 = vpop.f32.mrf.mxu0
        %2628 = vmatprep.mubr.bf16.mxu0 0
        %2629 = vmatmul.mubr.bf16.gmra.mxu0 %v2524
        %v2630 = vpop.f32.mrf.mxu0
        %v2631 = vadd.f32 0.0, %v2630
        %v2632 = vpop.f32.mrf.mxu0
        %v2633 = vpop.f32.mrf.mxu0
        %v2634 = vadd.f32 0.0, %v2633
        %v2635 = vpop.f32.mrf.mxu0
        %2636 = vmatprep.mubr.bf16.mxu0 0
        %2637 = vmatmul.mubr.bf16.gmra.mxu0 %v2527
        %v2638 = vpop.f32.mrf.mxu0
        %v2639 = vadd.f32 0.0, %v2638
        %v2640 = vpop.f32.mrf.mxu0
        %v2641 = vpop.f32.mrf.mxu0
        %v2642 = vadd.f32 0.0, %v2641
        %v2643 = vpop.f32.mrf.mxu0
        %2644 = vmatprep.mubr.bf16.mxu0 0
        %2645 = vmatmul.mubr.bf16.gmra.mxu0 %v2530
        %v2646 = vpop.f32.mrf.mxu0
        %v2647 = vadd.f32 0.0, %v2646
        %v2648 = vpop.f32.mrf.mxu0
        %v2649 = vpop.f32.mrf.mxu0
        %v2650 = vadd.f32 0.0, %v2649
        %v2651 = vpop.f32.mrf.mxu0
        %2652 = vmatprep.mubr.bf16.mxu0 0
        %2653 = vmatmul.mubr.bf16.gmra.mxu0 %v2533
        %v2654 = vpop.f32.mrf.mxu0
        %v2655 = vadd.f32 0.0, %v2654
        %v2656 = vpop.f32.mrf.mxu0
        %v2657 = vpop.f32.mrf.mxu0
        %v2658 = vadd.f32 0.0, %v2657
        %v2659 = vpop.f32.mrf.mxu0
        %2660 = vmatprep.mubr.bf16.mxu0 0
        %2661 = vmatmul.mubr.bf16.gmra.mxu0 %v2536
        %v2662 = vpop.f32.mrf.mxu0
        %v2663 = vadd.f32 0.0, %v2662
        %v2664 = vpop.f32.mrf.mxu0
        %v2665 = vpop.f32.mrf.mxu0
        %v2666 = vadd.f32 0.0, %v2665
        %v2667 = vpop.f32.mrf.mxu0
        %2668 = vmatprep.mubr.bf16.mxu0 0
        %2669 = vmatmul.mubr.bf16.gmra.mxu0 %v2539
        %v2670 = vpop.f32.mrf.mxu0
        %v2671 = vadd.f32 0.0, %v2670
        %v2672 = vpop.f32.mrf.mxu0
        %v2673 = vpop.f32.mrf.mxu0
        %v2674 = vadd.f32 0.0, %v2673
        %v2675 = vpop.f32.mrf.mxu0
        %2676 = vmatprep.mubr.bf16.mxu0 0
        %2677 = vmatmul.mubr.bf16.gmra.mxu0 %v2542
        %v2678 = vpop.f32.mrf.mxu0
        %v2679 = vadd.f32 0.0, %v2678
        %v2680 = vpop.f32.mrf.mxu0
        %v2681 = vpop.f32.mrf.mxu0
        %v2682 = vadd.f32 0.0, %v2681
        %v2683 = vpop.f32.mrf.mxu0
        %2684 = vmatprep.mubr.bf16.mxu0 0
        %2685 = vmatmul.mubr.bf16.gmra.mxu0 %v2545
        %v2686 = vpop.f32.mrf.mxu0
        %v2687 = vadd.f32 0.0, %v2686
        %v2688 = vpop.f32.mrf.mxu0
        %v2689 = vpop.f32.mrf.mxu0
        %v2690 = vadd.f32 0.0, %v2689
        %v2691 = vpop.f32.mrf.mxu0
        %2692 = vmatprep.mubr.bf16.mxu0 0
        %2693 = vmatmul.mubr.bf16.gmra.mxu0 %v2548
        %v2694 = vpop.f32.mrf.mxu0
        %v2695 = vadd.f32 0.0, %v2694
        %v2696 = vpop.f32.mrf.mxu0
        %v2697 = vpop.f32.mrf.mxu0
        %v2698 = vadd.f32 0.0, %v2697
        %v2699 = vpop.f32.mrf.mxu0
        %2700 = vmatprep.mubr.bf16.mxu0 0
        %2701 = vmatmul.mubr.bf16.gmra.mxu0 %v2551
        %v2702 = vpop.f32.mrf.mxu0
        %v2703 = vadd.f32 0.0, %v2702
        %v2704 = vpop.f32.mrf.mxu0
        %v2705 = vpop.f32.mrf.mxu0
        %v2706 = vadd.f32 0.0, %v2705
        %v2707 = vpop.f32.mrf.mxu0
        %2708 = vmatprep.mubr.bf16.mxu0 0
        %2709 = vmatmul.mubr.bf16.gmra.mxu0 %v2554
        %v2710 = vpop.f32.mrf.mxu0
        %v2711 = vadd.f32 0.0, %v2710
        %v2712 = vpop.f32.mrf.mxu0
        %v2713 = vpop.f32.mrf.mxu0
        %v2714 = vadd.f32 0.0, %v2713
        %v2715 = vpop.f32.mrf.mxu0
        %2716 = vdwg.mxu0
        %v2717 = vadd.f32 %v2411, %v2591
        %v2718 = vadd.f32 %v2412, %v2594
        %v2719 = vadd.f32 %v2413, %v2599
        %v2720 = vadd.f32 %v2414, %v2602
        %v2721 = vadd.f32 %v2415, %v2607
        %v2722 = vadd.f32 %v2416, %v2610
        %v2723 = vadd.f32 %v2417, %v2615
        %v2724 = vadd.f32 %v2418, %v2618
        %v2725 = vadd.f32 %v2419, %v2623
        %v2726 = vadd.f32 %v2420, %v2626
        %v2727 = vadd.f32 %v2421, %v2631
        %v2728 = vadd.f32 %v2422, %v2634
        %v2729 = vadd.f32 %v2423, %v2639
        %v2730 = vadd.f32 %v2424, %v2642
        %v2731 = vadd.f32 %v2425, %v2647
        %v2732 = vadd.f32 %v2426, %v2650
        %v2733 = vadd.f32 %v2427, %v2655
        %v2734 = vadd.f32 %v2428, %v2658
        %v2735 = vadd.f32 %v2429, %v2663
        %v2736 = vadd.f32 %v2430, %v2666
        %v2737 = vadd.f32 %v2431, %v2671
        %v2738 = vadd.f32 %v2432, %v2674
        %v2739 = vadd.f32 %v2433, %v2679
        %v2740 = vadd.f32 %v2434, %v2682
        %v2741 = vadd.f32 %v2435, %v2687
        %v2742 = vadd.f32 %v2436, %v2690
        %v2743 = vadd.f32 %v2437, %v2695
        %v2744 = vadd.f32 %v2438, %v2698
        %v2745 = vadd.f32 %v2439, %v2703
        %v2746 = vadd.f32 %v2440, %v2706
        %v2747 = vadd.f32 %v2441, %v2711
        %v2748 = vadd.f32 %v2442, %v2714
        %s2749 = scalar_lea.vmem [#allocation2], 48
        %v2750 = vld [vmem:[%s2749 + $0x7] sm:$0xff]
        %v2751 = vld [vmem:[%s2749 + $0x1f] sm:$0xff]
        %v2752 = vld [vmem:[%s2749 + $0x37] sm:$0xff]
        %v2753 = vld [vmem:[%s2749 + $0x4f] sm:$0xff]
        %v2754 = vld [vmem:[%s2749 + $0x67] sm:$0xff]
        %v2755 = vld [vmem:[%s2749 + $0x7f] sm:$0xff]
        %v2756 = vld [vmem:[%s2749 + $0x97] sm:$0xff]
        %v2757 = vld [vmem:[%s2749 + $0xaf] sm:$0xff]
        %v2758 = vld [vmem:[%s2749 + $0xf7] sm:$0xff]
        %v2759 = vld [vmem:[%s2749 + $0x10f] sm:$0xff]
        %v2760 = vld [vmem:[%s2749 + $0x127] sm:$0xff]
        %v2761 = vld [vmem:[%s2749 + $0x13f] sm:$0xff]
        %v2762 = vld [vmem:[%s2749 + $0x157] sm:$0xff]
        %v2763 = vld [vmem:[%s2749 + $0x16f] sm:$0xff]
        %v2764 = vld [vmem:[%s2749 + $0x187] sm:$0xff]
        %v2765 = vld [vmem:[%s2749 + $0x19f] sm:$0xff]
        %v2766 = vld [vmem:[%s2749 + $0x1e7] sm:$0xff]
        %v2767 = vld [vmem:[%s2749 + $0x1ff] sm:$0xff]
        %v2768 = vld [vmem:[%s2749 + $0x217] sm:$0xff]
        %v2769 = vld [vmem:[%s2749 + $0x22f] sm:$0xff]
        %v2770 = vld [vmem:[%s2749 + $0x247] sm:$0xff]
        %v2771 = vld [vmem:[%s2749 + $0x25f] sm:$0xff]
        %v2772 = vld [vmem:[%s2749 + $0x277] sm:$0xff]
        %v2773 = vld [vmem:[%s2749 + $0x28f] sm:$0xff]
        %v2774 = vld [vmem:[%s2749 + $0x2d7] sm:$0xff]
        %v2775 = vld [vmem:[%s2749 + $0x2ef] sm:$0xff]
        %v2776 = vld [vmem:[%s2749 + $0x307] sm:$0xff]
        %v2777 = vld [vmem:[%s2749 + $0x31f] sm:$0xff]
        %v2778 = vld [vmem:[%s2749 + $0x337] sm:$0xff]
        %v2779 = vld [vmem:[%s2749 + $0x34f] sm:$0xff]
        %v2780 = vld [vmem:[%s2749 + $0x367] sm:$0xff]
        %v2781 = vld [vmem:[%s2749 + $0x37f] sm:$0xff]
        %s2782 = scalar_lea.vmem %s2, 96
        %v2783 = vld [vmem:[%s2782] sm:$0xf]
        %v2784 = vld [vmem:[%s2782 + $0x4] sm:$0xf]
        %v2785 = vld [vmem:[%s2782 + $0x8] sm:$0xf]
        %v2786 = vld [vmem:[%s2782 + $0xc] sm:$0xf]
        %v2787 = vpack.c.bf16 %v2751, %v2750
        %v2788 = vpack.c.bf16 %v2753, %v2752
        %v2789 = vpack.c.bf16 %v2755, %v2754
        %v2790 = vpack.c.bf16 %v2757, %v2756
        %v2791 = vpack.c.bf16 %v2759, %v2758
        %v2792 = vpack.c.bf16 %v2761, %v2760
        %v2793 = vpack.c.bf16 %v2763, %v2762
        %v2794 = vpack.c.bf16 %v2765, %v2764
        %v2795 = vpack.c.bf16 %v2767, %v2766
        %v2796 = vpack.c.bf16 %v2769, %v2768
        %v2797 = vpack.c.bf16 %v2771, %v2770
        %v2798 = vpack.c.bf16 %v2773, %v2772
        %v2799 = vpack.c.bf16 %v2775, %v2774
        %v2800 = vpack.c.bf16 %v2777, %v2776
        %v2801 = vpack.c.bf16 %v2779, %v2778
        %v2802 = vpack.c.bf16 %v2781, %v2780
        %v2807 = vunpack.c.l.b16 %v2783
        %v2808 = vunpack.c.l.b16 %v2784
        %v2809 = vunpack.c.l.b16 %v2785
        %v2810 = vunpack.c.l.b16 %v2786
        %v2811 = vpack.c.b16 %v2808, %v2807
        %v2812 = vpack.c.b16 %v2810, %v2809
        %v2816 = vsel %vm823, %v2787, 0
        %v2819 = vsel %vm823, %v2788, 0
        %v2822 = vsel %vm823, %v2789, 0
        %v2825 = vsel %vm823, %v2790, 0
        %v2828 = vsel %vm823, %v2791, 0
        %v2831 = vsel %vm823, %v2792, 0
        %v2834 = vsel %vm823, %v2793, 0
        %v2837 = vsel %vm823, %v2794, 0
        %v2840 = vsel %vm823, %v2795, 0
        %v2843 = vsel %vm823, %v2796, 0
        %v2846 = vsel %vm823, %v2797, 0
        %v2849 = vsel %vm823, %v2798, 0
        %v2852 = vsel %vm823, %v2799, 0
        %v2855 = vsel %vm823, %v2800, 0
        %v2858 = vsel %vm823, %v2801, 0
        %v2861 = vsel %vm823, %v2802, 0
        %2863 = vmatprep.subr.bf16.mxu0 0
        %2864 = vmatpush1.bf16.msra.mxu0 0
        %2865 = vmatprep.subr.bf16.mxu0 0
        %2866 = vmatpush1.bf16.msra.mxu0 0
        %2867 = vmatprep.subr.bf16.mxu0 0
        %2868 = vmatpush1.bf16.msra.mxu0 0
        %2869 = vmatprep.subr.bf16.mxu0 0
        %2870 = vmatpush1.bf16.msra.mxu0 0
        %2871 = vmatprep.subr.bf16.mxu0 0
        %2872 = vmatpush1.bf16.msra.mxu0 0
        %2873 = vmatprep.subr.bf16.mxu0 0
        %2874 = vmatpush1.bf16.msra.mxu0 0
        %2875 = vmatprep.subr.bf16.mxu0 0
        %2876 = vmatpush1.bf16.msra.mxu0 %v2812
        %2877 = vmatprep.subr.bf16.mxu0 0
        %2878 = vmatpush1.bf16.msra.mxu0 %v2811
        %2879 = vmatprep.subr.bf16.mxu0 0
        %2880 = vmatpush2.bf16.msra.mxu0 0
        %2881 = vmatprep.subr.bf16.mxu0 0
        %2882 = vmatpush2.bf16.msra.mxu0 0
        %2883 = vmatprep.subr.bf16.mxu0 0
        %2884 = vmatpush2.bf16.msra.mxu0 0
        %2885 = vmatprep.subr.bf16.mxu0 0
        %2886 = vmatpush2.bf16.msra.mxu0 0
        %2887 = vmatprep.subr.bf16.mxu0 0
        %2888 = vmatpush2.bf16.msra.mxu0 0
        %2889 = vmatprep.subr.bf16.mxu0 0
        %2890 = vmatpush2.bf16.msra.mxu0 0
        %2891 = vmatprep.subr.bf16.mxu0 0
        %2892 = vmatpush2.bf16.msra.mxu0 0
        %2893 = vmatprep.subr.bf16.mxu0 0
        %2894 = vmatpush2.bf16.msra.mxu0 0
        %2895 = vmatprep.mubr.bf16.mxu0 0
        %2896 = vmatmul.mubr.bf16.gmra.mxu0 %v2816
        %v2897 = vpop.f32.mrf.mxu0
        %v2898 = vadd.f32 0.0, %v2897
        %v2899 = vpop.f32.mrf.mxu0
        %v2900 = vpop.f32.mrf.mxu0
        %v2901 = vadd.f32 0.0, %v2900
        %v2902 = vpop.f32.mrf.mxu0
        %2903 = vmatprep.mubr.bf16.mxu0 0
        %2904 = vmatmul.mubr.bf16.gmra.mxu0 %v2819
        %v2905 = vpop.f32.mrf.mxu0
        %v2906 = vadd.f32 0.0, %v2905
        %v2907 = vpop.f32.mrf.mxu0
        %v2908 = vpop.f32.mrf.mxu0
        %v2909 = vadd.f32 0.0, %v2908
        %v2910 = vpop.f32.mrf.mxu0
        %2911 = vmatprep.mubr.bf16.mxu0 0
        %2912 = vmatmul.mubr.bf16.gmra.mxu0 %v2822
        %v2913 = vpop.f32.mrf.mxu0
        %v2914 = vadd.f32 0.0, %v2913
        %v2915 = vpop.f32.mrf.mxu0
        %v2916 = vpop.f32.mrf.mxu0
        %v2917 = vadd.f32 0.0, %v2916
        %v2918 = vpop.f32.mrf.mxu0
        %2919 = vmatprep.mubr.bf16.mxu0 0
        %2920 = vmatmul.mubr.bf16.gmra.mxu0 %v2825
        %v2921 = vpop.f32.mrf.mxu0
        %v2922 = vadd.f32 0.0, %v2921
        %v2923 = vpop.f32.mrf.mxu0
        %v2924 = vpop.f32.mrf.mxu0
        %v2925 = vadd.f32 0.0, %v2924
        %v2926 = vpop.f32.mrf.mxu0
        %2927 = vmatprep.mubr.bf16.mxu0 0
        %2928 = vmatmul.mubr.bf16.gmra.mxu0 %v2828
        %v2929 = vpop.f32.mrf.mxu0
        %v2930 = vadd.f32 0.0, %v2929
        %v2931 = vpop.f32.mrf.mxu0
        %v2932 = vpop.f32.mrf.mxu0
        %v2933 = vadd.f32 0.0, %v2932
        %v2934 = vpop.f32.mrf.mxu0
        %2935 = vmatprep.mubr.bf16.mxu0 0
        %2936 = vmatmul.mubr.bf16.gmra.mxu0 %v2831
        %v2937 = vpop.f32.mrf.mxu0
        %v2938 = vadd.f32 0.0, %v2937
        %v2939 = vpop.f32.mrf.mxu0
        %v2940 = vpop.f32.mrf.mxu0
        %v2941 = vadd.f32 0.0, %v2940
        %v2942 = vpop.f32.mrf.mxu0
        %2943 = vmatprep.mubr.bf16.mxu0 0
        %2944 = vmatmul.mubr.bf16.gmra.mxu0 %v2834
        %v2945 = vpop.f32.mrf.mxu0
        %v2946 = vadd.f32 0.0, %v2945
        %v2947 = vpop.f32.mrf.mxu0
        %v2948 = vpop.f32.mrf.mxu0
        %v2949 = vadd.f32 0.0, %v2948
        %v2950 = vpop.f32.mrf.mxu0
        %2951 = vmatprep.mubr.bf16.mxu0 0
        %2952 = vmatmul.mubr.bf16.gmra.mxu0 %v2837
        %v2953 = vpop.f32.mrf.mxu0
        %v2954 = vadd.f32 0.0, %v2953
        %v2955 = vpop.f32.mrf.mxu0
        %v2956 = vpop.f32.mrf.mxu0
        %v2957 = vadd.f32 0.0, %v2956
        %v2958 = vpop.f32.mrf.mxu0
        %2959 = vmatprep.mubr.bf16.mxu0 0
        %2960 = vmatmul.mubr.bf16.gmra.mxu0 %v2840
        %v2961 = vpop.f32.mrf.mxu0
        %v2962 = vadd.f32 0.0, %v2961
        %v2963 = vpop.f32.mrf.mxu0
        %v2964 = vpop.f32.mrf.mxu0
        %v2965 = vadd.f32 0.0, %v2964
        %v2966 = vpop.f32.mrf.mxu0
        %2967 = vmatprep.mubr.bf16.mxu0 0
        %2968 = vmatmul.mubr.bf16.gmra.mxu0 %v2843
        %v2969 = vpop.f32.mrf.mxu0
        %v2970 = vadd.f32 0.0, %v2969
        %v2971 = vpop.f32.mrf.mxu0
        %v2972 = vpop.f32.mrf.mxu0
        %v2973 = vadd.f32 0.0, %v2972
        %v2974 = vpop.f32.mrf.mxu0
        %2975 = vmatprep.mubr.bf16.mxu0 0
        %2976 = vmatmul.mubr.bf16.gmra.mxu0 %v2846
        %v2977 = vpop.f32.mrf.mxu0
        %v2978 = vadd.f32 0.0, %v2977
        %v2979 = vpop.f32.mrf.mxu0
        %v2980 = vpop.f32.mrf.mxu0
        %v2981 = vadd.f32 0.0, %v2980
        %v2982 = vpop.f32.mrf.mxu0
        %2983 = vmatprep.mubr.bf16.mxu0 0
        %2984 = vmatmul.mubr.bf16.gmra.mxu0 %v2849
        %v2985 = vpop.f32.mrf.mxu0
        %v2986 = vadd.f32 0.0, %v2985
        %v2987 = vpop.f32.mrf.mxu0
        %v2988 = vpop.f32.mrf.mxu0
        %v2989 = vadd.f32 0.0, %v2988
        %v2990 = vpop.f32.mrf.mxu0
        %2991 = vmatprep.mubr.bf16.mxu0 0
        %2992 = vmatmul.mubr.bf16.gmra.mxu0 %v2852
        %v2993 = vpop.f32.mrf.mxu0
        %v2994 = vadd.f32 0.0, %v2993
        %v2995 = vpop.f32.mrf.mxu0
        %v2996 = vpop.f32.mrf.mxu0
        %v2997 = vadd.f32 0.0, %v2996
        %v2998 = vpop.f32.mrf.mxu0
        %2999 = vmatprep.mubr.bf16.mxu0 0
        %3000 = vmatmul.mubr.bf16.gmra.mxu0 %v2855
        %v3001 = vpop.f32.mrf.mxu0
        %v3002 = vadd.f32 0.0, %v3001
        %v3003 = vpop.f32.mrf.mxu0
        %v3004 = vpop.f32.mrf.mxu0
        %v3005 = vadd.f32 0.0, %v3004
        %v3006 = vpop.f32.mrf.mxu0
        %3007 = vmatprep.mubr.bf16.mxu0 0
        %3008 = vmatmul.mubr.bf16.gmra.mxu0 %v2858
        %v3009 = vpop.f32.mrf.mxu0
        %v3010 = vadd.f32 0.0, %v3009
        %v3011 = vpop.f32.mrf.mxu0
        %v3012 = vpop.f32.mrf.mxu0
        %v3013 = vadd.f32 0.0, %v3012
        %v3014 = vpop.f32.mrf.mxu0
        %3015 = vmatprep.mubr.bf16.mxu0 0
        %3016 = vmatmul.mubr.bf16.gmra.mxu0 %v2861
        %v3017 = vpop.f32.mrf.mxu0
        %v3018 = vadd.f32 0.0, %v3017
        %v3019 = vpop.f32.mrf.mxu0
        %v3020 = vpop.f32.mrf.mxu0
        %v3021 = vadd.f32 0.0, %v3020
        %v3022 = vpop.f32.mrf.mxu0
        %3023 = vdwg.mxu0
        %v3024 = vadd.f32 %v2717, %v2898
        %v3025 = vadd.f32 %v2718, %v2901
        %v3026 = vadd.f32 %v2719, %v2906
        %v3027 = vadd.f32 %v2720, %v2909
        %v3028 = vadd.f32 %v2721, %v2914
        %v3029 = vadd.f32 %v2722, %v2917
        %v3030 = vadd.f32 %v2723, %v2922
        %v3031 = vadd.f32 %v2724, %v2925
        %v3032 = vadd.f32 %v2725, %v2930
        %v3033 = vadd.f32 %v2726, %v2933
        %v3034 = vadd.f32 %v2727, %v2938
        %v3035 = vadd.f32 %v2728, %v2941
        %v3036 = vadd.f32 %v2729, %v2946
        %v3037 = vadd.f32 %v2730, %v2949
        %v3038 = vadd.f32 %v2731, %v2954
        %v3039 = vadd.f32 %v2732, %v2957
        %v3040 = vadd.f32 %v2733, %v2962
        %v3041 = vadd.f32 %v2734, %v2965
        %v3042 = vadd.f32 %v2735, %v2970
        %v3043 = vadd.f32 %v2736, %v2973
        %v3044 = vadd.f32 %v2737, %v2978
        %v3045 = vadd.f32 %v2738, %v2981
        %v3046 = vadd.f32 %v2739, %v2986
        %v3047 = vadd.f32 %v2740, %v2989
        %v3048 = vadd.f32 %v2741, %v2994
        %v3049 = vadd.f32 %v2742, %v2997
        %v3050 = vadd.f32 %v2743, %v3002
        %v3051 = vadd.f32 %v2744, %v3005
        %v3052 = vadd.f32 %v2745, %v3010
        %v3053 = vadd.f32 %v2746, %v3013
        %v3054 = vadd.f32 %v2747, %v3018
        %v3055 = vadd.f32 %v2748, %v3021
        %v3056 = vld [vmem:[%s2749 + $0x8] sm:$0xff]
        %v3057 = vld [vmem:[%s2749 + $0x20] sm:$0xff]
        %v3058 = vld [vmem:[%s2749 + $0x38] sm:$0xff]
        %v3059 = vld [vmem:[%s2749 + $0x50] sm:$0xff]
        %v3060 = vld [vmem:[%s2749 + $0x68] sm:$0xff]
        %v3061 = vld [vmem:[%s2749 + $0x80] sm:$0xff]
        %v3062 = vld [vmem:[%s2749 + $0x98] sm:$0xff]
        %v3063 = vld [vmem:[%s2749 + $0xb0] sm:$0xff]
        %v3064 = vld [vmem:[%s2749 + $0xf8] sm:$0xff]
        %v3065 = vld [vmem:[%s2749 + $0x110] sm:$0xff]
        %v3066 = vld [vmem:[%s2749 + $0x128] sm:$0xff]
        %v3067 = vld [vmem:[%s2749 + $0x140] sm:$0xff]
        %v3068 = vld [vmem:[%s2749 + $0x158] sm:$0xff]
        %v3069 = vld [vmem:[%s2749 + $0x170] sm:$0xff]
        %v3070 = vld [vmem:[%s2749 + $0x188] sm:$0xff]
        %v3071 = vld [vmem:[%s2749 + $0x1a0] sm:$0xff]
        %v3072 = vld [vmem:[%s2749 + $0x1e8] sm:$0xff]
        %v3073 = vld [vmem:[%s2749 + $0x200] sm:$0xff]
        %v3074 = vld [vmem:[%s2749 + $0x218] sm:$0xff]
        %v3075 = vld [vmem:[%s2749 + $0x230] sm:$0xff]
        %v3076 = vld [vmem:[%s2749 + $0x248] sm:$0xff]
        %v3077 = vld [vmem:[%s2749 + $0x260] sm:$0xff]
        %v3078 = vld [vmem:[%s2749 + $0x278] sm:$0xff]
        %v3079 = vld [vmem:[%s2749 + $0x290] sm:$0xff]
        %v3080 = vld [vmem:[%s2749 + $0x2d8] sm:$0xff]
        %v3081 = vld [vmem:[%s2749 + $0x2f0] sm:$0xff]
        %v3082 = vld [vmem:[%s2749 + $0x308] sm:$0xff]
        %v3083 = vld [vmem:[%s2749 + $0x320] sm:$0xff]
        %v3084 = vld [vmem:[%s2749 + $0x338] sm:$0xff]
        %v3085 = vld [vmem:[%s2749 + $0x350] sm:$0xff]
        %v3086 = vld [vmem:[%s2749 + $0x368] sm:$0xff]
        %v3087 = vld [vmem:[%s2749 + $0x380] sm:$0xff]
        %s3088 = scalar_lea.vmem %s2, 112
        %v3089 = vld [vmem:[%s3088] sm:$0xf]
        %v3090 = vld [vmem:[%s3088 + $0x4] sm:$0xf]
        %v3091 = vld [vmem:[%s3088 + $0x8] sm:$0xf]
        %v3092 = vld [vmem:[%s3088 + $0xc] sm:$0xf]
        %v3093 = vpack.c.bf16 %v3057, %v3056
        %v3094 = vpack.c.bf16 %v3059, %v3058
        %v3095 = vpack.c.bf16 %v3061, %v3060
        %v3096 = vpack.c.bf16 %v3063, %v3062
        %v3097 = vpack.c.bf16 %v3065, %v3064
        %v3098 = vpack.c.bf16 %v3067, %v3066
        %v3099 = vpack.c.bf16 %v3069, %v3068
        %v3100 = vpack.c.bf16 %v3071, %v3070
        %v3101 = vpack.c.bf16 %v3073, %v3072
        %v3102 = vpack.c.bf16 %v3075, %v3074
        %v3103 = vpack.c.bf16 %v3077, %v3076
        %v3104 = vpack.c.bf16 %v3079, %v3078
        %v3105 = vpack.c.bf16 %v3081, %v3080
        %v3106 = vpack.c.bf16 %v3083, %v3082
        %v3107 = vpack.c.bf16 %v3085, %v3084
        %v3108 = vpack.c.bf16 %v3087, %v3086
        %v3113 = vunpack.c.l.b16 %v3089
        %v3114 = vunpack.c.l.b16 %v3090
        %v3115 = vunpack.c.l.b16 %v3091
        %v3116 = vunpack.c.l.b16 %v3092
        %v3117 = vpack.c.b16 %v3114, %v3113
        %v3118 = vpack.c.b16 %v3116, %v3115
        %v3122 = vsel %vm823, %v3093, 0
        %v3125 = vsel %vm823, %v3094, 0
        %v3128 = vsel %vm823, %v3095, 0
        %v3131 = vsel %vm823, %v3096, 0
        %v3134 = vsel %vm823, %v3097, 0
        %v3137 = vsel %vm823, %v3098, 0
        %v3140 = vsel %vm823, %v3099, 0
        %v3143 = vsel %vm823, %v3100, 0
        %v3146 = vsel %vm823, %v3101, 0
        %v3149 = vsel %vm823, %v3102, 0
        %v3152 = vsel %vm823, %v3103, 0
        %v3155 = vsel %vm823, %v3104, 0
        %v3158 = vsel %vm823, %v3105, 0
        %v3161 = vsel %vm823, %v3106, 0
        %v3164 = vsel %vm823, %v3107, 0
        %v3167 = vsel %vm823, %v3108, 0
        %3169 = vmatprep.subr.bf16.mxu0 0
        %3170 = vmatpush1.bf16.msra.mxu0 0
        %3171 = vmatprep.subr.bf16.mxu0 0
        %3172 = vmatpush1.bf16.msra.mxu0 0
        %3173 = vmatprep.subr.bf16.mxu0 0
        %3174 = vmatpush1.bf16.msra.mxu0 0
        %3175 = vmatprep.subr.bf16.mxu0 0
        %3176 = vmatpush1.bf16.msra.mxu0 0
        %3177 = vmatprep.subr.bf16.mxu0 0
        %3178 = vmatpush1.bf16.msra.mxu0 0
        %3179 = vmatprep.subr.bf16.mxu0 0
        %3180 = vmatpush1.bf16.msra.mxu0 0
        %3181 = vmatprep.subr.bf16.mxu0 0
        %3182 = vmatpush1.bf16.msra.mxu0 %v3118
        %3183 = vmatprep.subr.bf16.mxu0 0
        %3184 = vmatpush1.bf16.msra.mxu0 %v3117
        %3185 = vmatprep.subr.bf16.mxu0 0
        %3186 = vmatpush2.bf16.msra.mxu0 0
        %3187 = vmatprep.subr.bf16.mxu0 0
        %3188 = vmatpush2.bf16.msra.mxu0 0
        %3189 = vmatprep.subr.bf16.mxu0 0
        %3190 = vmatpush2.bf16.msra.mxu0 0
        %3191 = vmatprep.subr.bf16.mxu0 0
        %3192 = vmatpush2.bf16.msra.mxu0 0
        %3193 = vmatprep.subr.bf16.mxu0 0
        %3194 = vmatpush2.bf16.msra.mxu0 0
        %3195 = vmatprep.subr.bf16.mxu0 0
        %3196 = vmatpush2.bf16.msra.mxu0 0
        %3197 = vmatprep.subr.bf16.mxu0 0
        %3198 = vmatpush2.bf16.msra.mxu0 0
        %3199 = vmatprep.subr.bf16.mxu0 0
        %3200 = vmatpush2.bf16.msra.mxu0 0
        %3201 = vmatprep.mubr.bf16.mxu0 0
        %3202 = vmatmul.mubr.bf16.gmra.mxu0 %v3122
        %v3203 = vpop.f32.mrf.mxu0
        %v3204 = vadd.f32 0.0, %v3203
        %v3205 = vpop.f32.mrf.mxu0
        %v3206 = vpop.f32.mrf.mxu0
        %v3207 = vadd.f32 0.0, %v3206
        %v3208 = vpop.f32.mrf.mxu0
        %3209 = vmatprep.mubr.bf16.mxu0 0
        %3210 = vmatmul.mubr.bf16.gmra.mxu0 %v3125
        %v3211 = vpop.f32.mrf.mxu0
        %v3212 = vadd.f32 0.0, %v3211
        %v3213 = vpop.f32.mrf.mxu0
        %v3214 = vpop.f32.mrf.mxu0
        %v3215 = vadd.f32 0.0, %v3214
        %v3216 = vpop.f32.mrf.mxu0
        %3217 = vmatprep.mubr.bf16.mxu0 0
        %3218 = vmatmul.mubr.bf16.gmra.mxu0 %v3128
        %v3219 = vpop.f32.mrf.mxu0
        %v3220 = vadd.f32 0.0, %v3219
        %v3221 = vpop.f32.mrf.mxu0
        %v3222 = vpop.f32.mrf.mxu0
        %v3223 = vadd.f32 0.0, %v3222
        %v3224 = vpop.f32.mrf.mxu0
        %3225 = vmatprep.mubr.bf16.mxu0 0
        %3226 = vmatmul.mubr.bf16.gmra.mxu0 %v3131
        %v3227 = vpop.f32.mrf.mxu0
        %v3228 = vadd.f32 0.0, %v3227
        %v3229 = vpop.f32.mrf.mxu0
        %v3230 = vpop.f32.mrf.mxu0
        %v3231 = vadd.f32 0.0, %v3230
        %v3232 = vpop.f32.mrf.mxu0
        %3233 = vmatprep.mubr.bf16.mxu0 0
        %3234 = vmatmul.mubr.bf16.gmra.mxu0 %v3134
        %v3235 = vpop.f32.mrf.mxu0
        %v3236 = vadd.f32 0.0, %v3235
        %v3237 = vpop.f32.mrf.mxu0
        %v3238 = vpop.f32.mrf.mxu0
        %v3239 = vadd.f32 0.0, %v3238
        %v3240 = vpop.f32.mrf.mxu0
        %3241 = vmatprep.mubr.bf16.mxu0 0
        %3242 = vmatmul.mubr.bf16.gmra.mxu0 %v3137
        %v3243 = vpop.f32.mrf.mxu0
        %v3244 = vadd.f32 0.0, %v3243
        %v3245 = vpop.f32.mrf.mxu0
        %v3246 = vpop.f32.mrf.mxu0
        %v3247 = vadd.f32 0.0, %v3246
        %v3248 = vpop.f32.mrf.mxu0
        %3249 = vmatprep.mubr.bf16.mxu0 0
        %3250 = vmatmul.mubr.bf16.gmra.mxu0 %v3140
        %v3251 = vpop.f32.mrf.mxu0
        %v3252 = vadd.f32 0.0, %v3251
        %v3253 = vpop.f32.mrf.mxu0
        %v3254 = vpop.f32.mrf.mxu0
        %v3255 = vadd.f32 0.0, %v3254
        %v3256 = vpop.f32.mrf.mxu0
        %3257 = vmatprep.mubr.bf16.mxu0 0
        %3258 = vmatmul.mubr.bf16.gmra.mxu0 %v3143
        %v3259 = vpop.f32.mrf.mxu0
        %v3260 = vadd.f32 0.0, %v3259
        %v3261 = vpop.f32.mrf.mxu0
        %v3262 = vpop.f32.mrf.mxu0
        %v3263 = vadd.f32 0.0, %v3262
        %v3264 = vpop.f32.mrf.mxu0
        %3265 = vmatprep.mubr.bf16.mxu0 0
        %3266 = vmatmul.mubr.bf16.gmra.mxu0 %v3146
        %v3267 = vpop.f32.mrf.mxu0
        %v3268 = vadd.f32 0.0, %v3267
        %v3269 = vpop.f32.mrf.mxu0
        %v3270 = vpop.f32.mrf.mxu0
        %v3271 = vadd.f32 0.0, %v3270
        %v3272 = vpop.f32.mrf.mxu0
        %3273 = vmatprep.mubr.bf16.mxu0 0
        %3274 = vmatmul.mubr.bf16.gmra.mxu0 %v3149
        %v3275 = vpop.f32.mrf.mxu0
        %v3276 = vadd.f32 0.0, %v3275
        %v3277 = vpop.f32.mrf.mxu0
        %v3278 = vpop.f32.mrf.mxu0
        %v3279 = vadd.f32 0.0, %v3278
        %v3280 = vpop.f32.mrf.mxu0
        %3281 = vmatprep.mubr.bf16.mxu0 0
        %3282 = vmatmul.mubr.bf16.gmra.mxu0 %v3152
        %v3283 = vpop.f32.mrf.mxu0
        %v3284 = vadd.f32 0.0, %v3283
        %v3285 = vpop.f32.mrf.mxu0
        %v3286 = vpop.f32.mrf.mxu0
        %v3287 = vadd.f32 0.0, %v3286
        %v3288 = vpop.f32.mrf.mxu0
        %3289 = vmatprep.mubr.bf16.mxu0 0
        %3290 = vmatmul.mubr.bf16.gmra.mxu0 %v3155
        %v3291 = vpop.f32.mrf.mxu0
        %v3292 = vadd.f32 0.0, %v3291
        %v3293 = vpop.f32.mrf.mxu0
        %v3294 = vpop.f32.mrf.mxu0
        %v3295 = vadd.f32 0.0, %v3294
        %v3296 = vpop.f32.mrf.mxu0
        %3297 = vmatprep.mubr.bf16.mxu0 0
        %3298 = vmatmul.mubr.bf16.gmra.mxu0 %v3158
        %v3299 = vpop.f32.mrf.mxu0
        %v3300 = vadd.f32 0.0, %v3299
        %v3301 = vpop.f32.mrf.mxu0
        %v3302 = vpop.f32.mrf.mxu0
        %v3303 = vadd.f32 0.0, %v3302
        %v3304 = vpop.f32.mrf.mxu0
        %3305 = vmatprep.mubr.bf16.mxu0 0
        %3306 = vmatmul.mubr.bf16.gmra.mxu0 %v3161
        %v3307 = vpop.f32.mrf.mxu0
        %v3308 = vadd.f32 0.0, %v3307
        %v3309 = vpop.f32.mrf.mxu0
        %v3310 = vpop.f32.mrf.mxu0
        %v3311 = vadd.f32 0.0, %v3310
        %v3312 = vpop.f32.mrf.mxu0
        %3313 = vmatprep.mubr.bf16.mxu0 0
        %3314 = vmatmul.mubr.bf16.gmra.mxu0 %v3164
        %v3315 = vpop.f32.mrf.mxu0
        %v3316 = vadd.f32 0.0, %v3315
        %v3317 = vpop.f32.mrf.mxu0
        %v3318 = vpop.f32.mrf.mxu0
        %v3319 = vadd.f32 0.0, %v3318
        %v3320 = vpop.f32.mrf.mxu0
        %3321 = vmatprep.mubr.bf16.mxu0 0
        %3322 = vmatmul.mubr.bf16.gmra.mxu0 %v3167
        %v3323 = vpop.f32.mrf.mxu0
        %v3324 = vadd.f32 0.0, %v3323
        %v3325 = vpop.f32.mrf.mxu0
        %v3326 = vpop.f32.mrf.mxu0
        %v3327 = vadd.f32 0.0, %v3326
        %v3328 = vpop.f32.mrf.mxu0
        %3329 = vdwg.mxu0
        %v3330 = vadd.f32 %v3024, %v3204
        %v3331 = vadd.f32 %v3025, %v3207
        %v3332 = vadd.f32 %v3026, %v3212
        %v3333 = vadd.f32 %v3027, %v3215
        %v3334 = vadd.f32 %v3028, %v3220
        %v3335 = vadd.f32 %v3029, %v3223
        %v3336 = vadd.f32 %v3030, %v3228
        %v3337 = vadd.f32 %v3031, %v3231
        %v3338 = vadd.f32 %v3032, %v3236
        %v3339 = vadd.f32 %v3033, %v3239
        %v3340 = vadd.f32 %v3034, %v3244
        %v3341 = vadd.f32 %v3035, %v3247
        %v3342 = vadd.f32 %v3036, %v3252
        %v3343 = vadd.f32 %v3037, %v3255
        %v3344 = vadd.f32 %v3038, %v3260
        %v3345 = vadd.f32 %v3039, %v3263
        %v3346 = vadd.f32 %v3040, %v3268
        %v3347 = vadd.f32 %v3041, %v3271
        %v3348 = vadd.f32 %v3042, %v3276
        %v3349 = vadd.f32 %v3043, %v3279
        %v3350 = vadd.f32 %v3044, %v3284
        %v3351 = vadd.f32 %v3045, %v3287
        %v3352 = vadd.f32 %v3046, %v3292
        %v3353 = vadd.f32 %v3047, %v3295
        %v3354 = vadd.f32 %v3048, %v3300
        %v3355 = vadd.f32 %v3049, %v3303
        %v3356 = vadd.f32 %v3050, %v3308
        %v3357 = vadd.f32 %v3051, %v3311
        %v3358 = vadd.f32 %v3052, %v3316
        %v3359 = vadd.f32 %v3053, %v3319
        %v3360 = vadd.f32 %v3054, %v3324
        %v3361 = vadd.f32 %v3055, %v3327
        %v3362 = vld [vmem:[%s2749 + $0x9] sm:$0xff]
        %v3363 = vld [vmem:[%s2749 + $0x21] sm:$0xff]
        %v3364 = vld [vmem:[%s2749 + $0x39] sm:$0xff]
        %v3365 = vld [vmem:[%s2749 + $0x51] sm:$0xff]
        %v3366 = vld [vmem:[%s2749 + $0x69] sm:$0xff]
        %v3367 = vld [vmem:[%s2749 + $0x81] sm:$0xff]
        %v3368 = vld [vmem:[%s2749 + $0x99] sm:$0xff]
        %v3369 = vld [vmem:[%s2749 + $0xb1] sm:$0xff]
        %v3370 = vld [vmem:[%s2749 + $0xf9] sm:$0xff]
        %v3371 = vld [vmem:[%s2749 + $0x111] sm:$0xff]
        %v3372 = vld [vmem:[%s2749 + $0x129] sm:$0xff]
        %v3373 = vld [vmem:[%s2749 + $0x141] sm:$0xff]
        %v3374 = vld [vmem:[%s2749 + $0x159] sm:$0xff]
        %v3375 = vld [vmem:[%s2749 + $0x171] sm:$0xff]
        %v3376 = vld [vmem:[%s2749 + $0x189] sm:$0xff]
        %v3377 = vld [vmem:[%s2749 + $0x1a1] sm:$0xff]
        %v3378 = vld [vmem:[%s2749 + $0x1e9] sm:$0xff]
        %v3379 = vld [vmem:[%s2749 + $0x201] sm:$0xff]
        %v3380 = vld [vmem:[%s2749 + $0x219] sm:$0xff]
        %v3381 = vld [vmem:[%s2749 + $0x231] sm:$0xff]
        %v3382 = vld [vmem:[%s2749 + $0x249] sm:$0xff]
        %v3383 = vld [vmem:[%s2749 + $0x261] sm:$0xff]
        %v3384 = vld [vmem:[%s2749 + $0x279] sm:$0xff]
        %v3385 = vld [vmem:[%s2749 + $0x291] sm:$0xff]
        %v3386 = vld [vmem:[%s2749 + $0x2d9] sm:$0xff]
        %v3387 = vld [vmem:[%s2749 + $0x2f1] sm:$0xff]
        %v3388 = vld [vmem:[%s2749 + $0x309] sm:$0xff]
        %v3389 = vld [vmem:[%s2749 + $0x321] sm:$0xff]
        %v3390 = vld [vmem:[%s2749 + $0x339] sm:$0xff]
        %v3391 = vld [vmem:[%s2749 + $0x351] sm:$0xff]
        %v3392 = vld [vmem:[%s2749 + $0x369] sm:$0xff]
        %v3393 = vld [vmem:[%s2749 + $0x381] sm:$0xff]
        %s3394 = scalar_lea.vmem %s2, 128
        %v3395 = vld [vmem:[%s3394] sm:$0xf]
        %v3396 = vld [vmem:[%s3394 + $0x4] sm:$0xf]
        %v3397 = vld [vmem:[%s3394 + $0x8] sm:$0xf]
        %v3398 = vld [vmem:[%s3394 + $0xc] sm:$0xf]
        %v3399 = vpack.c.bf16 %v3363, %v3362
        %v3400 = vpack.c.bf16 %v3365, %v3364
        %v3401 = vpack.c.bf16 %v3367, %v3366
        %v3402 = vpack.c.bf16 %v3369, %v3368
        %v3403 = vpack.c.bf16 %v3371, %v3370
        %v3404 = vpack.c.bf16 %v3373, %v3372
        %v3405 = vpack.c.bf16 %v3375, %v3374
        %v3406 = vpack.c.bf16 %v3377, %v3376
        %v3407 = vpack.c.bf16 %v3379, %v3378
        %v3408 = vpack.c.bf16 %v3381, %v3380
        %v3409 = vpack.c.bf16 %v3383, %v3382
        %v3410 = vpack.c.bf16 %v3385, %v3384
        %v3411 = vpack.c.bf16 %v3387, %v3386
        %v3412 = vpack.c.bf16 %v3389, %v3388
        %v3413 = vpack.c.bf16 %v3391, %v3390
        %v3414 = vpack.c.bf16 %v3393, %v3392
        %v3419 = vunpack.c.l.b16 %v3395
        %v3420 = vunpack.c.l.b16 %v3396
        %v3421 = vunpack.c.l.b16 %v3397
        %v3422 = vunpack.c.l.b16 %v3398
        %v3423 = vpack.c.b16 %v3420, %v3419
        %v3424 = vpack.c.b16 %v3422, %v3421
        %v3428 = vsel %vm823, %v3399, 0
        %v3431 = vsel %vm823, %v3400, 0
        %v3434 = vsel %vm823, %v3401, 0
        %v3437 = vsel %vm823, %v3402, 0
        %v3440 = vsel %vm823, %v3403, 0
        %v3443 = vsel %vm823, %v3404, 0
        %v3446 = vsel %vm823, %v3405, 0
        %v3449 = vsel %vm823, %v3406, 0
        %v3452 = vsel %vm823, %v3407, 0
        %v3455 = vsel %vm823, %v3408, 0
        %v3458 = vsel %vm823, %v3409, 0
        %v3461 = vsel %vm823, %v3410, 0
        %v3464 = vsel %vm823, %v3411, 0
        %v3467 = vsel %vm823, %v3412, 0
        %v3470 = vsel %vm823, %v3413, 0
        %v3473 = vsel %vm823, %v3414, 0
        %3475 = vmatprep.subr.bf16.mxu0 0
        %3476 = vmatpush1.bf16.msra.mxu0 0
        %3477 = vmatprep.subr.bf16.mxu0 0
        %3478 = vmatpush1.bf16.msra.mxu0 0
        %3479 = vmatprep.subr.bf16.mxu0 0
        %3480 = vmatpush1.bf16.msra.mxu0 0
        %3481 = vmatprep.subr.bf16.mxu0 0
        %3482 = vmatpush1.bf16.msra.mxu0 0
        %3483 = vmatprep.subr.bf16.mxu0 0
        %3484 = vmatpush1.bf16.msra.mxu0 0
        %3485 = vmatprep.subr.bf16.mxu0 0
        %3486 = vmatpush1.bf16.msra.mxu0 0
        %3487 = vmatprep.subr.bf16.mxu0 0
        %3488 = vmatpush1.bf16.msra.mxu0 %v3424
        %3489 = vmatprep.subr.bf16.mxu0 0
        %3490 = vmatpush1.bf16.msra.mxu0 %v3423
        %3491 = vmatprep.subr.bf16.mxu0 0
        %3492 = vmatpush2.bf16.msra.mxu0 0
        %3493 = vmatprep.subr.bf16.mxu0 0
        %3494 = vmatpush2.bf16.msra.mxu0 0
        %3495 = vmatprep.subr.bf16.mxu0 0
        %3496 = vmatpush2.bf16.msra.mxu0 0
        %3497 = vmatprep.subr.bf16.mxu0 0
        %3498 = vmatpush2.bf16.msra.mxu0 0
        %3499 = vmatprep.subr.bf16.mxu0 0
        %3500 = vmatpush2.bf16.msra.mxu0 0
        %3501 = vmatprep.subr.bf16.mxu0 0
        %3502 = vmatpush2.bf16.msra.mxu0 0
        %3503 = vmatprep.subr.bf16.mxu0 0
        %3504 = vmatpush2.bf16.msra.mxu0 0
        %3505 = vmatprep.subr.bf16.mxu0 0
        %3506 = vmatpush2.bf16.msra.mxu0 0
        %3507 = vmatprep.mubr.bf16.mxu0 0
        %3508 = vmatmul.mubr.bf16.gmra.mxu0 %v3428
        %v3509 = vpop.f32.mrf.mxu0
        %v3510 = vadd.f32 0.0, %v3509
        %v3511 = vpop.f32.mrf.mxu0
        %v3512 = vpop.f32.mrf.mxu0
        %v3513 = vadd.f32 0.0, %v3512
        %v3514 = vpop.f32.mrf.mxu0
        %3515 = vmatprep.mubr.bf16.mxu0 0
        %3516 = vmatmul.mubr.bf16.gmra.mxu0 %v3431
        %v3517 = vpop.f32.mrf.mxu0
        %v3518 = vadd.f32 0.0, %v3517
        %v3519 = vpop.f32.mrf.mxu0
        %v3520 = vpop.f32.mrf.mxu0
        %v3521 = vadd.f32 0.0, %v3520
        %v3522 = vpop.f32.mrf.mxu0
        %3523 = vmatprep.mubr.bf16.mxu0 0
        %3524 = vmatmul.mubr.bf16.gmra.mxu0 %v3434
        %v3525 = vpop.f32.mrf.mxu0
        %v3526 = vadd.f32 0.0, %v3525
        %v3527 = vpop.f32.mrf.mxu0
        %v3528 = vpop.f32.mrf.mxu0
        %v3529 = vadd.f32 0.0, %v3528
        %v3530 = vpop.f32.mrf.mxu0
        %3531 = vmatprep.mubr.bf16.mxu0 0
        %3532 = vmatmul.mubr.bf16.gmra.mxu0 %v3437
        %v3533 = vpop.f32.mrf.mxu0
        %v3534 = vadd.f32 0.0, %v3533
        %v3535 = vpop.f32.mrf.mxu0
        %v3536 = vpop.f32.mrf.mxu0
        %v3537 = vadd.f32 0.0, %v3536
        %v3538 = vpop.f32.mrf.mxu0
        %3539 = vmatprep.mubr.bf16.mxu0 0
        %3540 = vmatmul.mubr.bf16.gmra.mxu0 %v3440
        %v3541 = vpop.f32.mrf.mxu0
        %v3542 = vadd.f32 0.0, %v3541
        %v3543 = vpop.f32.mrf.mxu0
        %v3544 = vpop.f32.mrf.mxu0
        %v3545 = vadd.f32 0.0, %v3544
        %v3546 = vpop.f32.mrf.mxu0
        %3547 = vmatprep.mubr.bf16.mxu0 0
        %3548 = vmatmul.mubr.bf16.gmra.mxu0 %v3443
        %v3549 = vpop.f32.mrf.mxu0
        %v3550 = vadd.f32 0.0, %v3549
        %v3551 = vpop.f32.mrf.mxu0
        %v3552 = vpop.f32.mrf.mxu0
        %v3553 = vadd.f32 0.0, %v3552
        %v3554 = vpop.f32.mrf.mxu0
        %3555 = vmatprep.mubr.bf16.mxu0 0
        %3556 = vmatmul.mubr.bf16.gmra.mxu0 %v3446
        %v3557 = vpop.f32.mrf.mxu0
        %v3558 = vadd.f32 0.0, %v3557
        %v3559 = vpop.f32.mrf.mxu0
        %v3560 = vpop.f32.mrf.mxu0
        %v3561 = vadd.f32 0.0, %v3560
        %v3562 = vpop.f32.mrf.mxu0
        %3563 = vmatprep.mubr.bf16.mxu0 0
        %3564 = vmatmul.mubr.bf16.gmra.mxu0 %v3449
        %v3565 = vpop.f32.mrf.mxu0
        %v3566 = vadd.f32 0.0, %v3565
        %v3567 = vpop.f32.mrf.mxu0
        %v3568 = vpop.f32.mrf.mxu0
        %v3569 = vadd.f32 0.0, %v3568
        %v3570 = vpop.f32.mrf.mxu0
        %3571 = vmatprep.mubr.bf16.mxu0 0
        %3572 = vmatmul.mubr.bf16.gmra.mxu0 %v3452
        %v3573 = vpop.f32.mrf.mxu0
        %v3574 = vadd.f32 0.0, %v3573
        %v3575 = vpop.f32.mrf.mxu0
        %v3576 = vpop.f32.mrf.mxu0
        %v3577 = vadd.f32 0.0, %v3576
        %v3578 = vpop.f32.mrf.mxu0
        %3579 = vmatprep.mubr.bf16.mxu0 0
        %3580 = vmatmul.mubr.bf16.gmra.mxu0 %v3455
        %v3581 = vpop.f32.mrf.mxu0
        %v3582 = vadd.f32 0.0, %v3581
        %v3583 = vpop.f32.mrf.mxu0
        %v3584 = vpop.f32.mrf.mxu0
        %v3585 = vadd.f32 0.0, %v3584
        %v3586 = vpop.f32.mrf.mxu0
        %3587 = vmatprep.mubr.bf16.mxu0 0
        %3588 = vmatmul.mubr.bf16.gmra.mxu0 %v3458
        %v3589 = vpop.f32.mrf.mxu0
        %v3590 = vadd.f32 0.0, %v3589
        %v3591 = vpop.f32.mrf.mxu0
        %v3592 = vpop.f32.mrf.mxu0
        %v3593 = vadd.f32 0.0, %v3592
        %v3594 = vpop.f32.mrf.mxu0
        %3595 = vmatprep.mubr.bf16.mxu0 0
        %3596 = vmatmul.mubr.bf16.gmra.mxu0 %v3461
        %v3597 = vpop.f32.mrf.mxu0
        %v3598 = vadd.f32 0.0, %v3597
        %v3599 = vpop.f32.mrf.mxu0
        %v3600 = vpop.f32.mrf.mxu0
        %v3601 = vadd.f32 0.0, %v3600
        %v3602 = vpop.f32.mrf.mxu0
        %3603 = vmatprep.mubr.bf16.mxu0 0
        %3604 = vmatmul.mubr.bf16.gmra.mxu0 %v3464
        %v3605 = vpop.f32.mrf.mxu0
        %v3606 = vadd.f32 0.0, %v3605
        %v3607 = vpop.f32.mrf.mxu0
        %v3608 = vpop.f32.mrf.mxu0
        %v3609 = vadd.f32 0.0, %v3608
        %v3610 = vpop.f32.mrf.mxu0
        %3611 = vmatprep.mubr.bf16.mxu0 0
        %3612 = vmatmul.mubr.bf16.gmra.mxu0 %v3467
        %v3613 = vpop.f32.mrf.mxu0
        %v3614 = vadd.f32 0.0, %v3613
        %v3615 = vpop.f32.mrf.mxu0
        %v3616 = vpop.f32.mrf.mxu0
        %v3617 = vadd.f32 0.0, %v3616
        %v3618 = vpop.f32.mrf.mxu0
        %3619 = vmatprep.mubr.bf16.mxu0 0
        %3620 = vmatmul.mubr.bf16.gmra.mxu0 %v3470
        %v3621 = vpop.f32.mrf.mxu0
        %v3622 = vadd.f32 0.0, %v3621
        %v3623 = vpop.f32.mrf.mxu0
        %v3624 = vpop.f32.mrf.mxu0
        %v3625 = vadd.f32 0.0, %v3624
        %v3626 = vpop.f32.mrf.mxu0
        %3627 = vmatprep.mubr.bf16.mxu0 0
        %3628 = vmatmul.mubr.bf16.gmra.mxu0 %v3473
        %v3629 = vpop.f32.mrf.mxu0
        %v3630 = vadd.f32 0.0, %v3629
        %v3631 = vpop.f32.mrf.mxu0
        %v3632 = vpop.f32.mrf.mxu0
        %v3633 = vadd.f32 0.0, %v3632
        %v3634 = vpop.f32.mrf.mxu0
        %3635 = vdwg.mxu0
        %v3636 = vadd.f32 %v3330, %v3510
        %v3637 = vadd.f32 %v3331, %v3513
        %v3638 = vadd.f32 %v3332, %v3518
        %v3639 = vadd.f32 %v3333, %v3521
        %v3640 = vadd.f32 %v3334, %v3526
        %v3641 = vadd.f32 %v3335, %v3529
        %v3642 = vadd.f32 %v3336, %v3534
        %v3643 = vadd.f32 %v3337, %v3537
        %v3644 = vadd.f32 %v3338, %v3542
        %v3645 = vadd.f32 %v3339, %v3545
        %v3646 = vadd.f32 %v3340, %v3550
        %v3647 = vadd.f32 %v3341, %v3553
        %v3648 = vadd.f32 %v3342, %v3558
        %v3649 = vadd.f32 %v3343, %v3561
        %v3650 = vadd.f32 %v3344, %v3566
        %v3651 = vadd.f32 %v3345, %v3569
        %v3652 = vadd.f32 %v3346, %v3574
        %v3653 = vadd.f32 %v3347, %v3577
        %v3654 = vadd.f32 %v3348, %v3582
        %v3655 = vadd.f32 %v3349, %v3585
        %v3656 = vadd.f32 %v3350, %v3590
        %v3657 = vadd.f32 %v3351, %v3593
        %v3658 = vadd.f32 %v3352, %v3598
        %v3659 = vadd.f32 %v3353, %v3601
        %v3660 = vadd.f32 %v3354, %v3606
        %v3661 = vadd.f32 %v3355, %v3609
        %v3662 = vadd.f32 %v3356, %v3614
        %v3663 = vadd.f32 %v3357, %v3617
        %v3664 = vadd.f32 %v3358, %v3622
        %v3665 = vadd.f32 %v3359, %v3625
        %v3666 = vadd.f32 %v3360, %v3630
        %v3667 = vadd.f32 %v3361, %v3633
        %v3668 = vld [vmem:[%s7] sm:$0x1]
        %v3670 = vlaneseq
        %v3671 = vshrl.u32 %v3670, 7
        %v3672 = vsub.s32 0, %v3671
        %v3673 = vrot.slane %v3668, %v3672
        %v3675 = vmul.f32 %v3636, %v3673
        %v3676 = vmul.f32 %v3637, %v3673
        %v3677 = vmul.f32 %v3638, %v3673
        %v3678 = vmul.f32 %v3639, %v3673
        %v3679 = vmul.f32 %v3640, %v3673
        %v3680 = vmul.f32 %v3641, %v3673
        %v3681 = vmul.f32 %v3642, %v3673
        %v3682 = vmul.f32 %v3643, %v3673
        %v3683 = vmul.f32 %v3644, %v3673
        %v3684 = vmul.f32 %v3645, %v3673
        %v3685 = vmul.f32 %v3646, %v3673
        %v3686 = vmul.f32 %v3647, %v3673
        %v3687 = vmul.f32 %v3648, %v3673
        %v3688 = vmul.f32 %v3649, %v3673
        %v3689 = vmul.f32 %v3650, %v3673
        %v3690 = vmul.f32 %v3651, %v3673
        %v3691 = vmul.f32 %v3652, %v3673
        %v3692 = vmul.f32 %v3653, %v3673
        %v3693 = vmul.f32 %v3654, %v3673
        %v3694 = vmul.f32 %v3655, %v3673
        %v3695 = vmul.f32 %v3656, %v3673
        %v3696 = vmul.f32 %v3657, %v3673
        %v3697 = vmul.f32 %v3658, %v3673
        %v3698 = vmul.f32 %v3659, %v3673
        %v3699 = vmul.f32 %v3660, %v3673
        %v3700 = vmul.f32 %v3661, %v3673
        %v3701 = vmul.f32 %v3662, %v3673
        %v3702 = vmul.f32 %v3663, %v3673
        %v3703 = vmul.f32 %v3664, %v3673
        %v3704 = vmul.f32 %v3665, %v3673
        %v3705 = vmul.f32 %v3666, %v3673
        %v3706 = vmul.f32 %v3667, %v3673
        %v3707 = vld [vmem:[%s8] sm:$0x1]
        %v3709 = vlaneseq
        %v3710 = vshrl.u32 %v3709, 7
        %v3711 = vsub.s32 0, %v3710
        %v3712 = vrot.slane %v3707, %v3711
        %v3714 = vadd.f32 %v3675, %v3712
        %v3715 = vadd.f32 %v3676, %v3712
        %v3716 = vadd.f32 %v3677, %v3712
        %v3717 = vadd.f32 %v3678, %v3712
        %v3718 = vadd.f32 %v3679, %v3712
        %v3719 = vadd.f32 %v3680, %v3712
        %v3720 = vadd.f32 %v3681, %v3712
        %v3721 = vadd.f32 %v3682, %v3712
        %v3722 = vadd.f32 %v3683, %v3712
        %v3723 = vadd.f32 %v3684, %v3712
        %v3724 = vadd.f32 %v3685, %v3712
        %v3725 = vadd.f32 %v3686, %v3712
        %v3726 = vadd.f32 %v3687, %v3712
        %v3727 = vadd.f32 %v3688, %v3712
        %v3728 = vadd.f32 %v3689, %v3712
        %v3729 = vadd.f32 %v3690, %v3712
        %v3730 = vadd.f32 %v3691, %v3712
        %v3731 = vadd.f32 %v3692, %v3712
        %v3732 = vadd.f32 %v3693, %v3712
        %v3733 = vadd.f32 %v3694, %v3712
        %v3734 = vadd.f32 %v3695, %v3712
        %v3735 = vadd.f32 %v3696, %v3712
        %v3736 = vadd.f32 %v3697, %v3712
        %v3737 = vadd.f32 %v3698, %v3712
        %v3738 = vadd.f32 %v3699, %v3712
        %v3739 = vadd.f32 %v3700, %v3712
        %v3740 = vadd.f32 %v3701, %v3712
        %v3741 = vadd.f32 %v3702, %v3712
        %v3742 = vadd.f32 %v3703, %v3712
        %v3743 = vadd.f32 %v3704, %v3712
        %v3744 = vadd.f32 %v3705, %v3712
        %v3745 = vadd.f32 %v3706, %v3712
        %v3746 = vmax.f32 %v3714, 0.0
        %v3747 = vmax.f32 %v3715, 0.0
        %v3748 = vmax.f32 %v3716, 0.0
        %v3749 = vmax.f32 %v3717, 0.0
        %v3750 = vmax.f32 %v3718, 0.0
        %v3751 = vmax.f32 %v3719, 0.0
        %v3752 = vmax.f32 %v3720, 0.0
        %v3753 = vmax.f32 %v3721, 0.0
        %v3754 = vmax.f32 %v3722, 0.0
        %v3755 = vmax.f32 %v3723, 0.0
        %v3756 = vmax.f32 %v3724, 0.0
        %v3757 = vmax.f32 %v3725, 0.0
        %v3758 = vmax.f32 %v3726, 0.0
        %v3759 = vmax.f32 %v3727, 0.0
        %v3760 = vmax.f32 %v3728, 0.0
        %v3761 = vmax.f32 %v3729, 0.0
        %v3762 = vmax.f32 %v3730, 0.0
        %v3763 = vmax.f32 %v3731, 0.0
        %v3764 = vmax.f32 %v3732, 0.0
        %v3765 = vmax.f32 %v3733, 0.0
        %v3766 = vmax.f32 %v3734, 0.0
        %v3767 = vmax.f32 %v3735, 0.0
        %v3768 = vmax.f32 %v3736, 0.0
        %v3769 = vmax.f32 %v3737, 0.0
        %v3770 = vmax.f32 %v3738, 0.0
        %v3771 = vmax.f32 %v3739, 0.0
        %v3772 = vmax.f32 %v3740, 0.0
        %v3773 = vmax.f32 %v3741, 0.0
        %v3774 = vmax.f32 %v3742, 0.0
        %v3775 = vmax.f32 %v3743, 0.0
        %v3776 = vmax.f32 %v3744, 0.0
        %v3777 = vmax.f32 %v3745, 0.0
        %3778 = vst.msk [vmem:[#allocation3] sm:$0xff] %vm823, 0.0
        %3779 = vst.msk [vmem:[#allocation3 + $0x8] sm:$0xff] %vm823, 0.0
        %3780 = vst.msk [vmem:[#allocation3 + $0x10] sm:$0xff] %vm823, 0.0
        %3781 = vst.msk [vmem:[#allocation3 + $0x18] sm:$0xff] %vm823, 0.0
        %3782 = vst.msk [vmem:[#allocation3 + $0x20] sm:$0xff] %vm823, 0.0
        %3783 = vst.msk [vmem:[#allocation3 + $0x28] sm:$0xff] %vm823, 0.0
        %3784 = vst.msk [vmem:[#allocation3 + $0x30] sm:$0xff] %vm823, 0.0
        %3785 = vst.msk [vmem:[#allocation3 + $0x38] sm:$0xff] %vm823, 0.0
        %s3786 = scalar_lea.vmem [#allocation3], 320
        %3787 = vst.msk [vmem:[%s3786] sm:$0xff] %vm823, 0.0
        %3788 = vst.msk [vmem:[%s3786 + $0x8] sm:$0xff] %vm823, 0.0
        %3789 = vst.msk [vmem:[%s3786 + $0x10] sm:$0xff] %vm823, 0.0
        %3790 = vst.msk [vmem:[%s3786 + $0x18] sm:$0xff] %vm823, 0.0
        %3791 = vst.msk [vmem:[%s3786 + $0x20] sm:$0xff] %vm823, 0.0
        %3792 = vst.msk [vmem:[%s3786 + $0x28] sm:$0xff] %vm823, 0.0
        %3793 = vst.msk [vmem:[%s3786 + $0x30] sm:$0xff] %vm823, 0.0
        %3794 = vst.msk [vmem:[%s3786 + $0x38] sm:$0xff] %vm823, 0.0
        %s3795 = scalar_lea.vmem [#allocation3], 64
        %3796 = vst.msk [vmem:[%s3795] sm:$0xff] %vm823, %v3746
        %3797 = vst.msk [vmem:[%s3795 + $0x8] sm:$0xff] %vm823, %v3747
        %3798 = vst.msk [vmem:[%s3795 + $0x10] sm:$0xff] %vm823, %v3748
        %3799 = vst.msk [vmem:[%s3795 + $0x18] sm:$0xff] %vm823, %v3749
        %3800 = vst.msk [vmem:[%s3795 + $0x20] sm:$0xff] %vm823, %v3750
        %3801 = vst.msk [vmem:[%s3795 + $0x28] sm:$0xff] %vm823, %v3751
        %3802 = vst.msk [vmem:[%s3795 + $0x30] sm:$0xff] %vm823, %v3752
        %3803 = vst.msk [vmem:[%s3795 + $0x38] sm:$0xff] %vm823, %v3753
        %3804 = vst.msk [vmem:[%s3795 + $0x40] sm:$0xff] %vm823, %v3754
        %3805 = vst.msk [vmem:[%s3795 + $0x48] sm:$0xff] %vm823, %v3755
        %3806 = vst.msk [vmem:[%s3795 + $0x50] sm:$0xff] %vm823, %v3756
        %3807 = vst.msk [vmem:[%s3795 + $0x58] sm:$0xff] %vm823, %v3757
        %3808 = vst.msk [vmem:[%s3795 + $0x60] sm:$0xff] %vm823, %v3758
        %3809 = vst.msk [vmem:[%s3795 + $0x68] sm:$0xff] %vm823, %v3759
        %3810 = vst.msk [vmem:[%s3795 + $0x70] sm:$0xff] %vm823, %v3760
        %3811 = vst.msk [vmem:[%s3795 + $0x78] sm:$0xff] %vm823, %v3761
        %3812 = vst.msk [vmem:[%s3795 + $0x80] sm:$0xff] %vm823, %v3762
        %3813 = vst.msk [vmem:[%s3795 + $0x88] sm:$0xff] %vm823, %v3763
        %3814 = vst.msk [vmem:[%s3795 + $0x90] sm:$0xff] %vm823, %v3764
        %3815 = vst.msk [vmem:[%s3795 + $0x98] sm:$0xff] %vm823, %v3765
        %3816 = vst.msk [vmem:[%s3795 + $0xa0] sm:$0xff] %vm823, %v3766
        %3817 = vst.msk [vmem:[%s3795 + $0xa8] sm:$0xff] %vm823, %v3767
        %3818 = vst.msk [vmem:[%s3795 + $0xb0] sm:$0xff] %vm823, %v3768
        %3819 = vst.msk [vmem:[%s3795 + $0xb8] sm:$0xff] %vm823, %v3769
        %3820 = vst.msk [vmem:[%s3795 + $0xc0] sm:$0xff] %vm823, %v3770
        %3821 = vst.msk [vmem:[%s3795 + $0xc8] sm:$0xff] %vm823, %v3771
        %3822 = vst.msk [vmem:[%s3795 + $0xd0] sm:$0xff] %vm823, %v3772
        %3823 = vst.msk [vmem:[%s3795 + $0xd8] sm:$0xff] %vm823, %v3773
        %3824 = vst.msk [vmem:[%s3795 + $0xe0] sm:$0xff] %vm823, %v3774
        %3825 = vst.msk [vmem:[%s3795 + $0xe8] sm:$0xff] %vm823, %v3775
        %3826 = vst.msk [vmem:[%s3795 + $0xf0] sm:$0xff] %vm823, %v3776
        %3827 = vst.msk [vmem:[%s3795 + $0xf8] sm:$0xff] %vm823, %v3777
        %v3828 = vld [vmem:[#allocation3] sm:$0xff]
        %v3829 = vld [vmem:[#allocation3 + $0x8] sm:$0xff]
        %v3830 = vld [vmem:[#allocation3 + $0x10] sm:$0xff]
        %v3831 = vld [vmem:[#allocation3 + $0x18] sm:$0xff]
        %v3832 = vld [vmem:[#allocation3 + $0x20] sm:$0xff]
        %v3833 = vld [vmem:[#allocation3 + $0x28] sm:$0xff]
        %v3834 = vld [vmem:[#allocation3 + $0x30] sm:$0xff]
        %v3835 = vld [vmem:[#allocation3 + $0x38] sm:$0xff]
        %v3836 = vld [vmem:[#allocation3 + $0x40] sm:$0xff]
        %v3837 = vld [vmem:[#allocation3 + $0x48] sm:$0xff]
        %v3838 = vld [vmem:[#allocation3 + $0x50] sm:$0xff]
        %v3839 = vld [vmem:[#allocation3 + $0x58] sm:$0xff]
        %v3840 = vld [vmem:[#allocation3 + $0x60] sm:$0xff]
        %v3841 = vld [vmem:[#allocation3 + $0x68] sm:$0xff]
        %v3842 = vld [vmem:[#allocation3 + $0x70] sm:$0xff]
        %v3843 = vld [vmem:[#allocation3 + $0x78] sm:$0xff]
        %v3844 = vld [vmem:[#allocation3 + $0x80] sm:$0xff]
        %v3845 = vld [vmem:[#allocation3 + $0x88] sm:$0xff]
        %v3846 = vld [vmem:[#allocation3 + $0x90] sm:$0xff]
        %v3847 = vld [vmem:[#allocation3 + $0x98] sm:$0xff]
        %v3848 = vld [vmem:[#allocation3 + $0xa0] sm:$0xff]
        %v3849 = vld [vmem:[#allocation3 + $0xa8] sm:$0xff]
        %v3850 = vld [vmem:[#allocation3 + $0xb0] sm:$0xff]
        %v3851 = vld [vmem:[#allocation3 + $0xb8] sm:$0xff]
        %v3852 = vld [vmem:[#allocation3 + $0xc0] sm:$0xff]
        %v3853 = vld [vmem:[#allocation3 + $0xc8] sm:$0xff]
        %v3854 = vld [vmem:[#allocation3 + $0xd0] sm:$0xff]
        %v3855 = vld [vmem:[#allocation3 + $0xd8] sm:$0xff]
        %v3856 = vld [vmem:[#allocation3 + $0xe0] sm:$0xff]
        %v3857 = vld [vmem:[#allocation3 + $0xe8] sm:$0xff]
        %v3858 = vld [vmem:[#allocation3 + $0xf0] sm:$0xff]
        %v3859 = vld [vmem:[#allocation3 + $0xf8] sm:$0xff]
        %v3860 = vld [vmem:[%s3] sm:$0xf]
        %v3861 = vld [vmem:[%s3 + $0x4] sm:$0xf]
        %v3862 = vld [vmem:[%s3 + $0x8] sm:$0xf]
        %v3863 = vld [vmem:[%s3 + $0xc] sm:$0xf]
        %v3864 = vpack.c.bf16 %v3829, %v3828
        %v3865 = vpack.c.bf16 %v3831, %v3830
        %v3866 = vpack.c.bf16 %v3833, %v3832
        %v3867 = vpack.c.bf16 %v3835, %v3834
        %v3868 = vpack.c.bf16 %v3837, %v3836
        %v3869 = vpack.c.bf16 %v3839, %v3838
        %v3870 = vpack.c.bf16 %v3841, %v3840
        %v3871 = vpack.c.bf16 %v3843, %v3842
        %v3872 = vpack.c.bf16 %v3845, %v3844
        %v3873 = vpack.c.bf16 %v3847, %v3846
        %v3874 = vpack.c.bf16 %v3849, %v3848
        %v3875 = vpack.c.bf16 %v3851, %v3850
        %v3876 = vpack.c.bf16 %v3853, %v3852
        %v3877 = vpack.c.bf16 %v3855, %v3854
        %v3878 = vpack.c.bf16 %v3857, %v3856
        %v3879 = vpack.c.bf16 %v3859, %v3858
        %v3880 = vld [vmem:[%s3795] sm:$0xff]
        %v3881 = vld [vmem:[%s3795 + $0x8] sm:$0xff]
        %v3882 = vld [vmem:[%s3795 + $0x10] sm:$0xff]
        %v3883 = vld [vmem:[%s3795 + $0x18] sm:$0xff]
        %v3884 = vld [vmem:[%s3795 + $0x20] sm:$0xff]
        %v3885 = vld [vmem:[%s3795 + $0x28] sm:$0xff]
        %v3886 = vld [vmem:[%s3795 + $0x30] sm:$0xff]
        %v3887 = vld [vmem:[%s3795 + $0x38] sm:$0xff]
        %v3888 = vld [vmem:[%s3795 + $0x40] sm:$0xff]
        %v3889 = vld [vmem:[%s3795 + $0x48] sm:$0xff]
        %v3890 = vld [vmem:[%s3795 + $0x50] sm:$0xff]
        %v3891 = vld [vmem:[%s3795 + $0x58] sm:$0xff]
        %v3892 = vld [vmem:[%s3795 + $0x60] sm:$0xff]
        %v3893 = vld [vmem:[%s3795 + $0x68] sm:$0xff]
        %v3894 = vld [vmem:[%s3795 + $0x70] sm:$0xff]
        %v3895 = vld [vmem:[%s3795 + $0x78] sm:$0xff]
        %v3896 = vld [vmem:[%s3795 + $0x80] sm:$0xff]
        %v3897 = vld [vmem:[%s3795 + $0x88] sm:$0xff]
        %v3898 = vld [vmem:[%s3795 + $0x90] sm:$0xff]
        %v3899 = vld [vmem:[%s3795 + $0x98] sm:$0xff]
        %v3900 = vld [vmem:[%s3795 + $0xa0] sm:$0xff]
        %v3901 = vld [vmem:[%s3795 + $0xa8] sm:$0xff]
        %v3902 = vld [vmem:[%s3795 + $0xb0] sm:$0xff]
        %v3903 = vld [vmem:[%s3795 + $0xb8] sm:$0xff]
        %v3904 = vld [vmem:[%s3795 + $0xc0] sm:$0xff]
        %v3905 = vld [vmem:[%s3795 + $0xc8] sm:$0xff]
        %v3906 = vld [vmem:[%s3795 + $0xd0] sm:$0xff]
        %v3907 = vld [vmem:[%s3795 + $0xd8] sm:$0xff]
        %v3908 = vld [vmem:[%s3795 + $0xe0] sm:$0xff]
        %v3909 = vld [vmem:[%s3795 + $0xe8] sm:$0xff]
        %v3910 = vld [vmem:[%s3795 + $0xf0] sm:$0xff]
        %v3911 = vld [vmem:[%s3795 + $0xf8] sm:$0xff]
        %s3912 = scalar_lea.vmem %s3, 16
        %v3913 = vld [vmem:[%s3912] sm:$0xf]
        %v3914 = vld [vmem:[%s3912 + $0x4] sm:$0xf]
        %v3915 = vld [vmem:[%s3912 + $0x8] sm:$0xf]
        %v3916 = vld [vmem:[%s3912 + $0xc] sm:$0xf]
        %v3917 = vpack.c.bf16 %v3881, %v3880
        %v3918 = vpack.c.bf16 %v3883, %v3882
        %v3919 = vpack.c.bf16 %v3885, %v3884
        %v3920 = vpack.c.bf16 %v3887, %v3886
        %v3921 = vpack.c.bf16 %v3889, %v3888
        %v3922 = vpack.c.bf16 %v3891, %v3890
        %v3923 = vpack.c.bf16 %v3893, %v3892
        %v3924 = vpack.c.bf16 %v3895, %v3894
        %v3925 = vpack.c.bf16 %v3897, %v3896
        %v3926 = vpack.c.bf16 %v3899, %v3898
        %v3927 = vpack.c.bf16 %v3901, %v3900
        %v3928 = vpack.c.bf16 %v3903, %v3902
        %v3929 = vpack.c.bf16 %v3905, %v3904
        %v3930 = vpack.c.bf16 %v3907, %v3906
        %v3931 = vpack.c.bf16 %v3909, %v3908
        %v3932 = vpack.c.bf16 %v3911, %v3910
        %v3937 = vunpack.c.l.b16 %v3913
        %v3938 = vunpack.c.l.b16 %v3914
        %v3939 = vunpack.c.l.b16 %v3915
        %v3940 = vunpack.c.l.b16 %v3916
        %v3941 = vpack.c.b16 %v3938, %v3937
        %v3942 = vpack.c.b16 %v3940, %v3939
        %v3946 = vsel %vm823, %v3917, 0
        %v3949 = vsel %vm823, %v3918, 0
        %v3952 = vsel %vm823, %v3919, 0
        %v3955 = vsel %vm823, %v3920, 0
        %v3958 = vsel %vm823, %v3921, 0
        %v3961 = vsel %vm823, %v3922, 0
        %v3964 = vsel %vm823, %v3923, 0
        %v3967 = vsel %vm823, %v3924, 0
        %v3970 = vsel %vm823, %v3925, 0
        %v3973 = vsel %vm823, %v3926, 0
        %v3976 = vsel %vm823, %v3927, 0
        %v3979 = vsel %vm823, %v3928, 0
        %v3982 = vsel %vm823, %v3929, 0
        %v3985 = vsel %vm823, %v3930, 0
        %v3988 = vsel %vm823, %v3931, 0
        %v3991 = vsel %vm823, %v3932, 0
        %3993 = vmatprep.subr.bf16.mxu0 0
        %3994 = vmatpush1.bf16.msra.mxu0 0
        %3995 = vmatprep.subr.bf16.mxu0 0
        %3996 = vmatpush1.bf16.msra.mxu0 0
        %3997 = vmatprep.subr.bf16.mxu0 0
        %3998 = vmatpush1.bf16.msra.mxu0 0
        %3999 = vmatprep.subr.bf16.mxu0 0
        %4000 = vmatpush1.bf16.msra.mxu0 0
        %4001 = vmatprep.subr.bf16.mxu0 0
        %4002 = vmatpush1.bf16.msra.mxu0 0
        %4003 = vmatprep.subr.bf16.mxu0 0
        %4004 = vmatpush1.bf16.msra.mxu0 0
        %4005 = vmatprep.subr.bf16.mxu0 0
        %4006 = vmatpush1.bf16.msra.mxu0 %v3942
        %4007 = vmatprep.subr.bf16.mxu0 0
        %4008 = vmatpush1.bf16.msra.mxu0 %v3941
        %4009 = vmatprep.subr.bf16.mxu0 0
        %4010 = vmatpush2.bf16.msra.mxu0 0
        %4011 = vmatprep.subr.bf16.mxu0 0
        %4012 = vmatpush2.bf16.msra.mxu0 0
        %4013 = vmatprep.subr.bf16.mxu0 0
        %4014 = vmatpush2.bf16.msra.mxu0 0
        %4015 = vmatprep.subr.bf16.mxu0 0
        %4016 = vmatpush2.bf16.msra.mxu0 0
        %4017 = vmatprep.subr.bf16.mxu0 0
        %4018 = vmatpush2.bf16.msra.mxu0 0
        %4019 = vmatprep.subr.bf16.mxu0 0
        %4020 = vmatpush2.bf16.msra.mxu0 0
        %4021 = vmatprep.subr.bf16.mxu0 0
        %4022 = vmatpush2.bf16.msra.mxu0 0
        %4023 = vmatprep.subr.bf16.mxu0 0
        %4024 = vmatpush2.bf16.msra.mxu0 0
        %4025 = vmatprep.mubr.bf16.mxu0 0
        %4026 = vmatmul.mubr.bf16.gmra.mxu0 %v3946
        %v4027 = vpop.f32.mrf.mxu0
        %v4028 = vadd.f32 0.0, %v4027
        %v4029 = vpop.f32.mrf.mxu0
        %v4030 = vpop.f32.mrf.mxu0
        %v4031 = vadd.f32 0.0, %v4030
        %v4032 = vpop.f32.mrf.mxu0
        %4033 = vmatprep.mubr.bf16.mxu0 0
        %4034 = vmatmul.mubr.bf16.gmra.mxu0 %v3949
        %v4035 = vpop.f32.mrf.mxu0
        %v4036 = vadd.f32 0.0, %v4035
        %v4037 = vpop.f32.mrf.mxu0
        %v4038 = vpop.f32.mrf.mxu0
        %v4039 = vadd.f32 0.0, %v4038
        %v4040 = vpop.f32.mrf.mxu0
        %4041 = vmatprep.mubr.bf16.mxu0 0
        %4042 = vmatmul.mubr.bf16.gmra.mxu0 %v3952
        %v4043 = vpop.f32.mrf.mxu0
        %v4044 = vadd.f32 0.0, %v4043
        %v4045 = vpop.f32.mrf.mxu0
        %v4046 = vpop.f32.mrf.mxu0
        %v4047 = vadd.f32 0.0, %v4046
        %v4048 = vpop.f32.mrf.mxu0
        %4049 = vmatprep.mubr.bf16.mxu0 0
        %4050 = vmatmul.mubr.bf16.gmra.mxu0 %v3955
        %v4051 = vpop.f32.mrf.mxu0
        %v4052 = vadd.f32 0.0, %v4051
        %v4053 = vpop.f32.mrf.mxu0
        %v4054 = vpop.f32.mrf.mxu0
        %v4055 = vadd.f32 0.0, %v4054
        %v4056 = vpop.f32.mrf.mxu0
        %4057 = vmatprep.mubr.bf16.mxu0 0
        %4058 = vmatmul.mubr.bf16.gmra.mxu0 %v3958
        %v4059 = vpop.f32.mrf.mxu0
        %v4060 = vadd.f32 0.0, %v4059
        %v4061 = vpop.f32.mrf.mxu0
        %v4062 = vpop.f32.mrf.mxu0
        %v4063 = vadd.f32 0.0, %v4062
        %v4064 = vpop.f32.mrf.mxu0
        %4065 = vmatprep.mubr.bf16.mxu0 0
        %4066 = vmatmul.mubr.bf16.gmra.mxu0 %v3961
        %v4067 = vpop.f32.mrf.mxu0
        %v4068 = vadd.f32 0.0, %v4067
        %v4069 = vpop.f32.mrf.mxu0
        %v4070 = vpop.f32.mrf.mxu0
        %v4071 = vadd.f32 0.0, %v4070
        %v4072 = vpop.f32.mrf.mxu0
        %4073 = vmatprep.mubr.bf16.mxu0 0
        %4074 = vmatmul.mubr.bf16.gmra.mxu0 %v3964
        %v4075 = vpop.f32.mrf.mxu0
        %v4076 = vadd.f32 0.0, %v4075
        %v4077 = vpop.f32.mrf.mxu0
        %v4078 = vpop.f32.mrf.mxu0
        %v4079 = vadd.f32 0.0, %v4078
        %v4080 = vpop.f32.mrf.mxu0
        %4081 = vmatprep.mubr.bf16.mxu0 0
        %4082 = vmatmul.mubr.bf16.gmra.mxu0 %v3967
        %v4083 = vpop.f32.mrf.mxu0
        %v4084 = vadd.f32 0.0, %v4083
        %v4085 = vpop.f32.mrf.mxu0
        %v4086 = vpop.f32.mrf.mxu0
        %v4087 = vadd.f32 0.0, %v4086
        %v4088 = vpop.f32.mrf.mxu0
        %4089 = vmatprep.mubr.bf16.mxu0 0
        %4090 = vmatmul.mubr.bf16.gmra.mxu0 %v3970
        %v4091 = vpop.f32.mrf.mxu0
        %v4092 = vadd.f32 0.0, %v4091
        %v4093 = vpop.f32.mrf.mxu0
        %v4094 = vpop.f32.mrf.mxu0
        %v4095 = vadd.f32 0.0, %v4094
        %v4096 = vpop.f32.mrf.mxu0
        %4097 = vmatprep.mubr.bf16.mxu0 0
        %4098 = vmatmul.mubr.bf16.gmra.mxu0 %v3973
        %v4099 = vpop.f32.mrf.mxu0
        %v4100 = vadd.f32 0.0, %v4099
        %v4101 = vpop.f32.mrf.mxu0
        %v4102 = vpop.f32.mrf.mxu0
        %v4103 = vadd.f32 0.0, %v4102
        %v4104 = vpop.f32.mrf.mxu0
        %4105 = vmatprep.mubr.bf16.mxu0 0
        %4106 = vmatmul.mubr.bf16.gmra.mxu0 %v3976
        %v4107 = vpop.f32.mrf.mxu0
        %v4108 = vadd.f32 0.0, %v4107
        %v4109 = vpop.f32.mrf.mxu0
        %v4110 = vpop.f32.mrf.mxu0
        %v4111 = vadd.f32 0.0, %v4110
        %v4112 = vpop.f32.mrf.mxu0
        %4113 = vmatprep.mubr.bf16.mxu0 0
        %4114 = vmatmul.mubr.bf16.gmra.mxu0 %v3979
        %v4115 = vpop.f32.mrf.mxu0
        %v4116 = vadd.f32 0.0, %v4115
        %v4117 = vpop.f32.mrf.mxu0
        %v4118 = vpop.f32.mrf.mxu0
        %v4119 = vadd.f32 0.0, %v4118
        %v4120 = vpop.f32.mrf.mxu0
        %4121 = vmatprep.mubr.bf16.mxu0 0
        %4122 = vmatmul.mubr.bf16.gmra.mxu0 %v3982
        %v4123 = vpop.f32.mrf.mxu0
        %v4124 = vadd.f32 0.0, %v4123
        %v4125 = vpop.f32.mrf.mxu0
        %v4126 = vpop.f32.mrf.mxu0
        %v4127 = vadd.f32 0.0, %v4126
        %v4128 = vpop.f32.mrf.mxu0
        %4129 = vmatprep.mubr.bf16.mxu0 0
        %4130 = vmatmul.mubr.bf16.gmra.mxu0 %v3985
        %v4131 = vpop.f32.mrf.mxu0
        %v4132 = vadd.f32 0.0, %v4131
        %v4133 = vpop.f32.mrf.mxu0
        %v4134 = vpop.f32.mrf.mxu0
        %v4135 = vadd.f32 0.0, %v4134
        %v4136 = vpop.f32.mrf.mxu0
        %4137 = vmatprep.mubr.bf16.mxu0 0
        %4138 = vmatmul.mubr.bf16.gmra.mxu0 %v3988
        %v4139 = vpop.f32.mrf.mxu0
        %v4140 = vadd.f32 0.0, %v4139
        %v4141 = vpop.f32.mrf.mxu0
        %v4142 = vpop.f32.mrf.mxu0
        %v4143 = vadd.f32 0.0, %v4142
        %v4144 = vpop.f32.mrf.mxu0
        %4145 = vmatprep.mubr.bf16.mxu0 0
        %4146 = vmatmul.mubr.bf16.gmra.mxu0 %v3991
        %v4147 = vpop.f32.mrf.mxu0
        %v4148 = vadd.f32 0.0, %v4147
        %v4149 = vpop.f32.mrf.mxu0
        %v4150 = vpop.f32.mrf.mxu0
        %v4151 = vadd.f32 0.0, %v4150
        %v4152 = vpop.f32.mrf.mxu0
        %4153 = vdwg.mxu0
        %v4158 = vunpack.c.l.b16 %v3860
        %v4159 = vunpack.c.l.b16 %v3861
        %v4160 = vunpack.c.l.b16 %v3862
        %v4161 = vunpack.c.l.b16 %v3863
        %v4162 = vpack.c.b16 %v4159, %v4158
        %v4163 = vpack.c.b16 %v4161, %v4160
        %v4167 = vsel %vm823, %v3864, 0
        %v4170 = vsel %vm823, %v3865, 0
        %v4173 = vsel %vm823, %v3866, 0
        %v4176 = vsel %vm823, %v3867, 0
        %v4179 = vsel %vm823, %v3868, 0
        %v4182 = vsel %vm823, %v3869, 0
        %v4185 = vsel %vm823, %v3870, 0
        %v4188 = vsel %vm823, %v3871, 0
        %v4191 = vsel %vm823, %v3872, 0
        %v4194 = vsel %vm823, %v3873, 0
        %v4197 = vsel %vm823, %v3874, 0
        %v4200 = vsel %vm823, %v3875, 0
        %v4203 = vsel %vm823, %v3876, 0
        %v4206 = vsel %vm823, %v3877, 0
        %v4209 = vsel %vm823, %v3878, 0
        %v4212 = vsel %vm823, %v3879, 0
        %4214 = vmatprep.subr.bf16.mxu0 0
        %4215 = vmatpush1.bf16.msra.mxu0 0
        %4216 = vmatprep.subr.bf16.mxu0 0
        %4217 = vmatpush1.bf16.msra.mxu0 0
        %4218 = vmatprep.subr.bf16.mxu0 0
        %4219 = vmatpush1.bf16.msra.mxu0 0
        %4220 = vmatprep.subr.bf16.mxu0 0
        %4221 = vmatpush1.bf16.msra.mxu0 0
        %4222 = vmatprep.subr.bf16.mxu0 0
        %4223 = vmatpush1.bf16.msra.mxu0 0
        %4224 = vmatprep.subr.bf16.mxu0 0
        %4225 = vmatpush1.bf16.msra.mxu0 0
        %4226 = vmatprep.subr.bf16.mxu0 0
        %4227 = vmatpush1.bf16.msra.mxu0 %v4163
        %4228 = vmatprep.subr.bf16.mxu0 0
        %4229 = vmatpush1.bf16.msra.mxu0 %v4162
        %4230 = vmatprep.subr.bf16.mxu0 0
        %4231 = vmatpush2.bf16.msra.mxu0 0
        %4232 = vmatprep.subr.bf16.mxu0 0
        %4233 = vmatpush2.bf16.msra.mxu0 0
        %4234 = vmatprep.subr.bf16.mxu0 0
        %4235 = vmatpush2.bf16.msra.mxu0 0
        %4236 = vmatprep.subr.bf16.mxu0 0
        %4237 = vmatpush2.bf16.msra.mxu0 0
        %4238 = vmatprep.subr.bf16.mxu0 0
        %4239 = vmatpush2.bf16.msra.mxu0 0
        %4240 = vmatprep.subr.bf16.mxu0 0
        %4241 = vmatpush2.bf16.msra.mxu0 0
        %4242 = vmatprep.subr.bf16.mxu0 0
        %4243 = vmatpush2.bf16.msra.mxu0 0
        %4244 = vmatprep.subr.bf16.mxu0 0
        %4245 = vmatpush2.bf16.msra.mxu0 0
        %4246 = vmatprep.mubr.bf16.mxu0 0
        %4247 = vmatmul.mubr.bf16.gmra.mxu0 %v4167
        %v4248 = vpop.f32.mrf.mxu0
        %v4249 = vadd.f32 %v4028, %v4248
        %v4250 = vpop.f32.mrf.mxu0
        %v4251 = vpop.f32.mrf.mxu0
        %v4252 = vadd.f32 %v4031, %v4251
        %v4253 = vpop.f32.mrf.mxu0
        %4254 = vmatprep.mubr.bf16.mxu0 0
        %4255 = vmatmul.mubr.bf16.gmra.mxu0 %v4170
        %v4256 = vpop.f32.mrf.mxu0
        %v4257 = vadd.f32 %v4036, %v4256
        %v4258 = vpop.f32.mrf.mxu0
        %v4259 = vpop.f32.mrf.mxu0
        %v4260 = vadd.f32 %v4039, %v4259
        %v4261 = vpop.f32.mrf.mxu0
        %4262 = vmatprep.mubr.bf16.mxu0 0
        %4263 = vmatmul.mubr.bf16.gmra.mxu0 %v4173
        %v4264 = vpop.f32.mrf.mxu0
        %v4265 = vadd.f32 %v4044, %v4264
        %v4266 = vpop.f32.mrf.mxu0
        %v4267 = vpop.f32.mrf.mxu0
        %v4268 = vadd.f32 %v4047, %v4267
        %v4269 = vpop.f32.mrf.mxu0
        %4270 = vmatprep.mubr.bf16.mxu0 0
        %4271 = vmatmul.mubr.bf16.gmra.mxu0 %v4176
        %v4272 = vpop.f32.mrf.mxu0
        %v4273 = vadd.f32 %v4052, %v4272
        %v4274 = vpop.f32.mrf.mxu0
        %v4275 = vpop.f32.mrf.mxu0
        %v4276 = vadd.f32 %v4055, %v4275
        %v4277 = vpop.f32.mrf.mxu0
        %4278 = vmatprep.mubr.bf16.mxu0 0
        %4279 = vmatmul.mubr.bf16.gmra.mxu0 %v4179
        %v4280 = vpop.f32.mrf.mxu0
        %v4281 = vadd.f32 %v4060, %v4280
        %v4282 = vpop.f32.mrf.mxu0
        %v4283 = vpop.f32.mrf.mxu0
        %v4284 = vadd.f32 %v4063, %v4283
        %v4285 = vpop.f32.mrf.mxu0
        %4286 = vmatprep.mubr.bf16.mxu0 0
        %4287 = vmatmul.mubr.bf16.gmra.mxu0 %v4182
        %v4288 = vpop.f32.mrf.mxu0
        %v4289 = vadd.f32 %v4068, %v4288
        %v4290 = vpop.f32.mrf.mxu0
        %v4291 = vpop.f32.mrf.mxu0
        %v4292 = vadd.f32 %v4071, %v4291
        %v4293 = vpop.f32.mrf.mxu0
        %4294 = vmatprep.mubr.bf16.mxu0 0
        %4295 = vmatmul.mubr.bf16.gmra.mxu0 %v4185
        %v4296 = vpop.f32.mrf.mxu0
        %v4297 = vadd.f32 %v4076, %v4296
        %v4298 = vpop.f32.mrf.mxu0
        %v4299 = vpop.f32.mrf.mxu0
        %v4300 = vadd.f32 %v4079, %v4299
        %v4301 = vpop.f32.mrf.mxu0
        %4302 = vmatprep.mubr.bf16.mxu0 0
        %4303 = vmatmul.mubr.bf16.gmra.mxu0 %v4188
        %v4304 = vpop.f32.mrf.mxu0
        %v4305 = vadd.f32 %v4084, %v4304
        %v4306 = vpop.f32.mrf.mxu0
        %v4307 = vpop.f32.mrf.mxu0
        %v4308 = vadd.f32 %v4087, %v4307
        %v4309 = vpop.f32.mrf.mxu0
        %4310 = vmatprep.mubr.bf16.mxu0 0
        %4311 = vmatmul.mubr.bf16.gmra.mxu0 %v4191
        %v4312 = vpop.f32.mrf.mxu0
        %v4313 = vadd.f32 %v4092, %v4312
        %v4314 = vpop.f32.mrf.mxu0
        %v4315 = vpop.f32.mrf.mxu0
        %v4316 = vadd.f32 %v4095, %v4315
        %v4317 = vpop.f32.mrf.mxu0
        %4318 = vmatprep.mubr.bf16.mxu0 0
        %4319 = vmatmul.mubr.bf16.gmra.mxu0 %v4194
        %v4320 = vpop.f32.mrf.mxu0
        %v4321 = vadd.f32 %v4100, %v4320
        %v4322 = vpop.f32.mrf.mxu0
        %v4323 = vpop.f32.mrf.mxu0
        %v4324 = vadd.f32 %v4103, %v4323
        %v4325 = vpop.f32.mrf.mxu0
        %4326 = vmatprep.mubr.bf16.mxu0 0
        %4327 = vmatmul.mubr.bf16.gmra.mxu0 %v4197
        %v4328 = vpop.f32.mrf.mxu0
        %v4329 = vadd.f32 %v4108, %v4328
        %v4330 = vpop.f32.mrf.mxu0
        %v4331 = vpop.f32.mrf.mxu0
        %v4332 = vadd.f32 %v4111, %v4331
        %v4333 = vpop.f32.mrf.mxu0
        %4334 = vmatprep.mubr.bf16.mxu0 0
        %4335 = vmatmul.mubr.bf16.gmra.mxu0 %v4200
        %v4336 = vpop.f32.mrf.mxu0
        %v4337 = vadd.f32 %v4116, %v4336
        %v4338 = vpop.f32.mrf.mxu0
        %v4339 = vpop.f32.mrf.mxu0
        %v4340 = vadd.f32 %v4119, %v4339
        %v4341 = vpop.f32.mrf.mxu0
        %4342 = vmatprep.mubr.bf16.mxu0 0
        %4343 = vmatmul.mubr.bf16.gmra.mxu0 %v4203
        %v4344 = vpop.f32.mrf.mxu0
        %v4345 = vadd.f32 %v4124, %v4344
        %v4346 = vpop.f32.mrf.mxu0
        %v4347 = vpop.f32.mrf.mxu0
        %v4348 = vadd.f32 %v4127, %v4347
        %v4349 = vpop.f32.mrf.mxu0
        %4350 = vmatprep.mubr.bf16.mxu0 0
        %4351 = vmatmul.mubr.bf16.gmra.mxu0 %v4206
        %v4352 = vpop.f32.mrf.mxu0
        %v4353 = vadd.f32 %v4132, %v4352
        %v4354 = vpop.f32.mrf.mxu0
        %v4355 = vpop.f32.mrf.mxu0
        %v4356 = vadd.f32 %v4135, %v4355
        %v4357 = vpop.f32.mrf.mxu0
        %4358 = vmatprep.mubr.bf16.mxu0 0
        %4359 = vmatmul.mubr.bf16.gmra.mxu0 %v4209
        %v4360 = vpop.f32.mrf.mxu0
        %v4361 = vadd.f32 %v4140, %v4360
        %v4362 = vpop.f32.mrf.mxu0
        %v4363 = vpop.f32.mrf.mxu0
        %v4364 = vadd.f32 %v4143, %v4363
        %v4365 = vpop.f32.mrf.mxu0
        %4366 = vmatprep.mubr.bf16.mxu0 0
        %4367 = vmatmul.mubr.bf16.gmra.mxu0 %v4212
        %v4368 = vpop.f32.mrf.mxu0
        %v4369 = vadd.f32 %v4148, %v4368
        %v4370 = vpop.f32.mrf.mxu0
        %v4371 = vpop.f32.mrf.mxu0
        %v4372 = vadd.f32 %v4151, %v4371
        %v4373 = vpop.f32.mrf.mxu0
        %4374 = vdwg.mxu0
        %s4375 = scalar_lea.vmem [#allocation3], 128
        %v4376 = vld [vmem:[%s4375] sm:$0xff]
        %v4377 = vld [vmem:[%s4375 + $0x8] sm:$0xff]
        %v4378 = vld [vmem:[%s4375 + $0x10] sm:$0xff]
        %v4379 = vld [vmem:[%s4375 + $0x18] sm:$0xff]
        %v4380 = vld [vmem:[%s4375 + $0x20] sm:$0xff]
        %v4381 = vld [vmem:[%s4375 + $0x28] sm:$0xff]
        %v4382 = vld [vmem:[%s4375 + $0x30] sm:$0xff]
        %v4383 = vld [vmem:[%s4375 + $0x38] sm:$0xff]
        %v4384 = vld [vmem:[%s4375 + $0x40] sm:$0xff]
        %v4385 = vld [vmem:[%s4375 + $0x48] sm:$0xff]
        %v4386 = vld [vmem:[%s4375 + $0x50] sm:$0xff]
        %v4387 = vld [vmem:[%s4375 + $0x58] sm:$0xff]
        %v4388 = vld [vmem:[%s4375 + $0x60] sm:$0xff]
        %v4389 = vld [vmem:[%s4375 + $0x68] sm:$0xff]
        %v4390 = vld [vmem:[%s4375 + $0x70] sm:$0xff]
        %v4391 = vld [vmem:[%s4375 + $0x78] sm:$0xff]
        %v4392 = vld [vmem:[%s4375 + $0x80] sm:$0xff]
        %v4393 = vld [vmem:[%s4375 + $0x88] sm:$0xff]
        %v4394 = vld [vmem:[%s4375 + $0x90] sm:$0xff]
        %v4395 = vld [vmem:[%s4375 + $0x98] sm:$0xff]
        %v4396 = vld [vmem:[%s4375 + $0xa0] sm:$0xff]
        %v4397 = vld [vmem:[%s4375 + $0xa8] sm:$0xff]
        %v4398 = vld [vmem:[%s4375 + $0xb0] sm:$0xff]
        %v4399 = vld [vmem:[%s4375 + $0xb8] sm:$0xff]
        %v4400 = vld [vmem:[%s4375 + $0xc0] sm:$0xff]
        %v4401 = vld [vmem:[%s4375 + $0xc8] sm:$0xff]
        %v4402 = vld [vmem:[%s4375 + $0xd0] sm:$0xff]
        %v4403 = vld [vmem:[%s4375 + $0xd8] sm:$0xff]
        %v4404 = vld [vmem:[%s4375 + $0xe0] sm:$0xff]
        %v4405 = vld [vmem:[%s4375 + $0xe8] sm:$0xff]
        %v4406 = vld [vmem:[%s4375 + $0xf0] sm:$0xff]
        %v4407 = vld [vmem:[%s4375 + $0xf8] sm:$0xff]
        %s4408 = scalar_lea.vmem %s3, 32
        %v4409 = vld [vmem:[%s4408] sm:$0xf]
        %v4410 = vld [vmem:[%s4408 + $0x4] sm:$0xf]
        %v4411 = vld [vmem:[%s4408 + $0x8] sm:$0xf]
        %v4412 = vld [vmem:[%s4408 + $0xc] sm:$0xf]
        %v4413 = vpack.c.bf16 %v4377, %v4376
        %v4414 = vpack.c.bf16 %v4379, %v4378
        %v4415 = vpack.c.bf16 %v4381, %v4380
        %v4416 = vpack.c.bf16 %v4383, %v4382
        %v4417 = vpack.c.bf16 %v4385, %v4384
        %v4418 = vpack.c.bf16 %v4387, %v4386
        %v4419 = vpack.c.bf16 %v4389, %v4388
        %v4420 = vpack.c.bf16 %v4391, %v4390
        %v4421 = vpack.c.bf16 %v4393, %v4392
        %v4422 = vpack.c.bf16 %v4395, %v4394
        %v4423 = vpack.c.bf16 %v4397, %v4396
        %v4424 = vpack.c.bf16 %v4399, %v4398
        %v4425 = vpack.c.bf16 %v4401, %v4400
        %v4426 = vpack.c.bf16 %v4403, %v4402
        %v4427 = vpack.c.bf16 %v4405, %v4404
        %v4428 = vpack.c.bf16 %v4407, %v4406
        %v4433 = vunpack.c.l.b16 %v4409
        %v4434 = vunpack.c.l.b16 %v4410
        %v4435 = vunpack.c.l.b16 %v4411
        %v4436 = vunpack.c.l.b16 %v4412
        %v4437 = vpack.c.b16 %v4434, %v4433
        %v4438 = vpack.c.b16 %v4436, %v4435
        %v4442 = vsel %vm823, %v4413, 0
        %v4445 = vsel %vm823, %v4414, 0
        %v4448 = vsel %vm823, %v4415, 0
        %v4451 = vsel %vm823, %v4416, 0
        %v4454 = vsel %vm823, %v4417, 0
        %v4457 = vsel %vm823, %v4418, 0
        %v4460 = vsel %vm823, %v4419, 0
        %v4463 = vsel %vm823, %v4420, 0
        %v4466 = vsel %vm823, %v4421, 0
        %v4469 = vsel %vm823, %v4422, 0
        %v4472 = vsel %vm823, %v4423, 0
        %v4475 = vsel %vm823, %v4424, 0
        %v4478 = vsel %vm823, %v4425, 0
        %v4481 = vsel %vm823, %v4426, 0
        %v4484 = vsel %vm823, %v4427, 0
        %v4487 = vsel %vm823, %v4428, 0
        %4489 = vmatprep.subr.bf16.mxu0 0
        %4490 = vmatpush1.bf16.msra.mxu0 0
        %4491 = vmatprep.subr.bf16.mxu0 0
        %4492 = vmatpush1.bf16.msra.mxu0 0
        %4493 = vmatprep.subr.bf16.mxu0 0
        %4494 = vmatpush1.bf16.msra.mxu0 0
        %4495 = vmatprep.subr.bf16.mxu0 0
        %4496 = vmatpush1.bf16.msra.mxu0 0
        %4497 = vmatprep.subr.bf16.mxu0 0
        %4498 = vmatpush1.bf16.msra.mxu0 0
        %4499 = vmatprep.subr.bf16.mxu0 0
        %4500 = vmatpush1.bf16.msra.mxu0 0
        %4501 = vmatprep.subr.bf16.mxu0 0
        %4502 = vmatpush1.bf16.msra.mxu0 %v4438
        %4503 = vmatprep.subr.bf16.mxu0 0
        %4504 = vmatpush1.bf16.msra.mxu0 %v4437
        %4505 = vmatprep.subr.bf16.mxu0 0
        %4506 = vmatpush2.bf16.msra.mxu0 0
        %4507 = vmatprep.subr.bf16.mxu0 0
        %4508 = vmatpush2.bf16.msra.mxu0 0
        %4509 = vmatprep.subr.bf16.mxu0 0
        %4510 = vmatpush2.bf16.msra.mxu0 0
        %4511 = vmatprep.subr.bf16.mxu0 0
        %4512 = vmatpush2.bf16.msra.mxu0 0
        %4513 = vmatprep.subr.bf16.mxu0 0
        %4514 = vmatpush2.bf16.msra.mxu0 0
        %4515 = vmatprep.subr.bf16.mxu0 0
        %4516 = vmatpush2.bf16.msra.mxu0 0
        %4517 = vmatprep.subr.bf16.mxu0 0
        %4518 = vmatpush2.bf16.msra.mxu0 0
        %4519 = vmatprep.subr.bf16.mxu0 0
        %4520 = vmatpush2.bf16.msra.mxu0 0
        %4521 = vmatprep.mubr.bf16.mxu0 0
        %4522 = vmatmul.mubr.bf16.gmra.mxu0 %v4442
        %v4523 = vpop.f32.mrf.mxu0
        %v4524 = vadd.f32 0.0, %v4523
        %v4525 = vpop.f32.mrf.mxu0
        %v4526 = vpop.f32.mrf.mxu0
        %v4527 = vadd.f32 0.0, %v4526
        %v4528 = vpop.f32.mrf.mxu0
        %4529 = vmatprep.mubr.bf16.mxu0 0
        %4530 = vmatmul.mubr.bf16.gmra.mxu0 %v4445
        %v4531 = vpop.f32.mrf.mxu0
        %v4532 = vadd.f32 0.0, %v4531
        %v4533 = vpop.f32.mrf.mxu0
        %v4534 = vpop.f32.mrf.mxu0
        %v4535 = vadd.f32 0.0, %v4534
        %v4536 = vpop.f32.mrf.mxu0
        %4537 = vmatprep.mubr.bf16.mxu0 0
        %4538 = vmatmul.mubr.bf16.gmra.mxu0 %v4448
        %v4539 = vpop.f32.mrf.mxu0
        %v4540 = vadd.f32 0.0, %v4539
        %v4541 = vpop.f32.mrf.mxu0
        %v4542 = vpop.f32.mrf.mxu0
        %v4543 = vadd.f32 0.0, %v4542
        %v4544 = vpop.f32.mrf.mxu0
        %4545 = vmatprep.mubr.bf16.mxu0 0
        %4546 = vmatmul.mubr.bf16.gmra.mxu0 %v4451
        %v4547 = vpop.f32.mrf.mxu0
        %v4548 = vadd.f32 0.0, %v4547
        %v4549 = vpop.f32.mrf.mxu0
        %v4550 = vpop.f32.mrf.mxu0
        %v4551 = vadd.f32 0.0, %v4550
        %v4552 = vpop.f32.mrf.mxu0
        %4553 = vmatprep.mubr.bf16.mxu0 0
        %4554 = vmatmul.mubr.bf16.gmra.mxu0 %v4454
        %v4555 = vpop.f32.mrf.mxu0
        %v4556 = vadd.f32 0.0, %v4555
        %v4557 = vpop.f32.mrf.mxu0
        %v4558 = vpop.f32.mrf.mxu0
        %v4559 = vadd.f32 0.0, %v4558
        %v4560 = vpop.f32.mrf.mxu0
        %4561 = vmatprep.mubr.bf16.mxu0 0
        %4562 = vmatmul.mubr.bf16.gmra.mxu0 %v4457
        %v4563 = vpop.f32.mrf.mxu0
        %v4564 = vadd.f32 0.0, %v4563
        %v4565 = vpop.f32.mrf.mxu0
        %v4566 = vpop.f32.mrf.mxu0
        %v4567 = vadd.f32 0.0, %v4566
        %v4568 = vpop.f32.mrf.mxu0
        %4569 = vmatprep.mubr.bf16.mxu0 0
        %4570 = vmatmul.mubr.bf16.gmra.mxu0 %v4460
        %v4571 = vpop.f32.mrf.mxu0
        %v4572 = vadd.f32 0.0, %v4571
        %v4573 = vpop.f32.mrf.mxu0
        %v4574 = vpop.f32.mrf.mxu0
        %v4575 = vadd.f32 0.0, %v4574
        %v4576 = vpop.f32.mrf.mxu0
        %4577 = vmatprep.mubr.bf16.mxu0 0
        %4578 = vmatmul.mubr.bf16.gmra.mxu0 %v4463
        %v4579 = vpop.f32.mrf.mxu0
        %v4580 = vadd.f32 0.0, %v4579
        %v4581 = vpop.f32.mrf.mxu0
        %v4582 = vpop.f32.mrf.mxu0
        %v4583 = vadd.f32 0.0, %v4582
        %v4584 = vpop.f32.mrf.mxu0
        %4585 = vmatprep.mubr.bf16.mxu0 0
        %4586 = vmatmul.mubr.bf16.gmra.mxu0 %v4466
        %v4587 = vpop.f32.mrf.mxu0
        %v4588 = vadd.f32 0.0, %v4587
        %v4589 = vpop.f32.mrf.mxu0
        %v4590 = vpop.f32.mrf.mxu0
        %v4591 = vadd.f32 0.0, %v4590
        %v4592 = vpop.f32.mrf.mxu0
        %4593 = vmatprep.mubr.bf16.mxu0 0
        %4594 = vmatmul.mubr.bf16.gmra.mxu0 %v4469
        %v4595 = vpop.f32.mrf.mxu0
        %v4596 = vadd.f32 0.0, %v4595
        %v4597 = vpop.f32.mrf.mxu0
        %v4598 = vpop.f32.mrf.mxu0
        %v4599 = vadd.f32 0.0, %v4598
        %v4600 = vpop.f32.mrf.mxu0
        %4601 = vmatprep.mubr.bf16.mxu0 0
        %4602 = vmatmul.mubr.bf16.gmra.mxu0 %v4472
        %v4603 = vpop.f32.mrf.mxu0
        %v4604 = vadd.f32 0.0, %v4603
        %v4605 = vpop.f32.mrf.mxu0
        %v4606 = vpop.f32.mrf.mxu0
        %v4607 = vadd.f32 0.0, %v4606
        %v4608 = vpop.f32.mrf.mxu0
        %4609 = vmatprep.mubr.bf16.mxu0 0
        %4610 = vmatmul.mubr.bf16.gmra.mxu0 %v4475
        %v4611 = vpop.f32.mrf.mxu0
        %v4612 = vadd.f32 0.0, %v4611
        %v4613 = vpop.f32.mrf.mxu0
        %v4614 = vpop.f32.mrf.mxu0
        %v4615 = vadd.f32 0.0, %v4614
        %v4616 = vpop.f32.mrf.mxu0
        %4617 = vmatprep.mubr.bf16.mxu0 0
        %4618 = vmatmul.mubr.bf16.gmra.mxu0 %v4478
        %v4619 = vpop.f32.mrf.mxu0
        %v4620 = vadd.f32 0.0, %v4619
        %v4621 = vpop.f32.mrf.mxu0
        %v4622 = vpop.f32.mrf.mxu0
        %v4623 = vadd.f32 0.0, %v4622
        %v4624 = vpop.f32.mrf.mxu0
        %4625 = vmatprep.mubr.bf16.mxu0 0
        %4626 = vmatmul.mubr.bf16.gmra.mxu0 %v4481
        %v4627 = vpop.f32.mrf.mxu0
        %v4628 = vadd.f32 0.0, %v4627
        %v4629 = vpop.f32.mrf.mxu0
        %v4630 = vpop.f32.mrf.mxu0
        %v4631 = vadd.f32 0.0, %v4630
        %v4632 = vpop.f32.mrf.mxu0
        %4633 = vmatprep.mubr.bf16.mxu0 0
        %4634 = vmatmul.mubr.bf16.gmra.mxu0 %v4484
        %v4635 = vpop.f32.mrf.mxu0
        %v4636 = vadd.f32 0.0, %v4635
        %v4637 = vpop.f32.mrf.mxu0
        %v4638 = vpop.f32.mrf.mxu0
        %v4639 = vadd.f32 0.0, %v4638
        %v4640 = vpop.f32.mrf.mxu0
        %4641 = vmatprep.mubr.bf16.mxu0 0
        %4642 = vmatmul.mubr.bf16.gmra.mxu0 %v4487
        %v4643 = vpop.f32.mrf.mxu0
        %v4644 = vadd.f32 0.0, %v4643
        %v4645 = vpop.f32.mrf.mxu0
        %v4646 = vpop.f32.mrf.mxu0
        %v4647 = vadd.f32 0.0, %v4646
        %v4648 = vpop.f32.mrf.mxu0
        %4649 = vdwg.mxu0
        %v4650 = vadd.f32 %v4249, %v4524
        %v4651 = vadd.f32 %v4252, %v4527
        %v4652 = vadd.f32 %v4257, %v4532
        %v4653 = vadd.f32 %v4260, %v4535
        %v4654 = vadd.f32 %v4265, %v4540
        %v4655 = vadd.f32 %v4268, %v4543
        %v4656 = vadd.f32 %v4273, %v4548
        %v4657 = vadd.f32 %v4276, %v4551
        %v4658 = vadd.f32 %v4281, %v4556
        %v4659 = vadd.f32 %v4284, %v4559
        %v4660 = vadd.f32 %v4289, %v4564
        %v4661 = vadd.f32 %v4292, %v4567
        %v4662 = vadd.f32 %v4297, %v4572
        %v4663 = vadd.f32 %v4300, %v4575
        %v4664 = vadd.f32 %v4305, %v4580
        %v4665 = vadd.f32 %v4308, %v4583
        %v4666 = vadd.f32 %v4313, %v4588
        %v4667 = vadd.f32 %v4316, %v4591
        %v4668 = vadd.f32 %v4321, %v4596
        %v4669 = vadd.f32 %v4324, %v4599
        %v4670 = vadd.f32 %v4329, %v4604
        %v4671 = vadd.f32 %v4332, %v4607
        %v4672 = vadd.f32 %v4337, %v4612
        %v4673 = vadd.f32 %v4340, %v4615
        %v4674 = vadd.f32 %v4345, %v4620
        %v4675 = vadd.f32 %v4348, %v4623
        %v4676 = vadd.f32 %v4353, %v4628
        %v4677 = vadd.f32 %v4356, %v4631
        %v4678 = vadd.f32 %v4361, %v4636
        %v4679 = vadd.f32 %v4364, %v4639
        %v4680 = vadd.f32 %v4369, %v4644
        %v4681 = vadd.f32 %v4372, %v4647
        %v4682 = vld [vmem:[%s9] sm:$0x1]
        %v4684 = vlaneseq
        %v4685 = vshrl.u32 %v4684, 7
        %v4686 = vsub.s32 0, %v4685
        %v4687 = vrot.slane %v4682, %v4686
        %v4689 = vmul.f32 %v4650, %v4687
        %v4690 = vmul.f32 %v4651, %v4687
        %v4691 = vmul.f32 %v4652, %v4687
        %v4692 = vmul.f32 %v4653, %v4687
        %v4693 = vmul.f32 %v4654, %v4687
        %v4694 = vmul.f32 %v4655, %v4687
        %v4695 = vmul.f32 %v4656, %v4687
        %v4696 = vmul.f32 %v4657, %v4687
        %v4697 = vmul.f32 %v4658, %v4687
        %v4698 = vmul.f32 %v4659, %v4687
        %v4699 = vmul.f32 %v4660, %v4687
        %v4700 = vmul.f32 %v4661, %v4687
        %v4701 = vmul.f32 %v4662, %v4687
        %v4702 = vmul.f32 %v4663, %v4687
        %v4703 = vmul.f32 %v4664, %v4687
        %v4704 = vmul.f32 %v4665, %v4687
        %v4705 = vmul.f32 %v4666, %v4687
        %v4706 = vmul.f32 %v4667, %v4687
        %v4707 = vmul.f32 %v4668, %v4687
        %v4708 = vmul.f32 %v4669, %v4687
        %v4709 = vmul.f32 %v4670, %v4687
        %v4710 = vmul.f32 %v4671, %v4687
        %v4711 = vmul.f32 %v4672, %v4687
        %v4712 = vmul.f32 %v4673, %v4687
        %v4713 = vmul.f32 %v4674, %v4687
        %v4714 = vmul.f32 %v4675, %v4687
        %v4715 = vmul.f32 %v4676, %v4687
        %v4716 = vmul.f32 %v4677, %v4687
        %v4717 = vmul.f32 %v4678, %v4687
        %v4718 = vmul.f32 %v4679, %v4687
        %v4719 = vmul.f32 %v4680, %v4687
        %v4720 = vmul.f32 %v4681, %v4687
        %v4721 = vld [vmem:[%s10] sm:$0x1]
        %v4723 = vlaneseq
        %v4724 = vshrl.u32 %v4723, 7
        %v4725 = vsub.s32 0, %v4724
        %v4726 = vrot.slane %v4721, %v4725
        %v4728 = vadd.f32 %v4689, %v4726
        %v4729 = vadd.f32 %v4690, %v4726
        %v4730 = vadd.f32 %v4691, %v4726
        %v4731 = vadd.f32 %v4692, %v4726
        %v4732 = vadd.f32 %v4693, %v4726
        %v4733 = vadd.f32 %v4694, %v4726
        %v4734 = vadd.f32 %v4695, %v4726
        %v4735 = vadd.f32 %v4696, %v4726
        %v4736 = vadd.f32 %v4697, %v4726
        %v4737 = vadd.f32 %v4698, %v4726
        %v4738 = vadd.f32 %v4699, %v4726
        %v4739 = vadd.f32 %v4700, %v4726
        %v4740 = vadd.f32 %v4701, %v4726
        %v4741 = vadd.f32 %v4702, %v4726
        %v4742 = vadd.f32 %v4703, %v4726
        %v4743 = vadd.f32 %v4704, %v4726
        %v4744 = vadd.f32 %v4705, %v4726
        %v4745 = vadd.f32 %v4706, %v4726
        %v4746 = vadd.f32 %v4707, %v4726
        %v4747 = vadd.f32 %v4708, %v4726
        %v4748 = vadd.f32 %v4709, %v4726
        %v4749 = vadd.f32 %v4710, %v4726
        %v4750 = vadd.f32 %v4711, %v4726
        %v4751 = vadd.f32 %v4712, %v4726
        %v4752 = vadd.f32 %v4713, %v4726
        %v4753 = vadd.f32 %v4714, %v4726
        %v4754 = vadd.f32 %v4715, %v4726
        %v4755 = vadd.f32 %v4716, %v4726
        %v4756 = vadd.f32 %v4717, %v4726
        %v4757 = vadd.f32 %v4718, %v4726
        %v4758 = vadd.f32 %v4719, %v4726
        %v4759 = vadd.f32 %v4720, %v4726
        %v4760 = vmax.f32 %v4728, 0.0
        %v4761 = vmax.f32 %v4729, 0.0
        %v4762 = vmax.f32 %v4730, 0.0
        %v4763 = vmax.f32 %v4731, 0.0
        %v4764 = vmax.f32 %v4732, 0.0
        %v4765 = vmax.f32 %v4733, 0.0
        %v4766 = vmax.f32 %v4734, 0.0
        %v4767 = vmax.f32 %v4735, 0.0
        %v4768 = vmax.f32 %v4736, 0.0
        %v4769 = vmax.f32 %v4737, 0.0
        %v4770 = vmax.f32 %v4738, 0.0
        %v4771 = vmax.f32 %v4739, 0.0
        %v4772 = vmax.f32 %v4740, 0.0
        %v4773 = vmax.f32 %v4741, 0.0
        %v4774 = vmax.f32 %v4742, 0.0
        %v4775 = vmax.f32 %v4743, 0.0
        %v4776 = vmax.f32 %v4744, 0.0
        %v4777 = vmax.f32 %v4745, 0.0
        %v4778 = vmax.f32 %v4746, 0.0
        %v4779 = vmax.f32 %v4747, 0.0
        %v4780 = vmax.f32 %v4748, 0.0
        %v4781 = vmax.f32 %v4749, 0.0
        %v4782 = vmax.f32 %v4750, 0.0
        %v4783 = vmax.f32 %v4751, 0.0
        %v4784 = vmax.f32 %v4752, 0.0
        %v4785 = vmax.f32 %v4753, 0.0
        %v4786 = vmax.f32 %v4754, 0.0
        %v4787 = vmax.f32 %v4755, 0.0
        %v4788 = vmax.f32 %v4756, 0.0
        %v4789 = vmax.f32 %v4757, 0.0
        %v4790 = vmax.f32 %v4758, 0.0
        %v4791 = vmax.f32 %v4759, 0.0
        %v4792 = vld [vmem:[%s438] sm:$0xff]
        %v4793 = vld [vmem:[%s438 + $0x8] sm:$0xff]
        %v4794 = vld [vmem:[%s438 + $0x10] sm:$0xff]
        %v4795 = vld [vmem:[%s438 + $0x18] sm:$0xff]
        %v4796 = vld [vmem:[%s438 + $0x20] sm:$0xff]
        %v4797 = vld [vmem:[%s438 + $0x28] sm:$0xff]
        %v4798 = vld [vmem:[%s438 + $0x30] sm:$0xff]
        %v4799 = vld [vmem:[%s438 + $0x38] sm:$0xff]
        %v4800 = vld [vmem:[%s438 + $0x40] sm:$0xff]
        %v4801 = vld [vmem:[%s438 + $0x48] sm:$0xff]
        %v4802 = vld [vmem:[%s438 + $0x50] sm:$0xff]
        %v4803 = vld [vmem:[%s438 + $0x58] sm:$0xff]
        %v4804 = vld [vmem:[%s438 + $0x60] sm:$0xff]
        %v4805 = vld [vmem:[%s438 + $0x68] sm:$0xff]
        %v4806 = vld [vmem:[%s438 + $0x70] sm:$0xff]
        %v4807 = vld [vmem:[%s438 + $0x78] sm:$0xff]
        %v4808 = vld [vmem:[%s438 + $0x80] sm:$0xff]
        %v4809 = vld [vmem:[%s438 + $0x88] sm:$0xff]
        %v4810 = vld [vmem:[%s438 + $0x90] sm:$0xff]
        %v4811 = vld [vmem:[%s438 + $0x98] sm:$0xff]
        %v4812 = vld [vmem:[%s438 + $0xa0] sm:$0xff]
        %v4813 = vld [vmem:[%s438 + $0xa8] sm:$0xff]
        %v4814 = vld [vmem:[%s438 + $0xb0] sm:$0xff]
        %v4815 = vld [vmem:[%s438 + $0xb8] sm:$0xff]
        %v4816 = vld [vmem:[%s438 + $0xc0] sm:$0xff]
        %v4817 = vld [vmem:[%s438 + $0xc8] sm:$0xff]
        %v4818 = vld [vmem:[%s438 + $0xd0] sm:$0xff]
        %v4819 = vld [vmem:[%s438 + $0xd8] sm:$0xff]
        %v4820 = vld [vmem:[%s438 + $0xe0] sm:$0xff]
        %v4821 = vld [vmem:[%s438 + $0xe8] sm:$0xff]
        %v4822 = vld [vmem:[%s438 + $0xf0] sm:$0xff]
        %v4823 = vld [vmem:[%s438 + $0xf8] sm:$0xff]
        %v4824 = vld [vmem:[%s4] sm:$0xf]
        %v4825 = vld [vmem:[%s4 + $0x4] sm:$0xf]
        %v4826 = vld [vmem:[%s4 + $0x8] sm:$0xf]
        %v4827 = vld [vmem:[%s4 + $0xc] sm:$0xf]
        %v4828 = vpack.c.bf16 %v4761, %v4760
        %v4829 = vpack.c.bf16 %v4763, %v4762
        %v4830 = vpack.c.bf16 %v4765, %v4764
        %v4831 = vpack.c.bf16 %v4767, %v4766
        %v4832 = vpack.c.bf16 %v4769, %v4768
        %v4833 = vpack.c.bf16 %v4771, %v4770
        %v4834 = vpack.c.bf16 %v4773, %v4772
        %v4835 = vpack.c.bf16 %v4775, %v4774
        %v4836 = vpack.c.bf16 %v4777, %v4776
        %v4837 = vpack.c.bf16 %v4779, %v4778
        %v4838 = vpack.c.bf16 %v4781, %v4780
        %v4839 = vpack.c.bf16 %v4783, %v4782
        %v4840 = vpack.c.bf16 %v4785, %v4784
        %v4841 = vpack.c.bf16 %v4787, %v4786
        %v4842 = vpack.c.bf16 %v4789, %v4788
        %v4843 = vpack.c.bf16 %v4791, %v4790
        %v4848 = vunpack.c.l.b16 %v4824
        %v4849 = vunpack.c.l.b16 %v4825
        %v4850 = vunpack.c.l.b16 %v4826
        %v4851 = vunpack.c.l.b16 %v4827
        %v4852 = vpack.c.b16 %v4849, %v4848
        %v4853 = vpack.c.b16 %v4851, %v4850
        %v4857 = vsel %vm823, %v4828, 0
        %v4860 = vsel %vm823, %v4829, 0
        %v4863 = vsel %vm823, %v4830, 0
        %v4866 = vsel %vm823, %v4831, 0
        %v4869 = vsel %vm823, %v4832, 0
        %v4872 = vsel %vm823, %v4833, 0
        %v4875 = vsel %vm823, %v4834, 0
        %v4878 = vsel %vm823, %v4835, 0
        %v4881 = vsel %vm823, %v4836, 0
        %v4884 = vsel %vm823, %v4837, 0
        %v4887 = vsel %vm823, %v4838, 0
        %v4890 = vsel %vm823, %v4839, 0
        %v4893 = vsel %vm823, %v4840, 0
        %v4896 = vsel %vm823, %v4841, 0
        %v4899 = vsel %vm823, %v4842, 0
        %v4902 = vsel %vm823, %v4843, 0
        %4904 = vmatprep.subr.bf16.mxu0 0
        %4905 = vmatpush1.bf16.msra.mxu0 0
        %4906 = vmatprep.subr.bf16.mxu0 0
        %4907 = vmatpush1.bf16.msra.mxu0 0
        %4908 = vmatprep.subr.bf16.mxu0 0
        %4909 = vmatpush1.bf16.msra.mxu0 0
        %4910 = vmatprep.subr.bf16.mxu0 0
        %4911 = vmatpush1.bf16.msra.mxu0 0
        %4912 = vmatprep.subr.bf16.mxu0 0
        %4913 = vmatpush1.bf16.msra.mxu0 0
        %4914 = vmatprep.subr.bf16.mxu0 0
        %4915 = vmatpush1.bf16.msra.mxu0 0
        %4916 = vmatprep.subr.bf16.mxu0 0
        %4917 = vmatpush1.bf16.msra.mxu0 %v4853
        %4918 = vmatprep.subr.bf16.mxu0 0
        %4919 = vmatpush1.bf16.msra.mxu0 %v4852
        %4920 = vmatprep.subr.bf16.mxu0 0
        %4921 = vmatpush2.bf16.msra.mxu0 0
        %4922 = vmatprep.subr.bf16.mxu0 0
        %4923 = vmatpush2.bf16.msra.mxu0 0
        %4924 = vmatprep.subr.bf16.mxu0 0
        %4925 = vmatpush2.bf16.msra.mxu0 0
        %4926 = vmatprep.subr.bf16.mxu0 0
        %4927 = vmatpush2.bf16.msra.mxu0 0
        %4928 = vmatprep.subr.bf16.mxu0 0
        %4929 = vmatpush2.bf16.msra.mxu0 0
        %4930 = vmatprep.subr.bf16.mxu0 0
        %4931 = vmatpush2.bf16.msra.mxu0 0
        %4932 = vmatprep.subr.bf16.mxu0 0
        %4933 = vmatpush2.bf16.msra.mxu0 0
        %4934 = vmatprep.subr.bf16.mxu0 0
        %4935 = vmatpush2.bf16.msra.mxu0 0
        %4936 = vmatprep.mubr.bf16.mxu0 0
        %4937 = vmatmul.mubr.bf16.gmra.mxu0 %v4857
        %v4938 = vpop.f32.mrf.mxu0
        %v4939 = vadd.f32 0.0, %v4938
        %v4940 = vpop.f32.mrf.mxu0
        %v4941 = vpop.f32.mrf.mxu0
        %v4942 = vadd.f32 0.0, %v4941
        %v4943 = vpop.f32.mrf.mxu0
        %4944 = vmatprep.mubr.bf16.mxu0 0
        %4945 = vmatmul.mubr.bf16.gmra.mxu0 %v4860
        %v4946 = vpop.f32.mrf.mxu0
        %v4947 = vadd.f32 0.0, %v4946
        %v4948 = vpop.f32.mrf.mxu0
        %v4949 = vpop.f32.mrf.mxu0
        %v4950 = vadd.f32 0.0, %v4949
        %v4951 = vpop.f32.mrf.mxu0
        %4952 = vmatprep.mubr.bf16.mxu0 0
        %4953 = vmatmul.mubr.bf16.gmra.mxu0 %v4863
        %v4954 = vpop.f32.mrf.mxu0
        %v4955 = vadd.f32 0.0, %v4954
        %v4956 = vpop.f32.mrf.mxu0
        %v4957 = vpop.f32.mrf.mxu0
        %v4958 = vadd.f32 0.0, %v4957
        %v4959 = vpop.f32.mrf.mxu0
        %4960 = vmatprep.mubr.bf16.mxu0 0
        %4961 = vmatmul.mubr.bf16.gmra.mxu0 %v4866
        %v4962 = vpop.f32.mrf.mxu0
        %v4963 = vadd.f32 0.0, %v4962
        %v4964 = vpop.f32.mrf.mxu0
        %v4965 = vpop.f32.mrf.mxu0
        %v4966 = vadd.f32 0.0, %v4965
        %v4967 = vpop.f32.mrf.mxu0
        %4968 = vmatprep.mubr.bf16.mxu0 0
        %4969 = vmatmul.mubr.bf16.gmra.mxu0 %v4869
        %v4970 = vpop.f32.mrf.mxu0
        %v4971 = vadd.f32 0.0, %v4970
        %v4972 = vpop.f32.mrf.mxu0
        %v4973 = vpop.f32.mrf.mxu0
        %v4974 = vadd.f32 0.0, %v4973
        %v4975 = vpop.f32.mrf.mxu0
        %4976 = vmatprep.mubr.bf16.mxu0 0
        %4977 = vmatmul.mubr.bf16.gmra.mxu0 %v4872
        %v4978 = vpop.f32.mrf.mxu0
        %v4979 = vadd.f32 0.0, %v4978
        %v4980 = vpop.f32.mrf.mxu0
        %v4981 = vpop.f32.mrf.mxu0
        %v4982 = vadd.f32 0.0, %v4981
        %v4983 = vpop.f32.mrf.mxu0
        %4984 = vmatprep.mubr.bf16.mxu0 0
        %4985 = vmatmul.mubr.bf16.gmra.mxu0 %v4875
        %v4986 = vpop.f32.mrf.mxu0
        %v4987 = vadd.f32 0.0, %v4986
        %v4988 = vpop.f32.mrf.mxu0
        %v4989 = vpop.f32.mrf.mxu0
        %v4990 = vadd.f32 0.0, %v4989
        %v4991 = vpop.f32.mrf.mxu0
        %4992 = vmatprep.mubr.bf16.mxu0 0
        %4993 = vmatmul.mubr.bf16.gmra.mxu0 %v4878
        %v4994 = vpop.f32.mrf.mxu0
        %v4995 = vadd.f32 0.0, %v4994
        %v4996 = vpop.f32.mrf.mxu0
        %v4997 = vpop.f32.mrf.mxu0
        %v4998 = vadd.f32 0.0, %v4997
        %v4999 = vpop.f32.mrf.mxu0
        %5000 = vmatprep.mubr.bf16.mxu0 0
        %5001 = vmatmul.mubr.bf16.gmra.mxu0 %v4881
        %v5002 = vpop.f32.mrf.mxu0
        %v5003 = vadd.f32 0.0, %v5002
        %v5004 = vpop.f32.mrf.mxu0
        %v5005 = vpop.f32.mrf.mxu0
        %v5006 = vadd.f32 0.0, %v5005
        %v5007 = vpop.f32.mrf.mxu0
        %5008 = vmatprep.mubr.bf16.mxu0 0
        %5009 = vmatmul.mubr.bf16.gmra.mxu0 %v4884
        %v5010 = vpop.f32.mrf.mxu0
        %v5011 = vadd.f32 0.0, %v5010
        %v5012 = vpop.f32.mrf.mxu0
        %v5013 = vpop.f32.mrf.mxu0
        %v5014 = vadd.f32 0.0, %v5013
        %v5015 = vpop.f32.mrf.mxu0
        %5016 = vmatprep.mubr.bf16.mxu0 0
        %5017 = vmatmul.mubr.bf16.gmra.mxu0 %v4887
        %v5018 = vpop.f32.mrf.mxu0
        %v5019 = vadd.f32 0.0, %v5018
        %v5020 = vpop.f32.mrf.mxu0
        %v5021 = vpop.f32.mrf.mxu0
        %v5022 = vadd.f32 0.0, %v5021
        %v5023 = vpop.f32.mrf.mxu0
        %5024 = vmatprep.mubr.bf16.mxu0 0
        %5025 = vmatmul.mubr.bf16.gmra.mxu0 %v4890
        %v5026 = vpop.f32.mrf.mxu0
        %v5027 = vadd.f32 0.0, %v5026
        %v5028 = vpop.f32.mrf.mxu0
        %v5029 = vpop.f32.mrf.mxu0
        %v5030 = vadd.f32 0.0, %v5029
        %v5031 = vpop.f32.mrf.mxu0
        %5032 = vmatprep.mubr.bf16.mxu0 0
        %5033 = vmatmul.mubr.bf16.gmra.mxu0 %v4893
        %v5034 = vpop.f32.mrf.mxu0
        %v5035 = vadd.f32 0.0, %v5034
        %v5036 = vpop.f32.mrf.mxu0
        %v5037 = vpop.f32.mrf.mxu0
        %v5038 = vadd.f32 0.0, %v5037
        %v5039 = vpop.f32.mrf.mxu0
        %5040 = vmatprep.mubr.bf16.mxu0 0
        %5041 = vmatmul.mubr.bf16.gmra.mxu0 %v4896
        %v5042 = vpop.f32.mrf.mxu0
        %v5043 = vadd.f32 0.0, %v5042
        %v5044 = vpop.f32.mrf.mxu0
        %v5045 = vpop.f32.mrf.mxu0
        %v5046 = vadd.f32 0.0, %v5045
        %v5047 = vpop.f32.mrf.mxu0
        %5048 = vmatprep.mubr.bf16.mxu0 0
        %5049 = vmatmul.mubr.bf16.gmra.mxu0 %v4899
        %v5050 = vpop.f32.mrf.mxu0
        %v5051 = vadd.f32 0.0, %v5050
        %v5052 = vpop.f32.mrf.mxu0
        %v5053 = vpop.f32.mrf.mxu0
        %v5054 = vadd.f32 0.0, %v5053
        %v5055 = vpop.f32.mrf.mxu0
        %5056 = vmatprep.mubr.bf16.mxu0 0
        %5057 = vmatmul.mubr.bf16.gmra.mxu0 %v4902
        %v5058 = vpop.f32.mrf.mxu0
        %v5059 = vadd.f32 0.0, %v5058
        %v5060 = vpop.f32.mrf.mxu0
        %v5061 = vpop.f32.mrf.mxu0
        %v5062 = vadd.f32 0.0, %v5061
        %v5063 = vpop.f32.mrf.mxu0
        %5064 = vdwg.mxu0
        %v5065 = vld [vmem:[%s11] sm:$0x1]
        %v5067 = vlaneseq
        %v5068 = vshrl.u32 %v5067, 7
        %v5069 = vsub.s32 0, %v5068
        %v5070 = vrot.slane %v5065, %v5069
        %v5072 = vmul.f32 %v4939, %v5070
        %v5073 = vmul.f32 %v4942, %v5070
        %v5074 = vmul.f32 %v4947, %v5070
        %v5075 = vmul.f32 %v4950, %v5070
        %v5076 = vmul.f32 %v4955, %v5070
        %v5077 = vmul.f32 %v4958, %v5070
        %v5078 = vmul.f32 %v4963, %v5070
        %v5079 = vmul.f32 %v4966, %v5070
        %v5080 = vmul.f32 %v4971, %v5070
        %v5081 = vmul.f32 %v4974, %v5070
        %v5082 = vmul.f32 %v4979, %v5070
        %v5083 = vmul.f32 %v4982, %v5070
        %v5084 = vmul.f32 %v4987, %v5070
        %v5085 = vmul.f32 %v4990, %v5070
        %v5086 = vmul.f32 %v4995, %v5070
        %v5087 = vmul.f32 %v4998, %v5070
        %v5088 = vmul.f32 %v5003, %v5070
        %v5089 = vmul.f32 %v5006, %v5070
        %v5090 = vmul.f32 %v5011, %v5070
        %v5091 = vmul.f32 %v5014, %v5070
        %v5092 = vmul.f32 %v5019, %v5070
        %v5093 = vmul.f32 %v5022, %v5070
        %v5094 = vmul.f32 %v5027, %v5070
        %v5095 = vmul.f32 %v5030, %v5070
        %v5096 = vmul.f32 %v5035, %v5070
        %v5097 = vmul.f32 %v5038, %v5070
        %v5098 = vmul.f32 %v5043, %v5070
        %v5099 = vmul.f32 %v5046, %v5070
        %v5100 = vmul.f32 %v5051, %v5070
        %v5101 = vmul.f32 %v5054, %v5070
        %v5102 = vmul.f32 %v5059, %v5070
        %v5103 = vmul.f32 %v5062, %v5070
        %v5104 = vld [vmem:[%s12] sm:$0x1]
        %v5106 = vlaneseq
        %v5107 = vshrl.u32 %v5106, 7
        %v5108 = vsub.s32 0, %v5107
        %v5109 = vrot.slane %v5104, %v5108
        %v5111 = vadd.f32 %v5072, %v5109
        %v5112 = vadd.f32 %v5073, %v5109
        %v5113 = vadd.f32 %v5074, %v5109
        %v5114 = vadd.f32 %v5075, %v5109
        %v5115 = vadd.f32 %v5076, %v5109
        %v5116 = vadd.f32 %v5077, %v5109
        %v5117 = vadd.f32 %v5078, %v5109
        %v5118 = vadd.f32 %v5079, %v5109
        %v5119 = vadd.f32 %v5080, %v5109
        %v5120 = vadd.f32 %v5081, %v5109
        %v5121 = vadd.f32 %v5082, %v5109
        %v5122 = vadd.f32 %v5083, %v5109
        %v5123 = vadd.f32 %v5084, %v5109
        %v5124 = vadd.f32 %v5085, %v5109
        %v5125 = vadd.f32 %v5086, %v5109
        %v5126 = vadd.f32 %v5087, %v5109
        %v5127 = vadd.f32 %v5088, %v5109
        %v5128 = vadd.f32 %v5089, %v5109
        %v5129 = vadd.f32 %v5090, %v5109
        %v5130 = vadd.f32 %v5091, %v5109
        %v5131 = vadd.f32 %v5092, %v5109
        %v5132 = vadd.f32 %v5093, %v5109
        %v5133 = vadd.f32 %v5094, %v5109
        %v5134 = vadd.f32 %v5095, %v5109
        %v5135 = vadd.f32 %v5096, %v5109
        %v5136 = vadd.f32 %v5097, %v5109
        %v5137 = vadd.f32 %v5098, %v5109
        %v5138 = vadd.f32 %v5099, %v5109
        %v5139 = vadd.f32 %v5100, %v5109
        %v5140 = vadd.f32 %v5101, %v5109
        %v5141 = vadd.f32 %v5102, %v5109
        %v5142 = vadd.f32 %v5103, %v5109
        %v5143 = vadd.f32 %v5111, %v4792
        %v5144 = vadd.f32 %v5112, %v4793
        %v5145 = vadd.f32 %v5113, %v4794
        %v5146 = vadd.f32 %v5114, %v4795
        %v5147 = vadd.f32 %v5115, %v4796
        %v5148 = vadd.f32 %v5116, %v4797
        %v5149 = vadd.f32 %v5117, %v4798
        %v5150 = vadd.f32 %v5118, %v4799
        %v5151 = vadd.f32 %v5119, %v4800
        %v5152 = vadd.f32 %v5120, %v4801
        %v5153 = vadd.f32 %v5121, %v4802
        %v5154 = vadd.f32 %v5122, %v4803
        %v5155 = vadd.f32 %v5123, %v4804
        %v5156 = vadd.f32 %v5124, %v4805
        %v5157 = vadd.f32 %v5125, %v4806
        %v5158 = vadd.f32 %v5126, %v4807
        %v5159 = vadd.f32 %v5127, %v4808
        %v5160 = vadd.f32 %v5128, %v4809
        %v5161 = vadd.f32 %v5129, %v4810
        %v5162 = vadd.f32 %v5130, %v4811
        %v5163 = vadd.f32 %v5131, %v4812
        %v5164 = vadd.f32 %v5132, %v4813
        %v5165 = vadd.f32 %v5133, %v4814
        %v5166 = vadd.f32 %v5134, %v4815
        %v5167 = vadd.f32 %v5135, %v4816
        %v5168 = vadd.f32 %v5136, %v4817
        %v5169 = vadd.f32 %v5137, %v4818
        %v5170 = vadd.f32 %v5138, %v4819
        %v5171 = vadd.f32 %v5139, %v4820
        %v5172 = vadd.f32 %v5140, %v4821
        %v5173 = vadd.f32 %v5141, %v4822
        %v5174 = vadd.f32 %v5142, %v4823
        %v5175 = vmax.f32 %v5143, 0.0
        %v5176 = vmax.f32 %v5144, 0.0
        %v5177 = vmax.f32 %v5145, 0.0
        %v5178 = vmax.f32 %v5146, 0.0
        %v5179 = vmax.f32 %v5147, 0.0
        %v5180 = vmax.f32 %v5148, 0.0
        %v5181 = vmax.f32 %v5149, 0.0
        %v5182 = vmax.f32 %v5150, 0.0
        %v5183 = vmax.f32 %v5151, 0.0
        %v5184 = vmax.f32 %v5152, 0.0
        %v5185 = vmax.f32 %v5153, 0.0
        %v5186 = vmax.f32 %v5154, 0.0
        %v5187 = vmax.f32 %v5155, 0.0
        %v5188 = vmax.f32 %v5156, 0.0
        %v5189 = vmax.f32 %v5157, 0.0
        %v5190 = vmax.f32 %v5158, 0.0
        %v5191 = vmax.f32 %v5159, 0.0
        %v5192 = vmax.f32 %v5160, 0.0
        %v5193 = vmax.f32 %v5161, 0.0
        %v5194 = vmax.f32 %v5162, 0.0
        %v5195 = vmax.f32 %v5163, 0.0
        %v5196 = vmax.f32 %v5164, 0.0
        %v5197 = vmax.f32 %v5165, 0.0
        %v5198 = vmax.f32 %v5166, 0.0
        %v5199 = vmax.f32 %v5167, 0.0
        %v5200 = vmax.f32 %v5168, 0.0
        %v5201 = vmax.f32 %v5169, 0.0
        %v5202 = vmax.f32 %v5170, 0.0
        %v5203 = vmax.f32 %v5171, 0.0
        %v5204 = vmax.f32 %v5172, 0.0
        %v5205 = vmax.f32 %v5173, 0.0
        %v5206 = vmax.f32 %v5174, 0.0
        %5207 = vst [vmem:[%s433] sm:$0xff] %v5175
        %5208 = vst [vmem:[%s433 + $0x8] sm:$0xff] %v5176
        %5209 = vst [vmem:[%s433 + $0x10] sm:$0xff] %v5177
        %5210 = vst [vmem:[%s433 + $0x18] sm:$0xff] %v5178
        %5211 = vst [vmem:[%s433 + $0x20] sm:$0xff] %v5179
        %5212 = vst [vmem:[%s433 + $0x28] sm:$0xff] %v5180
        %5213 = vst [vmem:[%s433 + $0x30] sm:$0xff] %v5181
        %5214 = vst [vmem:[%s433 + $0x38] sm:$0xff] %v5182
        %5215 = vst [vmem:[%s433 + $0x40] sm:$0xff] %v5183
        %5216 = vst [vmem:[%s433 + $0x48] sm:$0xff] %v5184
        %5217 = vst [vmem:[%s433 + $0x50] sm:$0xff] %v5185
        %5218 = vst [vmem:[%s433 + $0x58] sm:$0xff] %v5186
        %5219 = vst [vmem:[%s433 + $0x60] sm:$0xff] %v5187
        %5220 = vst [vmem:[%s433 + $0x68] sm:$0xff] %v5188
        %5221 = vst [vmem:[%s433 + $0x70] sm:$0xff] %v5189
        %5222 = vst [vmem:[%s433 + $0x78] sm:$0xff] %v5190
        %5223 = vst [vmem:[%s433 + $0x80] sm:$0xff] %v5191
        %5224 = vst [vmem:[%s433 + $0x88] sm:$0xff] %v5192
        %5225 = vst [vmem:[%s433 + $0x90] sm:$0xff] %v5193
        %5226 = vst [vmem:[%s433 + $0x98] sm:$0xff] %v5194
        %5227 = vst [vmem:[%s433 + $0xa0] sm:$0xff] %v5195
        %5228 = vst [vmem:[%s433 + $0xa8] sm:$0xff] %v5196
        %5229 = vst [vmem:[%s433 + $0xb0] sm:$0xff] %v5197
        %5230 = vst [vmem:[%s433 + $0xb8] sm:$0xff] %v5198
        %5231 = vst [vmem:[%s433 + $0xc0] sm:$0xff] %v5199
        %5232 = vst [vmem:[%s433 + $0xc8] sm:$0xff] %v5200
        %5233 = vst [vmem:[%s433 + $0xd0] sm:$0xff] %v5201
        %5234 = vst [vmem:[%s433 + $0xd8] sm:$0xff] %v5202
        %5235 = vst [vmem:[%s433 + $0xe0] sm:$0xff] %v5203
        %5236 = vst [vmem:[%s433 + $0xe8] sm:$0xff] %v5204
        %5237 = vst [vmem:[%s433 + $0xf0] sm:$0xff] %v5205
        %5238 = vst [vmem:[%s433 + $0xf8] sm:$0xff] %v5206
        %s5239 = sand.u32 %s313, 1
        %s5240 = scalar_lea.sflag [#allocation5], %s5239
        %s5241 = sand.u32 %s313, 1
        %s5242 = smul.addr %s5241, 256
        %s5243 = scalar_lea.vmem [#allocation4], %s5242
        // Predicated region
        $region73: #{bottleneck_forward.1} parent=71 // pred_check
          %p5244 = pneg %p323
        $region74: #{bottleneck_forward.1} parent=71 // pred_check_branch
          %5246 = sbr.rel (%p5244) target = $region76
        $region75: #{bottleneck_forward.1} parent=71 // pred_region
          %s5248 = ssub.s32 4096, 4096
          %5249 = vsyncadd %s5240, %s5248
          %s5250 = smul.addr %s27, 32
          %s5251 = smul.addr %s5250, 128
          %s5252 = scalar_lea.hbm %s13, %s5251
          %s5253 = sshll.u32 %s5243, 4
          %s5254 = int_to_ptr.vmem [resolvable:$true] %s5253
          %5259 = dma.vmem_to_hbm [thread:$0]  %s5254, 4096, %s5252, %s5240, 128, 128, 8
        $region76: #{bottleneck_forward.1} parent=71 // pred_fallthru
          _
      $region72: #{bottleneck_forward.1} parent=5 // pred_fallthru
        _
      %p5260 = scmp.le.s32.totalorder 2, %s22
      // Predicated region
      $region77: #{bottleneck_forward.1} parent=5 // pred_check
        %p5261 = pneg %p5260
      $region78: #{bottleneck_forward.1} parent=5 // pred_check_branch
        %5263 = sbr.rel (%p5261) target = $region80
      $region79: #{bottleneck_forward.1} parent=5 // pred_region
        %s5264 = ssub.s32 %s22, 2
        // Predicated region
        $region81: #{bottleneck_forward.1} parent=79 // pred_check
          %p5265 = pneg %p329
        $region82: #{bottleneck_forward.1} parent=79 // pred_check_branch
          %5267 = sbr.rel (%p5265) target = $region84
        $region83: #{bottleneck_forward.1} parent=79 // pred_region
          %s5268 = sand.u32 %s314, 1
          %s5269 = scalar_lea.sflag [#allocation5], %s5268
          %s5270 = sand.u32 %s314, 1
          %s5271 = smul.addr %s5270, 256
          %s5272 = scalar_lea.vmem [#allocation4], %s5271
          %5273 = dma.done %s5269, 4096
        $region84: #{bottleneck_forward.1} parent=79 // pred_fallthru
          _
      $region80: #{bottleneck_forward.1} parent=5 // pred_fallthru
        _
    $region6: #{bottleneck_forward.1} parent=1 // loop_footer
      %s26 = sadd.s32 1, %s22
    $region7: #{bottleneck_forward.1} parent=1 // loop_footer_branch
      %21 = sbr.rel target = $region3
    $region8: #{bottleneck_forward.1} parent=1 // loop_exit
      _
    %5274 = vsyncpa [#allocation5], 1
    %s5275 = scalar_lea.sflag [#allocation5], 1
    %5276 = vsyncpa %s5275, 1

</llo_original>
